<compile_context>
chip_gen: v5e
topology: v5e:2x2
jax: 0.10.0
libtpu: 0.0.40
codegen_flags: <defaults>
</compile_context>

<pallas_src>
import math

import jax
import jax.numpy as jnp
from jax.experimental import pallas as pl
from jax.experimental.pallas import tpu as pltpu

NUM_LAYERS = 3
EMB_DIM = 16        # d_model
HIDDEN_DIM = 16     # dim_feedforward
NUM_HEADS = 4
HEAD_DIM = EMB_DIM // NUM_HEADS
NUM_CLASSES = 3
N_CODES = 5         # n_diagnosis_codes
LN_EPS = 1e-5


def _layer_norm(x, gamma, beta):
    # torch.nn.LayerNorm over last dim, biased variance, eps=1e-5
    mu = jnp.mean(x, axis=-1, keepdims=True)
    var = jnp.mean((x - mu) ** 2, axis=-1, keepdims=True)
    return (x - mu) * jax.lax.rsqrt(var + LN_EPS) * gamma + beta


def transformer_kernel(
    x_ref, emb_ref, pe_ref,
    inw_ref, inb_ref, outw_ref, outb_ref,
    ln1g_ref, ln1b_ref, f1w_ref, f1b_ref, f2w_ref, f2b_ref,
    ln2g_ref, ln2b_ref,
    p1w_ref, p1b_ref, p2w_ref, p2b_ref,
    fcw_ref, fcb_ref,
    out_ref,
):
    D = EMB_DIM
    Bt, T, C = x_ref.shape
    N = Bt * T
    scale = 1.0 / math.sqrt(HEAD_DIM)

    # ---- embedding mix: (x.unsqueeze(3) * weight).sum(2)  ==  x @ emb ----------
    x2 = x_ref[...].reshape(N, C)                                   # (N, C)
    h = jnp.dot(x2, emb_ref[...],
                preferred_element_type=jnp.float32)                 # (N, D)
    # positional encoding (pre-tiled to (N, D); dropout -> identity in eval)
    h = h + pe_ref[...]

    # ---- encoder layers (post-norm, unrolled) ----------------------------------
    for l in range(NUM_LAYERS):
        w_in = inw_ref[l]                     # (D, 3D)  pre-transposed (in, out)
        b_in = inb_ref[l]                     # (1, 3D)

        # fused Q/K/V projection: one matmul, then static lane slices
        qkv = jnp.dot(h, w_in, preferred_element_type=jnp.float32) + b_in  # (N,3D)
        q3 = (qkv[:, 0 * D:1 * D] * scale).reshape(Bt, T, D)   # scale folded once
        k3 = qkv[:, 1 * D:2 * D].reshape(Bt, T, D)
        v3 = qkv[:, 2 * D:3 * D].reshape(Bt, T, D)

        attn = None
        for hh in range(NUM_HEADS):
            lo = hh * HEAD_DIM
            qh = q3[:, :, lo:lo + HEAD_DIM]                      # (Bt, T, hd)
            kh = k3[:, :, lo:lo + HEAD_DIM]
            vh = v3[:, :, lo:lo + HEAD_DIM]

            s = jnp.einsum('bqe,bke->bqk', qh, kh,
                           preferred_element_type=jnp.float32)   # (Bt, T, T)
            s = s - jnp.max(s, axis=-1, keepdims=True)
            p = jnp.exp(s)
            inv = pl.reciprocal(jnp.sum(p, axis=-1, keepdims=True), approx=True)
            oh = jnp.einsum('bqk,bke->bqe', p, vh,
                            preferred_element_type=jnp.float32)  # (Bt, T, hd)
            oh = oh * inv                                        # deferred norm

            # Fold the head output straight into the output projection:
            #   concat(heads) @ W_out == sum_h head_h @ W_out_rows[h]
            contrib = jnp.dot(oh.reshape(N, HEAD_DIM), outw_ref[l, hh],
                              preferred_element_type=jnp.float32)   # (N, D)
            attn = contrib if attn is None else attn + contrib
        attn = attn + outb_ref[l]                                   # (N, D)

        # residual + LayerNorm (dropouts -> identity in eval)
        h = _layer_norm(h + attn, ln1g_ref[l], ln1b_ref[l])

        # feed-forward
        ff = jnp.dot(h, f1w_ref[l], preferred_element_type=jnp.float32) + f1b_ref[l]
        ff = jnp.maximum(ff, 0.0)
        ff = jnp.dot(ff, f2w_ref[l], preferred_element_type=jnp.float32) + f2b_ref[l]
        h = _layer_norm(h + ff, ln2g_ref[l], ln2b_ref[l])

    # ---- projection head: Linear(D,16) -> ReLU -> Linear(16,1) -----------------
    e = jnp.dot(h, p1w_ref[...], preferred_element_type=jnp.float32) + p1b_ref[...]
    e = jnp.maximum(e, 0.0)                                         # (N, 16)
    # Linear(16,1) as broadcast-mul + lane reduction (avoids size-1 matmul output)
    energy = jnp.sum(e * p2w_ref[...], axis=-1, keepdims=True) + p2b_ref[...]  # (N,1)

    # softmax over the sequence axis, attention pooling
    energy = energy.reshape(Bt, T, 1)
    energy = energy - jnp.max(energy, axis=1, keepdims=True)
    w = jnp.exp(energy)
    w = w * pl.reciprocal(jnp.sum(w, axis=1, keepdims=True), approx=True)

    h3 = h.reshape(Bt, T, D)
    pooled = jnp.sum(h3 * w, axis=1)                                # (Bt, D)

    out = jnp.dot(pooled, fcw_ref[...],
                  preferred_element_type=jnp.float32) + fcb_ref[...]   # (Bt, 3)
    out_ref[0] = out


def transformer_forward(x, params, block_b=None):
    B, T, C = x.shape
    if block_b is None:
        block_b = B
        for cand in (64, 32, 16, 8, 4, 2, 1):
            if cand <= B and B % cand == 0:
                block_b = cand
                break
    assert B % block_b == 0, "batch must be divisible by the batch tile"
    n_blocks = B // block_b

    # positional-encoding table pre-tiled to the (block_b*T, D) token layout
    pe_tile = jnp.tile(params['pe'][:T], (block_b, 1))

    weights = [
        params['emb'], pe_tile,
        params['inw'], params['inb'], params['outw'], params['outb'],
        params['ln1g'], params['ln1b'], params['f1w'], params['f1b'],
        params['f2w'], params['f2b'], params['ln2g'], params['ln2b'],
        params['p1w'], params['p1b'], params['p2w'], params['p2b'],
        params['fcw'], params['fcb'],
    ]

    def const_spec(a):
        # full-array block, constant index map -> stays VMEM-resident across grid
        return pl.BlockSpec(a.shape, lambda i, _nd=a.ndim: (0,) * _nd)

    in_specs = [pl.BlockSpec((block_b, T, C), lambda i: (i, 0, 0))]
    in_specs += [const_spec(a) for a in weights]
    out_spec = pl.BlockSpec((1, block_b, NUM_CLASSES), lambda i: (i, 0, 0))

    out = pl.pallas_call(
        transformer_kernel,
        grid=(n_blocks,),
        in_specs=in_specs,
        out_specs=out_spec,
        out_shape=jax.ShapeDtypeStruct((n_blocks, block_b, NUM_CLASSES),
                                       jnp.float32),
        compiler_params=pltpu.CompilerParams(
            dimension_semantics=("parallel",),
            vmem_limit_bytes=32 * 1024 * 1024),
    )(x, *weights)
    return out.reshape(B, NUM_CLASSES)


def sinusoidal_pe(max_len, d_model):
    position = jnp.arange(max_len, dtype=jnp.float32)[:, None]
    div_term = jnp.exp(jnp.arange(0, d_model, 2, dtype=jnp.float32)
                       * (-math.log(10000.0) / d_model))
    pe = jnp.zeros((max_len, d_model), dtype=jnp.float32)
    pe = pe.at[:, 0::2].set(jnp.sin(position * div_term))
    pe = pe.at[:, 1::2].set(jnp.cos(position * div_term))
    return pe


def init_params(key, max_len=512):
    ks = list(jax.random.split(key, 16))

    def rnd(k, shape, scale=0.2):
        return jax.random.normal(k, shape, dtype=jnp.float32) * scale

    # nn.Embedding(5, 16, padding_idx=-1, max_norm=1.0)
    emb = jax.random.normal(ks[0], (N_CODES, EMB_DIM), dtype=jnp.float32)
    emb = emb.at[N_CODES - 1].set(0.0)  # padding_idx=-1 -> last row zeroed at init
    norms = jnp.linalg.norm(emb, axis=-1, keepdims=True)
    emb = jnp.where(norms > 1.0, emb / (norms + 1e-7), emb)  # max_norm renorm

    # All linear weights stored pre-transposed as (in_dim, out_dim) so the kernel
    # contracts 'nd,de->ne' with no in-kernel weight relayout.  The attention
    # output-projection weight is additionally pre-split per head:
    # outw[l, h] == W_out_l.T[h*hd:(h+1)*hd, :]   (shape (HEAD_DIM, D)).
    params = dict(
        emb=emb,
        pe=sinusoidal_pe(max_len, EMB_DIM),
        inw=rnd(ks[1], (NUM_LAYERS, EMB_DIM, 3 * EMB_DIM)),
        inb=rnd(ks[2], (NUM_LAYERS, 1, 3 * EMB_DIM), 0.05),
        outw=rnd(ks[3], (NUM_LAYERS, NUM_HEADS, HEAD_DIM, EMB_DIM)),
        outb=rnd(ks[4], (NUM_LAYERS, 1, EMB_DIM), 0.05),
        ln1g=jnp.ones((NUM_LAYERS, 1, EMB_DIM), jnp.float32),
        ln1b=jnp.zeros((NUM_LAYERS, 1, EMB_DIM), jnp.float32),
        f1w=rnd(ks[5], (NUM_LAYERS, EMB_DIM, HIDDEN_DIM)),
        f1b=rnd(ks[6], (NUM_LAYERS, 1, HIDDEN_DIM), 0.05),
        f2w=rnd(ks[7], (NUM_LAYERS, HIDDEN_DIM, EMB_DIM)),
        f2b=rnd(ks[8], (NUM_LAYERS, 1, EMB_DIM), 0.05),
        ln2g=jnp.ones((NUM_LAYERS, 1, EMB_DIM), jnp.float32),
        ln2b=jnp.zeros((NUM_LAYERS, 1, EMB_DIM), jnp.float32),
        # projection head: Linear(16,16) -> ReLU -> Linear(16,1)
        p1w=rnd(ks[9], (EMB_DIM, 16)),
        p1b=rnd(ks[10], (1, 16), 0.05),
        p2w=rnd(ks[11], (1, 16)),
        p2b=rnd(ks[12], (1, 1), 0.05),
        # final classifier Linear(16, 3)
        fcw=rnd(ks[13], (EMB_DIM, NUM_CLASSES)),
        fcb=rnd(ks[14], (1, NUM_CLASSES), 0.05),
    )
    return params


if __name__ == "__main__":
    key = jax.random.PRNGKey(0)
    kx, kp = jax.random.split(key)

    B, T = 4, 8
    # x: soft weights over the 5 diagnosis codes per (batch, seq) position
    x = jax.random.uniform(kx, (B, T, N_CODES), dtype=jnp.float32)

    params = init_params(kp, max_len=T)
    out = transformer_forward(x, params, block_b=2)   # grid of 2 batch tiles
    out = jax.block_until_ready(out)
    assert out.shape == (B, NUM_CLASSES) and out.dtype == jnp.float32
    print("KERNEL_OK")
</pallas_src>

<mosaic_0001>
module attributes {stable_mosaic.version = 11 : i64} {
  func.func @transformer_kernel(%arg0: i32, %arg1: memref<2x8x5xf32, #tpu.memory_space<vmem>>, %arg2: memref<5x16xf32, #tpu.memory_space<vmem>>, %arg3: memref<16x16xf32, #tpu.memory_space<vmem>>, %arg4: memref<3x16x48xf32, #tpu.memory_space<vmem>>, %arg5: memref<3x1x48xf32, #tpu.memory_space<vmem>>, %arg6: memref<3x4x4x16xf32, #tpu.memory_space<vmem>>, %arg7: memref<3x1x16xf32, #tpu.memory_space<vmem>>, %arg8: memref<3x1x16xf32, #tpu.memory_space<vmem>>, %arg9: memref<3x1x16xf32, #tpu.memory_space<vmem>>, %arg10: memref<3x16x16xf32, #tpu.memory_space<vmem>>, %arg11: memref<3x1x16xf32, #tpu.memory_space<vmem>>, %arg12: memref<3x16x16xf32, #tpu.memory_space<vmem>>, %arg13: memref<3x1x16xf32, #tpu.memory_space<vmem>>, %arg14: memref<3x1x16xf32, #tpu.memory_space<vmem>>, %arg15: memref<3x1x16xf32, #tpu.memory_space<vmem>>, %arg16: memref<16x16xf32, #tpu.memory_space<vmem>>, %arg17: memref<1x16xf32, #tpu.memory_space<vmem>>, %arg18: memref<1x16xf32, #tpu.memory_space<vmem>>, %arg19: memref<1x1xf32, #tpu.memory_space<vmem>>, %arg20: memref<16x3xf32, #tpu.memory_space<vmem>>, %arg21: memref<1x3xf32, #tpu.memory_space<vmem>>, %arg22: memref<1x2x3xf32, #tpu.memory_space<vmem>>) attributes {dimension_semantics = [#tpu.dimension_semantics<parallel>], iteration_bounds = array<i64: 2>, scalar_prefetch = 0 : i64, scratch_operands = 0 : i64, tpu.core_type = #tpu.core_type<tc>, window_params = [{transform_indices = @transform_0, window_bounds = array<i64: 2, 8, 5>}, {pipeline_mode = #tpu.pipeline_mode<synchronous>, transform_indices = @transform_1, window_bounds = array<i64: 5, 16>}, {pipeline_mode = #tpu.pipeline_mode<synchronous>, transform_indices = @transform_2, window_bounds = array<i64: 16, 16>}, {pipeline_mode = #tpu.pipeline_mode<synchronous>, transform_indices = @transform_3, window_bounds = array<i64: 3, 16, 48>}, {pipeline_mode = #tpu.pipeline_mode<synchronous>, transform_indices = @transform_4, window_bounds = array<i64: 3, 1, 48>}, {pipeline_mode = #tpu.pipeline_mode<synchronous>, transform_indices = @transform_5, window_bounds = array<i64: 3, 4, 4, 16>}, {pipeline_mode = #tpu.pipeline_mode<synchronous>, transform_indices = @transform_6, window_bounds = array<i64: 3, 1, 16>}, {pipeline_mode = #tpu.pipeline_mode<synchronous>, transform_indices = @transform_7, window_bounds = array<i64: 3, 1, 16>}, {pipeline_mode = #tpu.pipeline_mode<synchronous>, transform_indices = @transform_8, window_bounds = array<i64: 3, 1, 16>}, {pipeline_mode = #tpu.pipeline_mode<synchronous>, transform_indices = @transform_9, window_bounds = array<i64: 3, 16, 16>}, {pipeline_mode = #tpu.pipeline_mode<synchronous>, transform_indices = @transform_10, window_bounds = array<i64: 3, 1, 16>}, {pipeline_mode = #tpu.pipeline_mode<synchronous>, transform_indices = @transform_11, window_bounds = array<i64: 3, 16, 16>}, {pipeline_mode = #tpu.pipeline_mode<synchronous>, transform_indices = @transform_12, window_bounds = array<i64: 3, 1, 16>}, {pipeline_mode = #tpu.pipeline_mode<synchronous>, transform_indices = @transform_13, window_bounds = array<i64: 3, 1, 16>}, {pipeline_mode = #tpu.pipeline_mode<synchronous>, transform_indices = @transform_14, window_bounds = array<i64: 3, 1, 16>}, {pipeline_mode = #tpu.pipeline_mode<synchronous>, transform_indices = @transform_15, window_bounds = array<i64: 16, 16>}, {pipeline_mode = #tpu.pipeline_mode<synchronous>, transform_indices = @transform_16, window_bounds = array<i64: 1, 16>}, {pipeline_mode = #tpu.pipeline_mode<synchronous>, transform_indices = @transform_17, window_bounds = array<i64: 1, 16>}, {pipeline_mode = #tpu.pipeline_mode<synchronous>, transform_indices = @transform_18, window_bounds = array<i64: 1, 1>}, {pipeline_mode = #tpu.pipeline_mode<synchronous>, transform_indices = @transform_19, window_bounds = array<i64: 16, 3>}, {pipeline_mode = #tpu.pipeline_mode<synchronous>, transform_indices = @transform_20, window_bounds = array<i64: 1, 3>}, {transform_indices = @transform_21, window_bounds = array<i64: 1, 2, 3>}]} {
    %c0 = arith.constant 0 : index
    %c0_0 = arith.constant 0 : index
    %c0_1 = arith.constant 0 : index
    %0 = vector.load %arg1[%c0, %c0_0, %c0_1] : memref<2x8x5xf32, #tpu.memory_space<vmem>>, vector<2x8x5xf32>
    %1 = vector.shape_cast %0 : vector<2x8x5xf32> to vector<16x5xf32>
    %c0_2 = arith.constant 0 : index
    %c0_3 = arith.constant 0 : index
    %2 = vector.load %arg2[%c0_2, %c0_3] : memref<5x16xf32, #tpu.memory_space<vmem>>, vector<5x16xf32>
    %cst = arith.constant dense<0.000000e+00> : vector<16x16xf32>
    %3 = tpu.matmul %1, %2, %cst {dimension_numbers = #tpu.dot_dimension_numbers<[1], [0], [0], [1], [0, 0, 1, 1], [], []>} : vector<16x5xf32>, vector<5x16xf32>, vector<16x16xf32> -> vector<16x16xf32>
    %c0_4 = arith.constant 0 : index
    %c0_5 = arith.constant 0 : index
    %4 = vector.load %arg3[%c0_4, %c0_5] : memref<16x16xf32, #tpu.memory_space<vmem>>, vector<16x16xf32>
    %5 = arith.addf %3, %4 : vector<16x16xf32>
    %c0_6 = arith.constant 0 : index
    %c0_7 = arith.constant 0 : index
    %c0_8 = arith.constant 0 : index
    %6 = vector.load %arg4[%c0_6, %c0_7, %c0_8] : memref<3x16x48xf32, #tpu.memory_space<vmem>>, vector<1x16x48xf32>
    %7 = vector.shape_cast %6 : vector<1x16x48xf32> to vector<16x48xf32>
    %c0_9 = arith.constant 0 : index
    %c0_10 = arith.constant 0 : index
    %c0_11 = arith.constant 0 : index
    %8 = vector.load %arg5[%c0_9, %c0_10, %c0_11] : memref<3x1x48xf32, #tpu.memory_space<vmem>>, vector<1x1x48xf32>
    %9 = vector.shape_cast %8 : vector<1x1x48xf32> to vector<1x48xf32>
    %cst_12 = arith.constant dense<0.000000e+00> : vector<16x48xf32>
    %10 = tpu.matmul %5, %7, %cst_12 {dimension_numbers = #tpu.dot_dimension_numbers<[1], [0], [0], [1], [0, 0, 1, 1], [], []>} : vector<16x16xf32>, vector<16x48xf32>, vector<16x48xf32> -> vector<16x48xf32>
    %11 = vector.broadcast %9 : vector<1x48xf32> to vector<16x48xf32>
    %12 = arith.addf %10, %11 : vector<16x48xf32>
    %13 = vector.extract_strided_slice %12 {offsets = [0, 0], sizes = [16, 16], strides = [1, 1]} : vector<16x48xf32> to vector<16x16xf32>
    %cst_13 = arith.constant 5.000000e-01 : f32
    %14 = vector.broadcast %cst_13 : f32 to vector<16x16xf32>
    %15 = arith.mulf %13, %14 : vector<16x16xf32>
    %16 = vector.shape_cast %15 : vector<16x16xf32> to vector<2x8x16xf32>
    %17 = vector.extract_strided_slice %12 {offsets = [0, 16], sizes = [16, 16], strides = [1, 1]} : vector<16x48xf32> to vector<16x16xf32>
    %18 = vector.shape_cast %17 : vector<16x16xf32> to vector<2x8x16xf32>
    %19 = vector.extract_strided_slice %12 {offsets = [0, 32], sizes = [16, 16], strides = [1, 1]} : vector<16x48xf32> to vector<16x16xf32>
    %20 = vector.shape_cast %19 : vector<16x16xf32> to vector<2x8x16xf32>
    %21 = vector.extract_strided_slice %16 {offsets = [0, 0, 0], sizes = [2, 8, 4], strides = [1, 1, 1]} : vector<2x8x16xf32> to vector<2x8x4xf32>
    %22 = vector.extract_strided_slice %18 {offsets = [0, 0, 0], sizes = [2, 8, 4], strides = [1, 1, 1]} : vector<2x8x16xf32> to vector<2x8x4xf32>
    %23 = vector.extract_strided_slice %20 {offsets = [0, 0, 0], sizes = [2, 8, 4], strides = [1, 1, 1]} : vector<2x8x16xf32> to vector<2x8x4xf32>
    "tpu.trace_start"() <{level = 10 : i32, message = "bqe,bke->bqk"}> : () -> ()
    %cst_14 = arith.constant dense<0.000000e+00> : vector<2x8x8xf32>
    %24 = tpu.matmul %21, %22, %cst_14 {dimension_numbers = #tpu.dot_dimension_numbers<[2], [2], [1], [1], [0, 0, 0, 1, 1, 1], [0], [0]>} : vector<2x8x4xf32>, vector<2x8x4xf32>, vector<2x8x8xf32> -> vector<2x8x8xf32>
    "tpu.trace_stop"() : () -> ()
    %cst_15 = arith.constant dense<0xFF800000> : vector<2x8xf32>
    %25 = vector.multi_reduction <maximumf>, %24, %cst_15 [2] : vector<2x8x8xf32> to vector<2x8xf32>
    %26 = vector.shape_cast %25 : vector<2x8xf32> to vector<2x8x1xf32>
    %27 = vector.broadcast %26 : vector<2x8x1xf32> to vector<2x8x8xf32>
    %28 = arith.subf %24, %27 : vector<2x8x8xf32>
    %29 = math.exp %28 : vector<2x8x8xf32>
    %cst_16 = arith.constant dense<0.000000e+00> : vector<2x8xf32>
    %30 = vector.multi_reduction <add>, %29, %cst_16 [2] : vector<2x8x8xf32> to vector<2x8xf32>
    %31 = vector.shape_cast %30 : vector<2x8xf32> to vector<2x8x1xf32>
    %32 = tpu.reciprocal %31 {approx = true} : vector<2x8x1xf32> -> vector<2x8x1xf32>
    "tpu.trace_start"() <{level = 10 : i32, message = "bqk,bke->bqe"}> : () -> ()
    %cst_17 = arith.constant dense<0.000000e+00> : vector<2x8x4xf32>
    %33 = tpu.matmul %29, %23, %cst_17 {dimension_numbers = #tpu.dot_dimension_numbers<[2], [1], [1], [2], [0, 0, 0, 1, 1, 2], [0], [0]>} : vector<2x8x8xf32>, vector<2x8x4xf32>, vector<2x8x4xf32> -> vector<2x8x4xf32>
    "tpu.trace_stop"() : () -> ()
    %34 = vector.broadcast %32 : vector<2x8x1xf32> to vector<2x8x4xf32>
    %35 = arith.mulf %33, %34 : vector<2x8x4xf32>
    %36 = vector.shape_cast %35 : vector<2x8x4xf32> to vector<16x4xf32>
    %c0_18 = arith.constant 0 : index
    %c0_19 = arith.constant 0 : index
    %c0_20 = arith.constant 0 : index
    %c0_21 = arith.constant 0 : index
    %37 = vector.load %arg6[%c0_18, %c0_19, %c0_20, %c0_21] : memref<3x4x4x16xf32, #tpu.memory_space<vmem>>, vector<1x1x4x16xf32>
    %38 = vector.shape_cast %37 : vector<1x1x4x16xf32> to vector<4x16xf32>
    %cst_22 = arith.constant dense<0.000000e+00> : vector<16x16xf32>
    %39 = tpu.matmul %36, %38, %cst_22 {dimension_numbers = #tpu.dot_dimension_numbers<[1], [0], [0], [1], [0, 0, 1, 1], [], []>} : vector<16x4xf32>, vector<4x16xf32>, vector<16x16xf32> -> vector<16x16xf32>
    %40 = vector.extract_strided_slice %16 {offsets = [0, 0, 4], sizes = [2, 8, 4], strides = [1, 1, 1]} : vector<2x8x16xf32> to vector<2x8x4xf32>
    %41 = vector.extract_strided_slice %18 {offsets = [0, 0, 4], sizes = [2, 8, 4], strides = [1, 1, 1]} : vector<2x8x16xf32> to vector<2x8x4xf32>
    %42 = vector.extract_strided_slice %20 {offsets = [0, 0, 4], sizes = [2, 8, 4], strides = [1, 1, 1]} : vector<2x8x16xf32> to vector<2x8x4xf32>
    "tpu.trace_start"() <{level = 10 : i32, message = "bqe,bke->bqk"}> : () -> ()
    %cst_23 = arith.constant dense<0.000000e+00> : vector<2x8x8xf32>
    %43 = tpu.matmul %40, %41, %cst_23 {dimension_numbers = #tpu.dot_dimension_numbers<[2], [2], [1], [1], [0, 0, 0, 1, 1, 1], [0], [0]>} : vector<2x8x4xf32>, vector<2x8x4xf32>, vector<2x8x8xf32> -> vector<2x8x8xf32>
    "tpu.trace_stop"() : () -> ()
    %cst_24 = arith.constant dense<0xFF800000> : vector<2x8xf32>
    %44 = vector.multi_reduction <maximumf>, %43, %cst_24 [2] : vector<2x8x8xf32> to vector<2x8xf32>
    %45 = vector.shape_cast %44 : vector<2x8xf32> to vector<2x8x1xf32>
    %46 = vector.broadcast %45 : vector<2x8x1xf32> to vector<2x8x8xf32>
    %47 = arith.subf %43, %46 : vector<2x8x8xf32>
    %48 = math.exp %47 : vector<2x8x8xf32>
    %cst_25 = arith.constant dense<0.000000e+00> : vector<2x8xf32>
    %49 = vector.multi_reduction <add>, %48, %cst_25 [2] : vector<2x8x8xf32> to vector<2x8xf32>
    %50 = vector.shape_cast %49 : vector<2x8xf32> to vector<2x8x1xf32>
    %51 = tpu.reciprocal %50 {approx = true} : vector<2x8x1xf32> -> vector<2x8x1xf32>
    "tpu.trace_start"() <{level = 10 : i32, message = "bqk,bke->bqe"}> : () -> ()
    %cst_26 = arith.constant dense<0.000000e+00> : vector<2x8x4xf32>
    %52 = tpu.matmul %48, %42, %cst_26 {dimension_numbers = #tpu.dot_dimension_numbers<[2], [1], [1], [2], [0, 0, 0, 1, 1, 2], [0], [0]>} : vector<2x8x8xf32>, vector<2x8x4xf32>, vector<2x8x4xf32> -> vector<2x8x4xf32>
    "tpu.trace_stop"() : () -> ()
    %53 = vector.broadcast %51 : vector<2x8x1xf32> to vector<2x8x4xf32>
    %54 = arith.mulf %52, %53 : vector<2x8x4xf32>
    %55 = vector.shape_cast %54 : vector<2x8x4xf32> to vector<16x4xf32>
    %c0_27 = arith.constant 0 : index
    %c1 = arith.constant 1 : index
    %c0_28 = arith.constant 0 : index
    %c0_29 = arith.constant 0 : index
    %56 = vector.load %arg6[%c0_27, %c1, %c0_28, %c0_29] : memref<3x4x4x16xf32, #tpu.memory_space<vmem>>, vector<1x1x4x16xf32>
    %57 = vector.shape_cast %56 : vector<1x1x4x16xf32> to vector<4x16xf32>
    %cst_30 = arith.constant dense<0.000000e+00> : vector<16x16xf32>
    %58 = tpu.matmul %55, %57, %cst_30 {dimension_numbers = #tpu.dot_dimension_numbers<[1], [0], [0], [1], [0, 0, 1, 1], [], []>} : vector<16x4xf32>, vector<4x16xf32>, vector<16x16xf32> -> vector<16x16xf32>
    %59 = arith.addf %39, %58 : vector<16x16xf32>
    %60 = vector.extract_strided_slice %16 {offsets = [0, 0, 8], sizes = [2, 8, 4], strides = [1, 1, 1]} : vector<2x8x16xf32> to vector<2x8x4xf32>
    %61 = vector.extract_strided_slice %18 {offsets = [0, 0, 8], sizes = [2, 8, 4], strides = [1, 1, 1]} : vector<2x8x16xf32> to vector<2x8x4xf32>
    %62 = vector.extract_strided_slice %20 {offsets = [0, 0, 8], sizes = [2, 8, 4], strides = [1, 1, 1]} : vector<2x8x16xf32> to vector<2x8x4xf32>
    "tpu.trace_start"() <{level = 10 : i32, message = "bqe,bke->bqk"}> : () -> ()
    %cst_31 = arith.constant dense<0.000000e+00> : vector<2x8x8xf32>
    %63 = tpu.matmul %60, %61, %cst_31 {dimension_numbers = #tpu.dot_dimension_numbers<[2], [2], [1], [1], [0, 0, 0, 1, 1, 1], [0], [0]>} : vector<2x8x4xf32>, vector<2x8x4xf32>, vector<2x8x8xf32> -> vector<2x8x8xf32>
    "tpu.trace_stop"() : () -> ()
    %cst_32 = arith.constant dense<0xFF800000> : vector<2x8xf32>
    %64 = vector.multi_reduction <maximumf>, %63, %cst_32 [2] : vector<2x8x8xf32> to vector<2x8xf32>
    %65 = vector.shape_cast %64 : vector<2x8xf32> to vector<2x8x1xf32>
    %66 = vector.broadcast %65 : vector<2x8x1xf32> to vector<2x8x8xf32>
    %67 = arith.subf %63, %66 : vector<2x8x8xf32>
    %68 = math.exp %67 : vector<2x8x8xf32>
    %cst_33 = arith.constant dense<0.000000e+00> : vector<2x8xf32>
    %69 = vector.multi_reduction <add>, %68, %cst_33 [2] : vector<2x8x8xf32> to vector<2x8xf32>
    %70 = vector.shape_cast %69 : vector<2x8xf32> to vector<2x8x1xf32>
    %71 = tpu.reciprocal %70 {approx = true} : vector<2x8x1xf32> -> vector<2x8x1xf32>
    "tpu.trace_start"() <{level = 10 : i32, message = "bqk,bke->bqe"}> : () -> ()
    %cst_34 = arith.constant dense<0.000000e+00> : vector<2x8x4xf32>
    %72 = tpu.matmul %68, %62, %cst_34 {dimension_numbers = #tpu.dot_dimension_numbers<[2], [1], [1], [2], [0, 0, 0, 1, 1, 2], [0], [0]>} : vector<2x8x8xf32>, vector<2x8x4xf32>, vector<2x8x4xf32> -> vector<2x8x4xf32>
    "tpu.trace_stop"() : () -> ()
    %73 = vector.broadcast %71 : vector<2x8x1xf32> to vector<2x8x4xf32>
    %74 = arith.mulf %72, %73 : vector<2x8x4xf32>
    %75 = vector.shape_cast %74 : vector<2x8x4xf32> to vector<16x4xf32>
    %c0_35 = arith.constant 0 : index
    %c2 = arith.constant 2 : index
    %c0_36 = arith.constant 0 : index
    %c0_37 = arith.constant 0 : index
    %76 = vector.load %arg6[%c0_35, %c2, %c0_36, %c0_37] : memref<3x4x4x16xf32, #tpu.memory_space<vmem>>, vector<1x1x4x16xf32>
    %77 = vector.shape_cast %76 : vector<1x1x4x16xf32> to vector<4x16xf32>
    %cst_38 = arith.constant dense<0.000000e+00> : vector<16x16xf32>
    %78 = tpu.matmul %75, %77, %cst_38 {dimension_numbers = #tpu.dot_dimension_numbers<[1], [0], [0], [1], [0, 0, 1, 1], [], []>} : vector<16x4xf32>, vector<4x16xf32>, vector<16x16xf32> -> vector<16x16xf32>
    %79 = arith.addf %59, %78 : vector<16x16xf32>
    %80 = vector.extract_strided_slice %16 {offsets = [0, 0, 12], sizes = [2, 8, 4], strides = [1, 1, 1]} : vector<2x8x16xf32> to vector<2x8x4xf32>
    %81 = vector.extract_strided_slice %18 {offsets = [0, 0, 12], sizes = [2, 8, 4], strides = [1, 1, 1]} : vector<2x8x16xf32> to vector<2x8x4xf32>
    %82 = vector.extract_strided_slice %20 {offsets = [0, 0, 12], sizes = [2, 8, 4], strides = [1, 1, 1]} : vector<2x8x16xf32> to vector<2x8x4xf32>
    "tpu.trace_start"() <{level = 10 : i32, message = "bqe,bke->bqk"}> : () -> ()
    %cst_39 = arith.constant dense<0.000000e+00> : vector<2x8x8xf32>
    %83 = tpu.matmul %80, %81, %cst_39 {dimension_numbers = #tpu.dot_dimension_numbers<[2], [2], [1], [1], [0, 0, 0, 1, 1, 1], [0], [0]>} : vector<2x8x4xf32>, vector<2x8x4xf32>, vector<2x8x8xf32> -> vector<2x8x8xf32>
    "tpu.trace_stop"() : () -> ()
    %cst_40 = arith.constant dense<0xFF800000> : vector<2x8xf32>
    %84 = vector.multi_reduction <maximumf>, %83, %cst_40 [2] : vector<2x8x8xf32> to vector<2x8xf32>
    %85 = vector.shape_cast %84 : vector<2x8xf32> to vector<2x8x1xf32>
    %86 = vector.broadcast %85 : vector<2x8x1xf32> to vector<2x8x8xf32>
    %87 = arith.subf %83, %86 : vector<2x8x8xf32>
    %88 = math.exp %87 : vector<2x8x8xf32>
    %cst_41 = arith.constant dense<0.000000e+00> : vector<2x8xf32>
    %89 = vector.multi_reduction <add>, %88, %cst_41 [2] : vector<2x8x8xf32> to vector<2x8xf32>
    %90 = vector.shape_cast %89 : vector<2x8xf32> to vector<2x8x1xf32>
    %91 = tpu.reciprocal %90 {approx = true} : vector<2x8x1xf32> -> vector<2x8x1xf32>
    "tpu.trace_start"() <{level = 10 : i32, message = "bqk,bke->bqe"}> : () -> ()
    %cst_42 = arith.constant dense<0.000000e+00> : vector<2x8x4xf32>
    %92 = tpu.matmul %88, %82, %cst_42 {dimension_numbers = #tpu.dot_dimension_numbers<[2], [1], [1], [2], [0, 0, 0, 1, 1, 2], [0], [0]>} : vector<2x8x8xf32>, vector<2x8x4xf32>, vector<2x8x4xf32> -> vector<2x8x4xf32>
    "tpu.trace_stop"() : () -> ()
    %93 = vector.broadcast %91 : vector<2x8x1xf32> to vector<2x8x4xf32>
    %94 = arith.mulf %92, %93 : vector<2x8x4xf32>
    %95 = vector.shape_cast %94 : vector<2x8x4xf32> to vector<16x4xf32>
    %c0_43 = arith.constant 0 : index
    %c3 = arith.constant 3 : index
    %c0_44 = arith.constant 0 : index
    %c0_45 = arith.constant 0 : index
    %96 = vector.load %arg6[%c0_43, %c3, %c0_44, %c0_45] : memref<3x4x4x16xf32, #tpu.memory_space<vmem>>, vector<1x1x4x16xf32>
    %97 = vector.shape_cast %96 : vector<1x1x4x16xf32> to vector<4x16xf32>
    %cst_46 = arith.constant dense<0.000000e+00> : vector<16x16xf32>
    %98 = tpu.matmul %95, %97, %cst_46 {dimension_numbers = #tpu.dot_dimension_numbers<[1], [0], [0], [1], [0, 0, 1, 1], [], []>} : vector<16x4xf32>, vector<4x16xf32>, vector<16x16xf32> -> vector<16x16xf32>
    %99 = arith.addf %79, %98 : vector<16x16xf32>
    %c0_47 = arith.constant 0 : index
    %c0_48 = arith.constant 0 : index
    %c0_49 = arith.constant 0 : index
    %100 = vector.load %arg7[%c0_47, %c0_48, %c0_49] : memref<3x1x16xf32, #tpu.memory_space<vmem>>, vector<1x1x16xf32>
    %101 = vector.shape_cast %100 : vector<1x1x16xf32> to vector<1x16xf32>
    %102 = vector.broadcast %101 : vector<1x16xf32> to vector<16x16xf32>
    %103 = arith.addf %99, %102 : vector<16x16xf32>
    %104 = arith.addf %5, %103 : vector<16x16xf32>
    %c0_50 = arith.constant 0 : index
    %c0_51 = arith.constant 0 : index
    %c0_52 = arith.constant 0 : index
    %105 = vector.load %arg8[%c0_50, %c0_51, %c0_52] : memref<3x1x16xf32, #tpu.memory_space<vmem>>, vector<1x1x16xf32>
    %106 = vector.shape_cast %105 : vector<1x1x16xf32> to vector<1x16xf32>
    %c0_53 = arith.constant 0 : index
    %c0_54 = arith.constant 0 : index
    %c0_55 = arith.constant 0 : index
    %107 = vector.load %arg9[%c0_53, %c0_54, %c0_55] : memref<3x1x16xf32, #tpu.memory_space<vmem>>, vector<1x1x16xf32>
    %108 = vector.shape_cast %107 : vector<1x1x16xf32> to vector<1x16xf32>
    %cst_56 = arith.constant dense<0.000000e+00> : vector<16xf32>
    %109 = vector.multi_reduction <add>, %104, %cst_56 [1] : vector<16x16xf32> to vector<16xf32>
    %110 = vector.shape_cast %109 : vector<16xf32> to vector<16x1xf32>
    %cst_57 = arith.constant 1.600000e+01 : f32
    %111 = vector.broadcast %cst_57 : f32 to vector<16x1xf32>
    %112 = arith.divf %110, %111 : vector<16x1xf32>
    %113 = vector.broadcast %112 : vector<16x1xf32> to vector<16x16xf32>
    %114 = arith.subf %104, %113 : vector<16x16xf32>
    %115 = arith.mulf %114, %114 : vector<16x16xf32>
    %cst_58 = arith.constant dense<0.000000e+00> : vector<16xf32>
    %116 = vector.multi_reduction <add>, %115, %cst_58 [1] : vector<16x16xf32> to vector<16xf32>
    %117 = vector.shape_cast %116 : vector<16xf32> to vector<16x1xf32>
    %cst_59 = arith.constant 1.600000e+01 : f32
    %118 = vector.broadcast %cst_59 : f32 to vector<16x1xf32>
    %119 = arith.divf %117, %118 : vector<16x1xf32>
    %120 = vector.broadcast %112 : vector<16x1xf32> to vector<16x16xf32>
    %121 = arith.subf %104, %120 : vector<16x16xf32>
    %cst_60 = arith.constant 9.99999974E-6 : f32
    %122 = vector.broadcast %cst_60 : f32 to vector<16x1xf32>
    %123 = arith.addf %119, %122 : vector<16x1xf32>
    %124 = math.rsqrt %123 : vector<16x1xf32>
    %125 = vector.broadcast %124 : vector<16x1xf32> to vector<16x16xf32>
    %126 = arith.mulf %121, %125 : vector<16x16xf32>
    %127 = vector.broadcast %106 : vector<1x16xf32> to vector<16x16xf32>
    %128 = arith.mulf %126, %127 : vector<16x16xf32>
    %129 = vector.broadcast %108 : vector<1x16xf32> to vector<16x16xf32>
    %130 = arith.addf %128, %129 : vector<16x16xf32>
    %c0_61 = arith.constant 0 : index
    %c0_62 = arith.constant 0 : index
    %c0_63 = arith.constant 0 : index
    %131 = vector.load %arg10[%c0_61, %c0_62, %c0_63] : memref<3x16x16xf32, #tpu.memory_space<vmem>>, vector<1x16x16xf32>
    %132 = vector.shape_cast %131 : vector<1x16x16xf32> to vector<16x16xf32>
    %cst_64 = arith.constant dense<0.000000e+00> : vector<16x16xf32>
    %133 = tpu.matmul %130, %132, %cst_64 {dimension_numbers = #tpu.dot_dimension_numbers<[1], [0], [0], [1], [0, 0, 1, 1], [], []>} : vector<16x16xf32>, vector<16x16xf32>, vector<16x16xf32> -> vector<16x16xf32>
    %c0_65 = arith.constant 0 : index
    %c0_66 = arith.constant 0 : index
    %c0_67 = arith.constant 0 : index
    %134 = vector.load %arg11[%c0_65, %c0_66, %c0_67] : memref<3x1x16xf32, #tpu.memory_space<vmem>>, vector<1x1x16xf32>
    %135 = vector.shape_cast %134 : vector<1x1x16xf32> to vector<1x16xf32>
    %136 = vector.broadcast %135 : vector<1x16xf32> to vector<16x16xf32>
    %137 = arith.addf %133, %136 : vector<16x16xf32>
    %cst_68 = arith.constant 0.000000e+00 : f32
    %138 = vector.broadcast %cst_68 : f32 to vector<16x16xf32>
    %139 = arith.maximumf %137, %138 : vector<16x16xf32>
    %c0_69 = arith.constant 0 : index
    %c0_70 = arith.constant 0 : index
    %c0_71 = arith.constant 0 : index
    %140 = vector.load %arg12[%c0_69, %c0_70, %c0_71] : memref<3x16x16xf32, #tpu.memory_space<vmem>>, vector<1x16x16xf32>
    %141 = vector.shape_cast %140 : vector<1x16x16xf32> to vector<16x16xf32>
    %cst_72 = arith.constant dense<0.000000e+00> : vector<16x16xf32>
    %142 = tpu.matmul %139, %141, %cst_72 {dimension_numbers = #tpu.dot_dimension_numbers<[1], [0], [0], [1], [0, 0, 1, 1], [], []>} : vector<16x16xf32>, vector<16x16xf32>, vector<16x16xf32> -> vector<16x16xf32>
    %c0_73 = arith.constant 0 : index
    %c0_74 = arith.constant 0 : index
    %c0_75 = arith.constant 0 : index
    %143 = vector.load %arg13[%c0_73, %c0_74, %c0_75] : memref<3x1x16xf32, #tpu.memory_space<vmem>>, vector<1x1x16xf32>
    %144 = vector.shape_cast %143 : vector<1x1x16xf32> to vector<1x16xf32>
    %145 = vector.broadcast %144 : vector<1x16xf32> to vector<16x16xf32>
    %146 = arith.addf %142, %145 : vector<16x16xf32>
    %147 = arith.addf %130, %146 : vector<16x16xf32>
    %c0_76 = arith.constant 0 : index
    %c0_77 = arith.constant 0 : index
    %c0_78 = arith.constant 0 : index
    %148 = vector.load %arg14[%c0_76, %c0_77, %c0_78] : memref<3x1x16xf32, #tpu.memory_space<vmem>>, vector<1x1x16xf32>
    %149 = vector.shape_cast %148 : vector<1x1x16xf32> to vector<1x16xf32>
    %c0_79 = arith.constant 0 : index
    %c0_80 = arith.constant 0 : index
    %c0_81 = arith.constant 0 : index
    %150 = vector.load %arg15[%c0_79, %c0_80, %c0_81] : memref<3x1x16xf32, #tpu.memory_space<vmem>>, vector<1x1x16xf32>
    %151 = vector.shape_cast %150 : vector<1x1x16xf32> to vector<1x16xf32>
    %cst_82 = arith.constant dense<0.000000e+00> : vector<16xf32>
    %152 = vector.multi_reduction <add>, %147, %cst_82 [1] : vector<16x16xf32> to vector<16xf32>
    %153 = vector.shape_cast %152 : vector<16xf32> to vector<16x1xf32>
    %cst_83 = arith.constant 1.600000e+01 : f32
    %154 = vector.broadcast %cst_83 : f32 to vector<16x1xf32>
    %155 = arith.divf %153, %154 : vector<16x1xf32>
    %156 = vector.broadcast %155 : vector<16x1xf32> to vector<16x16xf32>
    %157 = arith.subf %147, %156 : vector<16x16xf32>
    %158 = arith.mulf %157, %157 : vector<16x16xf32>
    %cst_84 = arith.constant dense<0.000000e+00> : vector<16xf32>
    %159 = vector.multi_reduction <add>, %158, %cst_84 [1] : vector<16x16xf32> to vector<16xf32>
    %160 = vector.shape_cast %159 : vector<16xf32> to vector<16x1xf32>
    %cst_85 = arith.constant 1.600000e+01 : f32
    %161 = vector.broadcast %cst_85 : f32 to vector<16x1xf32>
    %162 = arith.divf %160, %161 : vector<16x1xf32>
    %163 = vector.broadcast %155 : vector<16x1xf32> to vector<16x16xf32>
    %164 = arith.subf %147, %163 : vector<16x16xf32>
    %cst_86 = arith.constant 9.99999974E-6 : f32
    %165 = vector.broadcast %cst_86 : f32 to vector<16x1xf32>
    %166 = arith.addf %162, %165 : vector<16x1xf32>
    %167 = math.rsqrt %166 : vector<16x1xf32>
    %168 = vector.broadcast %167 : vector<16x1xf32> to vector<16x16xf32>
    %169 = arith.mulf %164, %168 : vector<16x16xf32>
    %170 = vector.broadcast %149 : vector<1x16xf32> to vector<16x16xf32>
    %171 = arith.mulf %169, %170 : vector<16x16xf32>
    %172 = vector.broadcast %151 : vector<1x16xf32> to vector<16x16xf32>
    %173 = arith.addf %171, %172 : vector<16x16xf32>
    %c1_87 = arith.constant 1 : index
    %c0_88 = arith.constant 0 : index
    %c0_89 = arith.constant 0 : index
    %174 = vector.load %arg4[%c1_87, %c0_88, %c0_89] : memref<3x16x48xf32, #tpu.memory_space<vmem>>, vector<1x16x48xf32>
    %175 = vector.shape_cast %174 : vector<1x16x48xf32> to vector<16x48xf32>
    %c1_90 = arith.constant 1 : index
    %c0_91 = arith.constant 0 : index
    %c0_92 = arith.constant 0 : index
    %176 = vector.load %arg5[%c1_90, %c0_91, %c0_92] : memref<3x1x48xf32, #tpu.memory_space<vmem>>, vector<1x1x48xf32>
    %177 = vector.shape_cast %176 : vector<1x1x48xf32> to vector<1x48xf32>
    %cst_93 = arith.constant dense<0.000000e+00> : vector<16x48xf32>
    %178 = tpu.matmul %173, %175, %cst_93 {dimension_numbers = #tpu.dot_dimension_numbers<[1], [0], [0], [1], [0, 0, 1, 1], [], []>} : vector<16x16xf32>, vector<16x48xf32>, vector<16x48xf32> -> vector<16x48xf32>
    %179 = vector.broadcast %177 : vector<1x48xf32> to vector<16x48xf32>
    %180 = arith.addf %178, %179 : vector<16x48xf32>
    %181 = vector.extract_strided_slice %180 {offsets = [0, 0], sizes = [16, 16], strides = [1, 1]} : vector<16x48xf32> to vector<16x16xf32>
    %cst_94 = arith.constant 5.000000e-01 : f32
    %182 = vector.broadcast %cst_94 : f32 to vector<16x16xf32>
    %183 = arith.mulf %181, %182 : vector<16x16xf32>
    %184 = vector.shape_cast %183 : vector<16x16xf32> to vector<2x8x16xf32>
    %185 = vector.extract_strided_slice %180 {offsets = [0, 16], sizes = [16, 16], strides = [1, 1]} : vector<16x48xf32> to vector<16x16xf32>
    %186 = vector.shape_cast %185 : vector<16x16xf32> to vector<2x8x16xf32>
    %187 = vector.extract_strided_slice %180 {offsets = [0, 32], sizes = [16, 16], strides = [1, 1]} : vector<16x48xf32> to vector<16x16xf32>
    %188 = vector.shape_cast %187 : vector<16x16xf32> to vector<2x8x16xf32>
    %189 = vector.extract_strided_slice %184 {offsets = [0, 0, 0], sizes = [2, 8, 4], strides = [1, 1, 1]} : vector<2x8x16xf32> to vector<2x8x4xf32>
    %190 = vector.extract_strided_slice %186 {offsets = [0, 0, 0], sizes = [2, 8, 4], strides = [1, 1, 1]} : vector<2x8x16xf32> to vector<2x8x4xf32>
    %191 = vector.extract_strided_slice %188 {offsets = [0, 0, 0], sizes = [2, 8, 4], strides = [1, 1, 1]} : vector<2x8x16xf32> to vector<2x8x4xf32>
    "tpu.trace_start"() <{level = 10 : i32, message = "bqe,bke->bqk"}> : () -> ()
    %cst_95 = arith.constant dense<0.000000e+00> : vector<2x8x8xf32>
    %192 = tpu.matmul %189, %190, %cst_95 {dimension_numbers = #tpu.dot_dimension_numbers<[2], [2], [1], [1], [0, 0, 0, 1, 1, 1], [0], [0]>} : vector<2x8x4xf32>, vector<2x8x4xf32>, vector<2x8x8xf32> -> vector<2x8x8xf32>
    "tpu.trace_stop"() : () -> ()
    %cst_96 = arith.constant dense<0xFF800000> : vector<2x8xf32>
    %193 = vector.multi_reduction <maximumf>, %192, %cst_96 [2] : vector<2x8x8xf32> to vector<2x8xf32>
    %194 = vector.shape_cast %193 : vector<2x8xf32> to vector<2x8x1xf32>
    %195 = vector.broadcast %194 : vector<2x8x1xf32> to vector<2x8x8xf32>
    %196 = arith.subf %192, %195 : vector<2x8x8xf32>
    %197 = math.exp %196 : vector<2x8x8xf32>
    %cst_97 = arith.constant dense<0.000000e+00> : vector<2x8xf32>
    %198 = vector.multi_reduction <add>, %197, %cst_97 [2] : vector<2x8x8xf32> to vector<2x8xf32>
    %199 = vector.shape_cast %198 : vector<2x8xf32> to vector<2x8x1xf32>
    %200 = tpu.reciprocal %199 {approx = true} : vector<2x8x1xf32> -> vector<2x8x1xf32>
    "tpu.trace_start"() <{level = 10 : i32, message = "bqk,bke->bqe"}> : () -> ()
    %cst_98 = arith.constant dense<0.000000e+00> : vector<2x8x4xf32>
    %201 = tpu.matmul %197, %191, %cst_98 {dimension_numbers = #tpu.dot_dimension_numbers<[2], [1], [1], [2], [0, 0, 0, 1, 1, 2], [0], [0]>} : vector<2x8x8xf32>, vector<2x8x4xf32>, vector<2x8x4xf32> -> vector<2x8x4xf32>
    "tpu.trace_stop"() : () -> ()
    %202 = vector.broadcast %200 : vector<2x8x1xf32> to vector<2x8x4xf32>
    %203 = arith.mulf %201, %202 : vector<2x8x4xf32>
    %204 = vector.shape_cast %203 : vector<2x8x4xf32> to vector<16x4xf32>
    %c1_99 = arith.constant 1 : index
    %c0_100 = arith.constant 0 : index
    %c0_101 = arith.constant 0 : index
    %c0_102 = arith.constant 0 : index
    %205 = vector.load %arg6[%c1_99, %c0_100, %c0_101, %c0_102] : memref<3x4x4x16xf32, #tpu.memory_space<vmem>>, vector<1x1x4x16xf32>
    %206 = vector.shape_cast %205 : vector<1x1x4x16xf32> to vector<4x16xf32>
    %cst_103 = arith.constant dense<0.000000e+00> : vector<16x16xf32>
    %207 = tpu.matmul %204, %206, %cst_103 {dimension_numbers = #tpu.dot_dimension_numbers<[1], [0], [0], [1], [0, 0, 1, 1], [], []>} : vector<16x4xf32>, vector<4x16xf32>, vector<16x16xf32> -> vector<16x16xf32>
    %208 = vector.extract_strided_slice %184 {offsets = [0, 0, 4], sizes = [2, 8, 4], strides = [1, 1, 1]} : vector<2x8x16xf32> to vector<2x8x4xf32>
    %209 = vector.extract_strided_slice %186 {offsets = [0, 0, 4], sizes = [2, 8, 4], strides = [1, 1, 1]} : vector<2x8x16xf32> to vector<2x8x4xf32>
    %210 = vector.extract_strided_slice %188 {offsets = [0, 0, 4], sizes = [2, 8, 4], strides = [1, 1, 1]} : vector<2x8x16xf32> to vector<2x8x4xf32>
    "tpu.trace_start"() <{level = 10 : i32, message = "bqe,bke->bqk"}> : () -> ()
    %cst_104 = arith.constant dense<0.000000e+00> : vector<2x8x8xf32>
    %211 = tpu.matmul %208, %209, %cst_104 {dimension_numbers = #tpu.dot_dimension_numbers<[2], [2], [1], [1], [0, 0, 0, 1, 1, 1], [0], [0]>} : vector<2x8x4xf32>, vector<2x8x4xf32>, vector<2x8x8xf32> -> vector<2x8x8xf32>
    "tpu.trace_stop"() : () -> ()
    %cst_105 = arith.constant dense<0xFF800000> : vector<2x8xf32>
    %212 = vector.multi_reduction <maximumf>, %211, %cst_105 [2] : vector<2x8x8xf32> to vector<2x8xf32>
    %213 = vector.shape_cast %212 : vector<2x8xf32> to vector<2x8x1xf32>
    %214 = vector.broadcast %213 : vector<2x8x1xf32> to vector<2x8x8xf32>
    %215 = arith.subf %211, %214 : vector<2x8x8xf32>
    %216 = math.exp %215 : vector<2x8x8xf32>
    %cst_106 = arith.constant dense<0.000000e+00> : vector<2x8xf32>
    %217 = vector.multi_reduction <add>, %216, %cst_106 [2] : vector<2x8x8xf32> to vector<2x8xf32>
    %218 = vector.shape_cast %217 : vector<2x8xf32> to vector<2x8x1xf32>
    %219 = tpu.reciprocal %218 {approx = true} : vector<2x8x1xf32> -> vector<2x8x1xf32>
    "tpu.trace_start"() <{level = 10 : i32, message = "bqk,bke->bqe"}> : () -> ()
    %cst_107 = arith.constant dense<0.000000e+00> : vector<2x8x4xf32>
    %220 = tpu.matmul %216, %210, %cst_107 {dimension_numbers = #tpu.dot_dimension_numbers<[2], [1], [1], [2], [0, 0, 0, 1, 1, 2], [0], [0]>} : vector<2x8x8xf32>, vector<2x8x4xf32>, vector<2x8x4xf32> -> vector<2x8x4xf32>
    "tpu.trace_stop"() : () -> ()
    %221 = vector.broadcast %219 : vector<2x8x1xf32> to vector<2x8x4xf32>
    %222 = arith.mulf %220, %221 : vector<2x8x4xf32>
    %223 = vector.shape_cast %222 : vector<2x8x4xf32> to vector<16x4xf32>
    %c1_108 = arith.constant 1 : index
    %c1_109 = arith.constant 1 : index
    %c0_110 = arith.constant 0 : index
    %c0_111 = arith.constant 0 : index
    %224 = vector.load %arg6[%c1_108, %c1_109, %c0_110, %c0_111] : memref<3x4x4x16xf32, #tpu.memory_space<vmem>>, vector<1x1x4x16xf32>
    %225 = vector.shape_cast %224 : vector<1x1x4x16xf32> to vector<4x16xf32>
    %cst_112 = arith.constant dense<0.000000e+00> : vector<16x16xf32>
    %226 = tpu.matmul %223, %225, %cst_112 {dimension_numbers = #tpu.dot_dimension_numbers<[1], [0], [0], [1], [0, 0, 1, 1], [], []>} : vector<16x4xf32>, vector<4x16xf32>, vector<16x16xf32> -> vector<16x16xf32>
    %227 = arith.addf %207, %226 : vector<16x16xf32>
    %228 = vector.extract_strided_slice %184 {offsets = [0, 0, 8], sizes = [2, 8, 4], strides = [1, 1, 1]} : vector<2x8x16xf32> to vector<2x8x4xf32>
    %229 = vector.extract_strided_slice %186 {offsets = [0, 0, 8], sizes = [2, 8, 4], strides = [1, 1, 1]} : vector<2x8x16xf32> to vector<2x8x4xf32>
    %230 = vector.extract_strided_slice %188 {offsets = [0, 0, 8], sizes = [2, 8, 4], strides = [1, 1, 1]} : vector<2x8x16xf32> to vector<2x8x4xf32>
    "tpu.trace_start"() <{level = 10 : i32, message = "bqe,bke->bqk"}> : () -> ()
    %cst_113 = arith.constant dense<0.000000e+00> : vector<2x8x8xf32>
    %231 = tpu.matmul %228, %229, %cst_113 {dimension_numbers = #tpu.dot_dimension_numbers<[2], [2], [1], [1], [0, 0, 0, 1, 1, 1], [0], [0]>} : vector<2x8x4xf32>, vector<2x8x4xf32>, vector<2x8x8xf32> -> vector<2x8x8xf32>
    "tpu.trace_stop"() : () -> ()
    %cst_114 = arith.constant dense<0xFF800000> : vector<2x8xf32>
    %232 = vector.multi_reduction <maximumf>, %231, %cst_114 [2] : vector<2x8x8xf32> to vector<2x8xf32>
    %233 = vector.shape_cast %232 : vector<2x8xf32> to vector<2x8x1xf32>
    %234 = vector.broadcast %233 : vector<2x8x1xf32> to vector<2x8x8xf32>
    %235 = arith.subf %231, %234 : vector<2x8x8xf32>
    %236 = math.exp %235 : vector<2x8x8xf32>
    %cst_115 = arith.constant dense<0.000000e+00> : vector<2x8xf32>
    %237 = vector.multi_reduction <add>, %236, %cst_115 [2] : vector<2x8x8xf32> to vector<2x8xf32>
    %238 = vector.shape_cast %237 : vector<2x8xf32> to vector<2x8x1xf32>
    %239 = tpu.reciprocal %238 {approx = true} : vector<2x8x1xf32> -> vector<2x8x1xf32>
    "tpu.trace_start"() <{level = 10 : i32, message = "bqk,bke->bqe"}> : () -> ()
    %cst_116 = arith.constant dense<0.000000e+00> : vector<2x8x4xf32>
    %240 = tpu.matmul %236, %230, %cst_116 {dimension_numbers = #tpu.dot_dimension_numbers<[2], [1], [1], [2], [0, 0, 0, 1, 1, 2], [0], [0]>} : vector<2x8x8xf32>, vector<2x8x4xf32>, vector<2x8x4xf32> -> vector<2x8x4xf32>
    "tpu.trace_stop"() : () -> ()
    %241 = vector.broadcast %239 : vector<2x8x1xf32> to vector<2x8x4xf32>
    %242 = arith.mulf %240, %241 : vector<2x8x4xf32>
    %243 = vector.shape_cast %242 : vector<2x8x4xf32> to vector<16x4xf32>
    %c1_117 = arith.constant 1 : index
    %c2_118 = arith.constant 2 : index
    %c0_119 = arith.constant 0 : index
    %c0_120 = arith.constant 0 : index
    %244 = vector.load %arg6[%c1_117, %c2_118, %c0_119, %c0_120] : memref<3x4x4x16xf32, #tpu.memory_space<vmem>>, vector<1x1x4x16xf32>
    %245 = vector.shape_cast %244 : vector<1x1x4x16xf32> to vector<4x16xf32>
    %cst_121 = arith.constant dense<0.000000e+00> : vector<16x16xf32>
    %246 = tpu.matmul %243, %245, %cst_121 {dimension_numbers = #tpu.dot_dimension_numbers<[1], [0], [0], [1], [0, 0, 1, 1], [], []>} : vector<16x4xf32>, vector<4x16xf32>, vector<16x16xf32> -> vector<16x16xf32>
    %247 = arith.addf %227, %246 : vector<16x16xf32>
    %248 = vector.extract_strided_slice %184 {offsets = [0, 0, 12], sizes = [2, 8, 4], strides = [1, 1, 1]} : vector<2x8x16xf32> to vector<2x8x4xf32>
    %249 = vector.extract_strided_slice %186 {offsets = [0, 0, 12], sizes = [2, 8, 4], strides = [1, 1, 1]} : vector<2x8x16xf32> to vector<2x8x4xf32>
    %250 = vector.extract_strided_slice %188 {offsets = [0, 0, 12], sizes = [2, 8, 4], strides = [1, 1, 1]} : vector<2x8x16xf32> to vector<2x8x4xf32>
    "tpu.trace_start"() <{level = 10 : i32, message = "bqe,bke->bqk"}> : () -> ()
    %cst_122 = arith.constant dense<0.000000e+00> : vector<2x8x8xf32>
    %251 = tpu.matmul %248, %249, %cst_122 {dimension_numbers = #tpu.dot_dimension_numbers<[2], [2], [1], [1], [0, 0, 0, 1, 1, 1], [0], [0]>} : vector<2x8x4xf32>, vector<2x8x4xf32>, vector<2x8x8xf32> -> vector<2x8x8xf32>
    "tpu.trace_stop"() : () -> ()
    %cst_123 = arith.constant dense<0xFF800000> : vector<2x8xf32>
    %252 = vector.multi_reduction <maximumf>, %251, %cst_123 [2] : vector<2x8x8xf32> to vector<2x8xf32>
    %253 = vector.shape_cast %252 : vector<2x8xf32> to vector<2x8x1xf32>
    %254 = vector.broadcast %253 : vector<2x8x1xf32> to vector<2x8x8xf32>
    %255 = arith.subf %251, %254 : vector<2x8x8xf32>
    %256 = math.exp %255 : vector<2x8x8xf32>
    %cst_124 = arith.constant dense<0.000000e+00> : vector<2x8xf32>
    %257 = vector.multi_reduction <add>, %256, %cst_124 [2] : vector<2x8x8xf32> to vector<2x8xf32>
    %258 = vector.shape_cast %257 : vector<2x8xf32> to vector<2x8x1xf32>
    %259 = tpu.reciprocal %258 {approx = true} : vector<2x8x1xf32> -> vector<2x8x1xf32>
    "tpu.trace_start"() <{level = 10 : i32, message = "bqk,bke->bqe"}> : () -> ()
    %cst_125 = arith.constant dense<0.000000e+00> : vector<2x8x4xf32>
    %260 = tpu.matmul %256, %250, %cst_125 {dimension_numbers = #tpu.dot_dimension_numbers<[2], [1], [1], [2], [0, 0, 0, 1, 1, 2], [0], [0]>} : vector<2x8x8xf32>, vector<2x8x4xf32>, vector<2x8x4xf32> -> vector<2x8x4xf32>
    "tpu.trace_stop"() : () -> ()
    %261 = vector.broadcast %259 : vector<2x8x1xf32> to vector<2x8x4xf32>
    %262 = arith.mulf %260, %261 : vector<2x8x4xf32>
    %263 = vector.shape_cast %262 : vector<2x8x4xf32> to vector<16x4xf32>
    %c1_126 = arith.constant 1 : index
    %c3_127 = arith.constant 3 : index
    %c0_128 = arith.constant 0 : index
    %c0_129 = arith.constant 0 : index
    %264 = vector.load %arg6[%c1_126, %c3_127, %c0_128, %c0_129] : memref<3x4x4x16xf32, #tpu.memory_space<vmem>>, vector<1x1x4x16xf32>
    %265 = vector.shape_cast %264 : vector<1x1x4x16xf32> to vector<4x16xf32>
    %cst_130 = arith.constant dense<0.000000e+00> : vector<16x16xf32>
    %266 = tpu.matmul %263, %265, %cst_130 {dimension_numbers = #tpu.dot_dimension_numbers<[1], [0], [0], [1], [0, 0, 1, 1], [], []>} : vector<16x4xf32>, vector<4x16xf32>, vector<16x16xf32> -> vector<16x16xf32>
    %267 = arith.addf %247, %266 : vector<16x16xf32>
    %c1_131 = arith.constant 1 : index
    %c0_132 = arith.constant 0 : index
    %c0_133 = arith.constant 0 : index
    %268 = vector.load %arg7[%c1_131, %c0_132, %c0_133] : memref<3x1x16xf32, #tpu.memory_space<vmem>>, vector<1x1x16xf32>
    %269 = vector.shape_cast %268 : vector<1x1x16xf32> to vector<1x16xf32>
    %270 = vector.broadcast %269 : vector<1x16xf32> to vector<16x16xf32>
    %271 = arith.addf %267, %270 : vector<16x16xf32>
    %272 = arith.addf %173, %271 : vector<16x16xf32>
    %c1_134 = arith.constant 1 : index
    %c0_135 = arith.constant 0 : index
    %c0_136 = arith.constant 0 : index
    %273 = vector.load %arg8[%c1_134, %c0_135, %c0_136] : memref<3x1x16xf32, #tpu.memory_space<vmem>>, vector<1x1x16xf32>
    %274 = vector.shape_cast %273 : vector<1x1x16xf32> to vector<1x16xf32>
    %c1_137 = arith.constant 1 : index
    %c0_138 = arith.constant 0 : index
    %c0_139 = arith.constant 0 : index
    %275 = vector.load %arg9[%c1_137, %c0_138, %c0_139] : memref<3x1x16xf32, #tpu.memory_space<vmem>>, vector<1x1x16xf32>
    %276 = vector.shape_cast %275 : vector<1x1x16xf32> to vector<1x16xf32>
    %cst_140 = arith.constant dense<0.000000e+00> : vector<16xf32>
    %277 = vector.multi_reduction <add>, %272, %cst_140 [1] : vector<16x16xf32> to vector<16xf32>
    %278 = vector.shape_cast %277 : vector<16xf32> to vector<16x1xf32>
    %cst_141 = arith.constant 1.600000e+01 : f32
    %279 = vector.broadcast %cst_141 : f32 to vector<16x1xf32>
    %280 = arith.divf %278, %279 : vector<16x1xf32>
    %281 = vector.broadcast %280 : vector<16x1xf32> to vector<16x16xf32>
    %282 = arith.subf %272, %281 : vector<16x16xf32>
    %283 = arith.mulf %282, %282 : vector<16x16xf32>
    %cst_142 = arith.constant dense<0.000000e+00> : vector<16xf32>
    %284 = vector.multi_reduction <add>, %283, %cst_142 [1] : vector<16x16xf32> to vector<16xf32>
    %285 = vector.shape_cast %284 : vector<16xf32> to vector<16x1xf32>
    %cst_143 = arith.constant 1.600000e+01 : f32
    %286 = vector.broadcast %cst_143 : f32 to vector<16x1xf32>
    %287 = arith.divf %285, %286 : vector<16x1xf32>
    %288 = vector.broadcast %280 : vector<16x1xf32> to vector<16x16xf32>
    %289 = arith.subf %272, %288 : vector<16x16xf32>
    %cst_144 = arith.constant 9.99999974E-6 : f32
    %290 = vector.broadcast %cst_144 : f32 to vector<16x1xf32>
    %291 = arith.addf %287, %290 : vector<16x1xf32>
    %292 = math.rsqrt %291 : vector<16x1xf32>
    %293 = vector.broadcast %292 : vector<16x1xf32> to vector<16x16xf32>
    %294 = arith.mulf %289, %293 : vector<16x16xf32>
    %295 = vector.broadcast %274 : vector<1x16xf32> to vector<16x16xf32>
    %296 = arith.mulf %294, %295 : vector<16x16xf32>
    %297 = vector.broadcast %276 : vector<1x16xf32> to vector<16x16xf32>
    %298 = arith.addf %296, %297 : vector<16x16xf32>
    %c1_145 = arith.constant 1 : index
    %c0_146 = arith.constant 0 : index
    %c0_147 = arith.constant 0 : index
    %299 = vector.load %arg10[%c1_145, %c0_146, %c0_147] : memref<3x16x16xf32, #tpu.memory_space<vmem>>, vector<1x16x16xf32>
    %300 = vector.shape_cast %299 : vector<1x16x16xf32> to vector<16x16xf32>
    %cst_148 = arith.constant dense<0.000000e+00> : vector<16x16xf32>
    %301 = tpu.matmul %298, %300, %cst_148 {dimension_numbers = #tpu.dot_dimension_numbers<[1], [0], [0], [1], [0, 0, 1, 1], [], []>} : vector<16x16xf32>, vector<16x16xf32>, vector<16x16xf32> -> vector<16x16xf32>
    %c1_149 = arith.constant 1 : index
    %c0_150 = arith.constant 0 : index
    %c0_151 = arith.constant 0 : index
    %302 = vector.load %arg11[%c1_149, %c0_150, %c0_151] : memref<3x1x16xf32, #tpu.memory_space<vmem>>, vector<1x1x16xf32>
    %303 = vector.shape_cast %302 : vector<1x1x16xf32> to vector<1x16xf32>
    %304 = vector.broadcast %303 : vector<1x16xf32> to vector<16x16xf32>
    %305 = arith.addf %301, %304 : vector<16x16xf32>
    %cst_152 = arith.constant 0.000000e+00 : f32
    %306 = vector.broadcast %cst_152 : f32 to vector<16x16xf32>
    %307 = arith.maximumf %305, %306 : vector<16x16xf32>
    %c1_153 = arith.constant 1 : index
    %c0_154 = arith.constant 0 : index
    %c0_155 = arith.constant 0 : index
    %308 = vector.load %arg12[%c1_153, %c0_154, %c0_155] : memref<3x16x16xf32, #tpu.memory_space<vmem>>, vector<1x16x16xf32>
    %309 = vector.shape_cast %308 : vector<1x16x16xf32> to vector<16x16xf32>
    %cst_156 = arith.constant dense<0.000000e+00> : vector<16x16xf32>
    %310 = tpu.matmul %307, %309, %cst_156 {dimension_numbers = #tpu.dot_dimension_numbers<[1], [0], [0], [1], [0, 0, 1, 1], [], []>} : vector<16x16xf32>, vector<16x16xf32>, vector<16x16xf32> -> vector<16x16xf32>
    %c1_157 = arith.constant 1 : index
    %c0_158 = arith.constant 0 : index
    %c0_159 = arith.constant 0 : index
    %311 = vector.load %arg13[%c1_157, %c0_158, %c0_159] : memref<3x1x16xf32, #tpu.memory_space<vmem>>, vector<1x1x16xf32>
    %312 = vector.shape_cast %311 : vector<1x1x16xf32> to vector<1x16xf32>
    %313 = vector.broadcast %312 : vector<1x16xf32> to vector<16x16xf32>
    %314 = arith.addf %310, %313 : vector<16x16xf32>
    %315 = arith.addf %298, %314 : vector<16x16xf32>
    %c1_160 = arith.constant 1 : index
    %c0_161 = arith.constant 0 : index
    %c0_162 = arith.constant 0 : index
    %316 = vector.load %arg14[%c1_160, %c0_161, %c0_162] : memref<3x1x16xf32, #tpu.memory_space<vmem>>, vector<1x1x16xf32>
    %317 = vector.shape_cast %316 : vector<1x1x16xf32> to vector<1x16xf32>
    %c1_163 = arith.constant 1 : index
    %c0_164 = arith.constant 0 : index
    %c0_165 = arith.constant 0 : index
    %318 = vector.load %arg15[%c1_163, %c0_164, %c0_165] : memref<3x1x16xf32, #tpu.memory_space<vmem>>, vector<1x1x16xf32>
    %319 = vector.shape_cast %318 : vector<1x1x16xf32> to vector<1x16xf32>
    %cst_166 = arith.constant dense<0.000000e+00> : vector<16xf32>
    %320 = vector.multi_reduction <add>, %315, %cst_166 [1] : vector<16x16xf32> to vector<16xf32>
    %321 = vector.shape_cast %320 : vector<16xf32> to vector<16x1xf32>
    %cst_167 = arith.constant 1.600000e+01 : f32
    %322 = vector.broadcast %cst_167 : f32 to vector<16x1xf32>
    %323 = arith.divf %321, %322 : vector<16x1xf32>
    %324 = vector.broadcast %323 : vector<16x1xf32> to vector<16x16xf32>
    %325 = arith.subf %315, %324 : vector<16x16xf32>
    %326 = arith.mulf %325, %325 : vector<16x16xf32>
    %cst_168 = arith.constant dense<0.000000e+00> : vector<16xf32>
    %327 = vector.multi_reduction <add>, %326, %cst_168 [1] : vector<16x16xf32> to vector<16xf32>
    %328 = vector.shape_cast %327 : vector<16xf32> to vector<16x1xf32>
    %cst_169 = arith.constant 1.600000e+01 : f32
    %329 = vector.broadcast %cst_169 : f32 to vector<16x1xf32>
    %330 = arith.divf %328, %329 : vector<16x1xf32>
    %331 = vector.broadcast %323 : vector<16x1xf32> to vector<16x16xf32>
    %332 = arith.subf %315, %331 : vector<16x16xf32>
    %cst_170 = arith.constant 9.99999974E-6 : f32
    %333 = vector.broadcast %cst_170 : f32 to vector<16x1xf32>
    %334 = arith.addf %330, %333 : vector<16x1xf32>
    %335 = math.rsqrt %334 : vector<16x1xf32>
    %336 = vector.broadcast %335 : vector<16x1xf32> to vector<16x16xf32>
    %337 = arith.mulf %332, %336 : vector<16x16xf32>
    %338 = vector.broadcast %317 : vector<1x16xf32> to vector<16x16xf32>
    %339 = arith.mulf %337, %338 : vector<16x16xf32>
    %340 = vector.broadcast %319 : vector<1x16xf32> to vector<16x16xf32>
    %341 = arith.addf %339, %340 : vector<16x16xf32>
    %c2_171 = arith.constant 2 : index
    %c0_172 = arith.constant 0 : index
    %c0_173 = arith.constant 0 : index
    %342 = vector.load %arg4[%c2_171, %c0_172, %c0_173] : memref<3x16x48xf32, #tpu.memory_space<vmem>>, vector<1x16x48xf32>
    %343 = vector.shape_cast %342 : vector<1x16x48xf32> to vector<16x48xf32>
    %c2_174 = arith.constant 2 : index
    %c0_175 = arith.constant 0 : index
    %c0_176 = arith.constant 0 : index
    %344 = vector.load %arg5[%c2_174, %c0_175, %c0_176] : memref<3x1x48xf32, #tpu.memory_space<vmem>>, vector<1x1x48xf32>
    %345 = vector.shape_cast %344 : vector<1x1x48xf32> to vector<1x48xf32>
    %cst_177 = arith.constant dense<0.000000e+00> : vector<16x48xf32>
    %346 = tpu.matmul %341, %343, %cst_177 {dimension_numbers = #tpu.dot_dimension_numbers<[1], [0], [0], [1], [0, 0, 1, 1], [], []>} : vector<16x16xf32>, vector<16x48xf32>, vector<16x48xf32> -> vector<16x48xf32>
    %347 = vector.broadcast %345 : vector<1x48xf32> to vector<16x48xf32>
    %348 = arith.addf %346, %347 : vector<16x48xf32>
    %349 = vector.extract_strided_slice %348 {offsets = [0, 0], sizes = [16, 16], strides = [1, 1]} : vector<16x48xf32> to vector<16x16xf32>
    %cst_178 = arith.constant 5.000000e-01 : f32
    %350 = vector.broadcast %cst_178 : f32 to vector<16x16xf32>
    %351 = arith.mulf %349, %350 : vector<16x16xf32>
    %352 = vector.shape_cast %351 : vector<16x16xf32> to vector<2x8x16xf32>
    %353 = vector.extract_strided_slice %348 {offsets = [0, 16], sizes = [16, 16], strides = [1, 1]} : vector<16x48xf32> to vector<16x16xf32>
    %354 = vector.shape_cast %353 : vector<16x16xf32> to vector<2x8x16xf32>
    %355 = vector.extract_strided_slice %348 {offsets = [0, 32], sizes = [16, 16], strides = [1, 1]} : vector<16x48xf32> to vector<16x16xf32>
    %356 = vector.shape_cast %355 : vector<16x16xf32> to vector<2x8x16xf32>
    %357 = vector.extract_strided_slice %352 {offsets = [0, 0, 0], sizes = [2, 8, 4], strides = [1, 1, 1]} : vector<2x8x16xf32> to vector<2x8x4xf32>
    %358 = vector.extract_strided_slice %354 {offsets = [0, 0, 0], sizes = [2, 8, 4], strides = [1, 1, 1]} : vector<2x8x16xf32> to vector<2x8x4xf32>
    %359 = vector.extract_strided_slice %356 {offsets = [0, 0, 0], sizes = [2, 8, 4], strides = [1, 1, 1]} : vector<2x8x16xf32> to vector<2x8x4xf32>
    "tpu.trace_start"() <{level = 10 : i32, message = "bqe,bke->bqk"}> : () -> ()
    %cst_179 = arith.constant dense<0.000000e+00> : vector<2x8x8xf32>
    %360 = tpu.matmul %357, %358, %cst_179 {dimension_numbers = #tpu.dot_dimension_numbers<[2], [2], [1], [1], [0, 0, 0, 1, 1, 1], [0], [0]>} : vector<2x8x4xf32>, vector<2x8x4xf32>, vector<2x8x8xf32> -> vector<2x8x8xf32>
    "tpu.trace_stop"() : () -> ()
    %cst_180 = arith.constant dense<0xFF800000> : vector<2x8xf32>
    %361 = vector.multi_reduction <maximumf>, %360, %cst_180 [2] : vector<2x8x8xf32> to vector<2x8xf32>
    %362 = vector.shape_cast %361 : vector<2x8xf32> to vector<2x8x1xf32>
    %363 = vector.broadcast %362 : vector<2x8x1xf32> to vector<2x8x8xf32>
    %364 = arith.subf %360, %363 : vector<2x8x8xf32>
    %365 = math.exp %364 : vector<2x8x8xf32>
    %cst_181 = arith.constant dense<0.000000e+00> : vector<2x8xf32>
    %366 = vector.multi_reduction <add>, %365, %cst_181 [2] : vector<2x8x8xf32> to vector<2x8xf32>
    %367 = vector.shape_cast %366 : vector<2x8xf32> to vector<2x8x1xf32>
    %368 = tpu.reciprocal %367 {approx = true} : vector<2x8x1xf32> -> vector<2x8x1xf32>
    "tpu.trace_start"() <{level = 10 : i32, message = "bqk,bke->bqe"}> : () -> ()
    %cst_182 = arith.constant dense<0.000000e+00> : vector<2x8x4xf32>
    %369 = tpu.matmul %365, %359, %cst_182 {dimension_numbers = #tpu.dot_dimension_numbers<[2], [1], [1], [2], [0, 0, 0, 1, 1, 2], [0], [0]>} : vector<2x8x8xf32>, vector<2x8x4xf32>, vector<2x8x4xf32> -> vector<2x8x4xf32>
    "tpu.trace_stop"() : () -> ()
    %370 = vector.broadcast %368 : vector<2x8x1xf32> to vector<2x8x4xf32>
    %371 = arith.mulf %369, %370 : vector<2x8x4xf32>
    %372 = vector.shape_cast %371 : vector<2x8x4xf32> to vector<16x4xf32>
    %c2_183 = arith.constant 2 : index
    %c0_184 = arith.constant 0 : index
    %c0_185 = arith.constant 0 : index
    %c0_186 = arith.constant 0 : index
    %373 = vector.load %arg6[%c2_183, %c0_184, %c0_185, %c0_186] : memref<3x4x4x16xf32, #tpu.memory_space<vmem>>, vector<1x1x4x16xf32>
    %374 = vector.shape_cast %373 : vector<1x1x4x16xf32> to vector<4x16xf32>
    %cst_187 = arith.constant dense<0.000000e+00> : vector<16x16xf32>
    %375 = tpu.matmul %372, %374, %cst_187 {dimension_numbers = #tpu.dot_dimension_numbers<[1], [0], [0], [1], [0, 0, 1, 1], [], []>} : vector<16x4xf32>, vector<4x16xf32>, vector<16x16xf32> -> vector<16x16xf32>
    %376 = vector.extract_strided_slice %352 {offsets = [0, 0, 4], sizes = [2, 8, 4], strides = [1, 1, 1]} : vector<2x8x16xf32> to vector<2x8x4xf32>
    %377 = vector.extract_strided_slice %354 {offsets = [0, 0, 4], sizes = [2, 8, 4], strides = [1, 1, 1]} : vector<2x8x16xf32> to vector<2x8x4xf32>
    %378 = vector.extract_strided_slice %356 {offsets = [0, 0, 4], sizes = [2, 8, 4], strides = [1, 1, 1]} : vector<2x8x16xf32> to vector<2x8x4xf32>
    "tpu.trace_start"() <{level = 10 : i32, message = "bqe,bke->bqk"}> : () -> ()
    %cst_188 = arith.constant dense<0.000000e+00> : vector<2x8x8xf32>
    %379 = tpu.matmul %376, %377, %cst_188 {dimension_numbers = #tpu.dot_dimension_numbers<[2], [2], [1], [1], [0, 0, 0, 1, 1, 1], [0], [0]>} : vector<2x8x4xf32>, vector<2x8x4xf32>, vector<2x8x8xf32> -> vector<2x8x8xf32>
    "tpu.trace_stop"() : () -> ()
    %cst_189 = arith.constant dense<0xFF800000> : vector<2x8xf32>
    %380 = vector.multi_reduction <maximumf>, %379, %cst_189 [2] : vector<2x8x8xf32> to vector<2x8xf32>
    %381 = vector.shape_cast %380 : vector<2x8xf32> to vector<2x8x1xf32>
    %382 = vector.broadcast %381 : vector<2x8x1xf32> to vector<2x8x8xf32>
    %383 = arith.subf %379, %382 : vector<2x8x8xf32>
    %384 = math.exp %383 : vector<2x8x8xf32>
    %cst_190 = arith.constant dense<0.000000e+00> : vector<2x8xf32>
    %385 = vector.multi_reduction <add>, %384, %cst_190 [2] : vector<2x8x8xf32> to vector<2x8xf32>
    %386 = vector.shape_cast %385 : vector<2x8xf32> to vector<2x8x1xf32>
    %387 = tpu.reciprocal %386 {approx = true} : vector<2x8x1xf32> -> vector<2x8x1xf32>
    "tpu.trace_start"() <{level = 10 : i32, message = "bqk,bke->bqe"}> : () -> ()
    %cst_191 = arith.constant dense<0.000000e+00> : vector<2x8x4xf32>
    %388 = tpu.matmul %384, %378, %cst_191 {dimension_numbers = #tpu.dot_dimension_numbers<[2], [1], [1], [2], [0, 0, 0, 1, 1, 2], [0], [0]>} : vector<2x8x8xf32>, vector<2x8x4xf32>, vector<2x8x4xf32> -> vector<2x8x4xf32>
    "tpu.trace_stop"() : () -> ()
    %389 = vector.broadcast %387 : vector<2x8x1xf32> to vector<2x8x4xf32>
    %390 = arith.mulf %388, %389 : vector<2x8x4xf32>
    %391 = vector.shape_cast %390 : vector<2x8x4xf32> to vector<16x4xf32>
    %c2_192 = arith.constant 2 : index
    %c1_193 = arith.constant 1 : index
    %c0_194 = arith.constant 0 : index
    %c0_195 = arith.constant 0 : index
    %392 = vector.load %arg6[%c2_192, %c1_193, %c0_194, %c0_195] : memref<3x4x4x16xf32, #tpu.memory_space<vmem>>, vector<1x1x4x16xf32>
    %393 = vector.shape_cast %392 : vector<1x1x4x16xf32> to vector<4x16xf32>
    %cst_196 = arith.constant dense<0.000000e+00> : vector<16x16xf32>
    %394 = tpu.matmul %391, %393, %cst_196 {dimension_numbers = #tpu.dot_dimension_numbers<[1], [0], [0], [1], [0, 0, 1, 1], [], []>} : vector<16x4xf32>, vector<4x16xf32>, vector<16x16xf32> -> vector<16x16xf32>
    %395 = arith.addf %375, %394 : vector<16x16xf32>
    %396 = vector.extract_strided_slice %352 {offsets = [0, 0, 8], sizes = [2, 8, 4], strides = [1, 1, 1]} : vector<2x8x16xf32> to vector<2x8x4xf32>
    %397 = vector.extract_strided_slice %354 {offsets = [0, 0, 8], sizes = [2, 8, 4], strides = [1, 1, 1]} : vector<2x8x16xf32> to vector<2x8x4xf32>
    %398 = vector.extract_strided_slice %356 {offsets = [0, 0, 8], sizes = [2, 8, 4], strides = [1, 1, 1]} : vector<2x8x16xf32> to vector<2x8x4xf32>
    "tpu.trace_start"() <{level = 10 : i32, message = "bqe,bke->bqk"}> : () -> ()
    %cst_197 = arith.constant dense<0.000000e+00> : vector<2x8x8xf32>
    %399 = tpu.matmul %396, %397, %cst_197 {dimension_numbers = #tpu.dot_dimension_numbers<[2], [2], [1], [1], [0, 0, 0, 1, 1, 1], [0], [0]>} : vector<2x8x4xf32>, vector<2x8x4xf32>, vector<2x8x8xf32> -> vector<2x8x8xf32>
    "tpu.trace_stop"() : () -> ()
    %cst_198 = arith.constant dense<0xFF800000> : vector<2x8xf32>
    %400 = vector.multi_reduction <maximumf>, %399, %cst_198 [2] : vector<2x8x8xf32> to vector<2x8xf32>
    %401 = vector.shape_cast %400 : vector<2x8xf32> to vector<2x8x1xf32>
    %402 = vector.broadcast %401 : vector<2x8x1xf32> to vector<2x8x8xf32>
    %403 = arith.subf %399, %402 : vector<2x8x8xf32>
    %404 = math.exp %403 : vector<2x8x8xf32>
    %cst_199 = arith.constant dense<0.000000e+00> : vector<2x8xf32>
    %405 = vector.multi_reduction <add>, %404, %cst_199 [2] : vector<2x8x8xf32> to vector<2x8xf32>
    %406 = vector.shape_cast %405 : vector<2x8xf32> to vector<2x8x1xf32>
    %407 = tpu.reciprocal %406 {approx = true} : vector<2x8x1xf32> -> vector<2x8x1xf32>
    "tpu.trace_start"() <{level = 10 : i32, message = "bqk,bke->bqe"}> : () -> ()
    %cst_200 = arith.constant dense<0.000000e+00> : vector<2x8x4xf32>
    %408 = tpu.matmul %404, %398, %cst_200 {dimension_numbers = #tpu.dot_dimension_numbers<[2], [1], [1], [2], [0, 0, 0, 1, 1, 2], [0], [0]>} : vector<2x8x8xf32>, vector<2x8x4xf32>, vector<2x8x4xf32> -> vector<2x8x4xf32>
    "tpu.trace_stop"() : () -> ()
    %409 = vector.broadcast %407 : vector<2x8x1xf32> to vector<2x8x4xf32>
    %410 = arith.mulf %408, %409 : vector<2x8x4xf32>
    %411 = vector.shape_cast %410 : vector<2x8x4xf32> to vector<16x4xf32>
    %c2_201 = arith.constant 2 : index
    %c2_202 = arith.constant 2 : index
    %c0_203 = arith.constant 0 : index
    %c0_204 = arith.constant 0 : index
    %412 = vector.load %arg6[%c2_201, %c2_202, %c0_203, %c0_204] : memref<3x4x4x16xf32, #tpu.memory_space<vmem>>, vector<1x1x4x16xf32>
    %413 = vector.shape_cast %412 : vector<1x1x4x16xf32> to vector<4x16xf32>
    %cst_205 = arith.constant dense<0.000000e+00> : vector<16x16xf32>
    %414 = tpu.matmul %411, %413, %cst_205 {dimension_numbers = #tpu.dot_dimension_numbers<[1], [0], [0], [1], [0, 0, 1, 1], [], []>} : vector<16x4xf32>, vector<4x16xf32>, vector<16x16xf32> -> vector<16x16xf32>
    %415 = arith.addf %395, %414 : vector<16x16xf32>
    %416 = vector.extract_strided_slice %352 {offsets = [0, 0, 12], sizes = [2, 8, 4], strides = [1, 1, 1]} : vector<2x8x16xf32> to vector<2x8x4xf32>
    %417 = vector.extract_strided_slice %354 {offsets = [0, 0, 12], sizes = [2, 8, 4], strides = [1, 1, 1]} : vector<2x8x16xf32> to vector<2x8x4xf32>
    %418 = vector.extract_strided_slice %356 {offsets = [0, 0, 12], sizes = [2, 8, 4], strides = [1, 1, 1]} : vector<2x8x16xf32> to vector<2x8x4xf32>
    "tpu.trace_start"() <{level = 10 : i32, message = "bqe,bke->bqk"}> : () -> ()
    %cst_206 = arith.constant dense<0.000000e+00> : vector<2x8x8xf32>
    %419 = tpu.matmul %416, %417, %cst_206 {dimension_numbers = #tpu.dot_dimension_numbers<[2], [2], [1], [1], [0, 0, 0, 1, 1, 1], [0], [0]>} : vector<2x8x4xf32>, vector<2x8x4xf32>, vector<2x8x8xf32> -> vector<2x8x8xf32>
    "tpu.trace_stop"() : () -> ()
    %cst_207 = arith.constant dense<0xFF800000> : vector<2x8xf32>
    %420 = vector.multi_reduction <maximumf>, %419, %cst_207 [2] : vector<2x8x8xf32> to vector<2x8xf32>
    %421 = vector.shape_cast %420 : vector<2x8xf32> to vector<2x8x1xf32>
    %422 = vector.broadcast %421 : vector<2x8x1xf32> to vector<2x8x8xf32>
    %423 = arith.subf %419, %422 : vector<2x8x8xf32>
    %424 = math.exp %423 : vector<2x8x8xf32>
    %cst_208 = arith.constant dense<0.000000e+00> : vector<2x8xf32>
    %425 = vector.multi_reduction <add>, %424, %cst_208 [2] : vector<2x8x8xf32> to vector<2x8xf32>
    %426 = vector.shape_cast %425 : vector<2x8xf32> to vector<2x8x1xf32>
    %427 = tpu.reciprocal %426 {approx = true} : vector<2x8x1xf32> -> vector<2x8x1xf32>
    "tpu.trace_start"() <{level = 10 : i32, message = "bqk,bke->bqe"}> : () -> ()
    %cst_209 = arith.constant dense<0.000000e+00> : vector<2x8x4xf32>
    %428 = tpu.matmul %424, %418, %cst_209 {dimension_numbers = #tpu.dot_dimension_numbers<[2], [1], [1], [2], [0, 0, 0, 1, 1, 2], [0], [0]>} : vector<2x8x8xf32>, vector<2x8x4xf32>, vector<2x8x4xf32> -> vector<2x8x4xf32>
    "tpu.trace_stop"() : () -> ()
    %429 = vector.broadcast %427 : vector<2x8x1xf32> to vector<2x8x4xf32>
    %430 = arith.mulf %428, %429 : vector<2x8x4xf32>
    %431 = vector.shape_cast %430 : vector<2x8x4xf32> to vector<16x4xf32>
    %c2_210 = arith.constant 2 : index
    %c3_211 = arith.constant 3 : index
    %c0_212 = arith.constant 0 : index
    %c0_213 = arith.constant 0 : index
    %432 = vector.load %arg6[%c2_210, %c3_211, %c0_212, %c0_213] : memref<3x4x4x16xf32, #tpu.memory_space<vmem>>, vector<1x1x4x16xf32>
    %433 = vector.shape_cast %432 : vector<1x1x4x16xf32> to vector<4x16xf32>
    %cst_214 = arith.constant dense<0.000000e+00> : vector<16x16xf32>
    %434 = tpu.matmul %431, %433, %cst_214 {dimension_numbers = #tpu.dot_dimension_numbers<[1], [0], [0], [1], [0, 0, 1, 1], [], []>} : vector<16x4xf32>, vector<4x16xf32>, vector<16x16xf32> -> vector<16x16xf32>
    %435 = arith.addf %415, %434 : vector<16x16xf32>
    %c2_215 = arith.constant 2 : index
    %c0_216 = arith.constant 0 : index
    %c0_217 = arith.constant 0 : index
    %436 = vector.load %arg7[%c2_215, %c0_216, %c0_217] : memref<3x1x16xf32, #tpu.memory_space<vmem>>, vector<1x1x16xf32>
    %437 = vector.shape_cast %436 : vector<1x1x16xf32> to vector<1x16xf32>
    %438 = vector.broadcast %437 : vector<1x16xf32> to vector<16x16xf32>
    %439 = arith.addf %435, %438 : vector<16x16xf32>
    %440 = arith.addf %341, %439 : vector<16x16xf32>
    %c2_218 = arith.constant 2 : index
    %c0_219 = arith.constant 0 : index
    %c0_220 = arith.constant 0 : index
    %441 = vector.load %arg8[%c2_218, %c0_219, %c0_220] : memref<3x1x16xf32, #tpu.memory_space<vmem>>, vector<1x1x16xf32>
    %442 = vector.shape_cast %441 : vector<1x1x16xf32> to vector<1x16xf32>
    %c2_221 = arith.constant 2 : index
    %c0_222 = arith.constant 0 : index
    %c0_223 = arith.constant 0 : index
    %443 = vector.load %arg9[%c2_221, %c0_222, %c0_223] : memref<3x1x16xf32, #tpu.memory_space<vmem>>, vector<1x1x16xf32>
    %444 = vector.shape_cast %443 : vector<1x1x16xf32> to vector<1x16xf32>
    %cst_224 = arith.constant dense<0.000000e+00> : vector<16xf32>
    %445 = vector.multi_reduction <add>, %440, %cst_224 [1] : vector<16x16xf32> to vector<16xf32>
    %446 = vector.shape_cast %445 : vector<16xf32> to vector<16x1xf32>
    %cst_225 = arith.constant 1.600000e+01 : f32
    %447 = vector.broadcast %cst_225 : f32 to vector<16x1xf32>
    %448 = arith.divf %446, %447 : vector<16x1xf32>
    %449 = vector.broadcast %448 : vector<16x1xf32> to vector<16x16xf32>
    %450 = arith.subf %440, %449 : vector<16x16xf32>
    %451 = arith.mulf %450, %450 : vector<16x16xf32>
    %cst_226 = arith.constant dense<0.000000e+00> : vector<16xf32>
    %452 = vector.multi_reduction <add>, %451, %cst_226 [1] : vector<16x16xf32> to vector<16xf32>
    %453 = vector.shape_cast %452 : vector<16xf32> to vector<16x1xf32>
    %cst_227 = arith.constant 1.600000e+01 : f32
    %454 = vector.broadcast %cst_227 : f32 to vector<16x1xf32>
    %455 = arith.divf %453, %454 : vector<16x1xf32>
    %456 = vector.broadcast %448 : vector<16x1xf32> to vector<16x16xf32>
    %457 = arith.subf %440, %456 : vector<16x16xf32>
    %cst_228 = arith.constant 9.99999974E-6 : f32
    %458 = vector.broadcast %cst_228 : f32 to vector<16x1xf32>
    %459 = arith.addf %455, %458 : vector<16x1xf32>
    %460 = math.rsqrt %459 : vector<16x1xf32>
    %461 = vector.broadcast %460 : vector<16x1xf32> to vector<16x16xf32>
    %462 = arith.mulf %457, %461 : vector<16x16xf32>
    %463 = vector.broadcast %442 : vector<1x16xf32> to vector<16x16xf32>
    %464 = arith.mulf %462, %463 : vector<16x16xf32>
    %465 = vector.broadcast %444 : vector<1x16xf32> to vector<16x16xf32>
    %466 = arith.addf %464, %465 : vector<16x16xf32>
    %c2_229 = arith.constant 2 : index
    %c0_230 = arith.constant 0 : index
    %c0_231 = arith.constant 0 : index
    %467 = vector.load %arg10[%c2_229, %c0_230, %c0_231] : memref<3x16x16xf32, #tpu.memory_space<vmem>>, vector<1x16x16xf32>
    %468 = vector.shape_cast %467 : vector<1x16x16xf32> to vector<16x16xf32>
    %cst_232 = arith.constant dense<0.000000e+00> : vector<16x16xf32>
    %469 = tpu.matmul %466, %468, %cst_232 {dimension_numbers = #tpu.dot_dimension_numbers<[1], [0], [0], [1], [0, 0, 1, 1], [], []>} : vector<16x16xf32>, vector<16x16xf32>, vector<16x16xf32> -> vector<16x16xf32>
    %c2_233 = arith.constant 2 : index
    %c0_234 = arith.constant 0 : index
    %c0_235 = arith.constant 0 : index
    %470 = vector.load %arg11[%c2_233, %c0_234, %c0_235] : memref<3x1x16xf32, #tpu.memory_space<vmem>>, vector<1x1x16xf32>
    %471 = vector.shape_cast %470 : vector<1x1x16xf32> to vector<1x16xf32>
    %472 = vector.broadcast %471 : vector<1x16xf32> to vector<16x16xf32>
    %473 = arith.addf %469, %472 : vector<16x16xf32>
    %cst_236 = arith.constant 0.000000e+00 : f32
    %474 = vector.broadcast %cst_236 : f32 to vector<16x16xf32>
    %475 = arith.maximumf %473, %474 : vector<16x16xf32>
    %c2_237 = arith.constant 2 : index
    %c0_238 = arith.constant 0 : index
    %c0_239 = arith.constant 0 : index
    %476 = vector.load %arg12[%c2_237, %c0_238, %c0_239] : memref<3x16x16xf32, #tpu.memory_space<vmem>>, vector<1x16x16xf32>
    %477 = vector.shape_cast %476 : vector<1x16x16xf32> to vector<16x16xf32>
    %cst_240 = arith.constant dense<0.000000e+00> : vector<16x16xf32>
    %478 = tpu.matmul %475, %477, %cst_240 {dimension_numbers = #tpu.dot_dimension_numbers<[1], [0], [0], [1], [0, 0, 1, 1], [], []>} : vector<16x16xf32>, vector<16x16xf32>, vector<16x16xf32> -> vector<16x16xf32>
    %c2_241 = arith.constant 2 : index
    %c0_242 = arith.constant 0 : index
    %c0_243 = arith.constant 0 : index
    %479 = vector.load %arg13[%c2_241, %c0_242, %c0_243] : memref<3x1x16xf32, #tpu.memory_space<vmem>>, vector<1x1x16xf32>
    %480 = vector.shape_cast %479 : vector<1x1x16xf32> to vector<1x16xf32>
    %481 = vector.broadcast %480 : vector<1x16xf32> to vector<16x16xf32>
    %482 = arith.addf %478, %481 : vector<16x16xf32>
    %483 = arith.addf %466, %482 : vector<16x16xf32>
    %c2_244 = arith.constant 2 : index
    %c0_245 = arith.constant 0 : index
    %c0_246 = arith.constant 0 : index
    %484 = vector.load %arg14[%c2_244, %c0_245, %c0_246] : memref<3x1x16xf32, #tpu.memory_space<vmem>>, vector<1x1x16xf32>
    %485 = vector.shape_cast %484 : vector<1x1x16xf32> to vector<1x16xf32>
    %c2_247 = arith.constant 2 : index
    %c0_248 = arith.constant 0 : index
    %c0_249 = arith.constant 0 : index
    %486 = vector.load %arg15[%c2_247, %c0_248, %c0_249] : memref<3x1x16xf32, #tpu.memory_space<vmem>>, vector<1x1x16xf32>
    %487 = vector.shape_cast %486 : vector<1x1x16xf32> to vector<1x16xf32>
    %cst_250 = arith.constant dense<0.000000e+00> : vector<16xf32>
    %488 = vector.multi_reduction <add>, %483, %cst_250 [1] : vector<16x16xf32> to vector<16xf32>
    %489 = vector.shape_cast %488 : vector<16xf32> to vector<16x1xf32>
    %cst_251 = arith.constant 1.600000e+01 : f32
    %490 = vector.broadcast %cst_251 : f32 to vector<16x1xf32>
    %491 = arith.divf %489, %490 : vector<16x1xf32>
    %492 = vector.broadcast %491 : vector<16x1xf32> to vector<16x16xf32>
    %493 = arith.subf %483, %492 : vector<16x16xf32>
    %494 = arith.mulf %493, %493 : vector<16x16xf32>
    %cst_252 = arith.constant dense<0.000000e+00> : vector<16xf32>
    %495 = vector.multi_reduction <add>, %494, %cst_252 [1] : vector<16x16xf32> to vector<16xf32>
    %496 = vector.shape_cast %495 : vector<16xf32> to vector<16x1xf32>
    %cst_253 = arith.constant 1.600000e+01 : f32
    %497 = vector.broadcast %cst_253 : f32 to vector<16x1xf32>
    %498 = arith.divf %496, %497 : vector<16x1xf32>
    %499 = vector.broadcast %491 : vector<16x1xf32> to vector<16x16xf32>
    %500 = arith.subf %483, %499 : vector<16x16xf32>
    %cst_254 = arith.constant 9.99999974E-6 : f32
    %501 = vector.broadcast %cst_254 : f32 to vector<16x1xf32>
    %502 = arith.addf %498, %501 : vector<16x1xf32>
    %503 = math.rsqrt %502 : vector<16x1xf32>
    %504 = vector.broadcast %503 : vector<16x1xf32> to vector<16x16xf32>
    %505 = arith.mulf %500, %504 : vector<16x16xf32>
    %506 = vector.broadcast %485 : vector<1x16xf32> to vector<16x16xf32>
    %507 = arith.mulf %505, %506 : vector<16x16xf32>
    %508 = vector.broadcast %487 : vector<1x16xf32> to vector<16x16xf32>
    %509 = arith.addf %507, %508 : vector<16x16xf32>
    %c0_255 = arith.constant 0 : index
    %c0_256 = arith.constant 0 : index
    %510 = vector.load %arg16[%c0_255, %c0_256] : memref<16x16xf32, #tpu.memory_space<vmem>>, vector<16x16xf32>
    %cst_257 = arith.constant dense<0.000000e+00> : vector<16x16xf32>
    %511 = tpu.matmul %509, %510, %cst_257 {dimension_numbers = #tpu.dot_dimension_numbers<[1], [0], [0], [1], [0, 0, 1, 1], [], []>} : vector<16x16xf32>, vector<16x16xf32>, vector<16x16xf32> -> vector<16x16xf32>
    %c0_258 = arith.constant 0 : index
    %c0_259 = arith.constant 0 : index
    %512 = vector.load %arg17[%c0_258, %c0_259] : memref<1x16xf32, #tpu.memory_space<vmem>>, vector<1x16xf32>
    %513 = vector.broadcast %512 : vector<1x16xf32> to vector<16x16xf32>
    %514 = arith.addf %511, %513 : vector<16x16xf32>
    %cst_260 = arith.constant 0.000000e+00 : f32
    %515 = vector.broadcast %cst_260 : f32 to vector<16x16xf32>
    %516 = arith.maximumf %514, %515 : vector<16x16xf32>
    %c0_261 = arith.constant 0 : index
    %c0_262 = arith.constant 0 : index
    %517 = vector.load %arg18[%c0_261, %c0_262] : memref<1x16xf32, #tpu.memory_space<vmem>>, vector<1x16xf32>
    %518 = vector.broadcast %517 : vector<1x16xf32> to vector<16x16xf32>
    %519 = arith.mulf %516, %518 : vector<16x16xf32>
    %cst_263 = arith.constant dense<0.000000e+00> : vector<16xf32>
    %520 = vector.multi_reduction <add>, %519, %cst_263 [1] : vector<16x16xf32> to vector<16xf32>
    %521 = vector.shape_cast %520 : vector<16xf32> to vector<16x1xf32>
    %c0_264 = arith.constant 0 : index
    %c0_265 = arith.constant 0 : index
    %522 = vector.load %arg19[%c0_264, %c0_265] : memref<1x1xf32, #tpu.memory_space<vmem>>, vector<1x1xf32>
    %523 = vector.broadcast %522 : vector<1x1xf32> to vector<16x1xf32>
    %524 = arith.addf %521, %523 : vector<16x1xf32>
    %525 = vector.shape_cast %524 : vector<16x1xf32> to vector<2x8x1xf32>
    %cst_266 = arith.constant dense<0xFF800000> : vector<2x1xf32>
    %526 = vector.multi_reduction <maximumf>, %525, %cst_266 [1] : vector<2x8x1xf32> to vector<2x1xf32>
    %527 = vector.shape_cast %526 : vector<2x1xf32> to vector<2x1x1xf32>
    %528 = vector.broadcast %527 : vector<2x1x1xf32> to vector<2x8x1xf32>
    %529 = arith.subf %525, %528 : vector<2x8x1xf32>
    %530 = math.exp %529 : vector<2x8x1xf32>
    %cst_267 = arith.constant dense<0.000000e+00> : vector<2x1xf32>
    %531 = vector.multi_reduction <add>, %530, %cst_267 [1] : vector<2x8x1xf32> to vector<2x1xf32>
    %532 = vector.shape_cast %531 : vector<2x1xf32> to vector<2x1x1xf32>
    %533 = tpu.reciprocal %532 {approx = true} : vector<2x1x1xf32> -> vector<2x1x1xf32>
    %534 = vector.broadcast %533 : vector<2x1x1xf32> to vector<2x8x1xf32>
    %535 = arith.mulf %530, %534 : vector<2x8x1xf32>
    %536 = vector.shape_cast %509 : vector<16x16xf32> to vector<2x8x16xf32>
    %537 = vector.broadcast %535 : vector<2x8x1xf32> to vector<2x8x16xf32>
    %538 = arith.mulf %536, %537 : vector<2x8x16xf32>
    %cst_268 = arith.constant dense<0.000000e+00> : vector<2x16xf32>
    %539 = vector.multi_reduction <add>, %538, %cst_268 [1] : vector<2x8x16xf32> to vector<2x16xf32>
    %c0_269 = arith.constant 0 : index
    %c0_270 = arith.constant 0 : index
    %540 = vector.load %arg20[%c0_269, %c0_270] : memref<16x3xf32, #tpu.memory_space<vmem>>, vector<16x3xf32>
    %cst_271 = arith.constant dense<0.000000e+00> : vector<2x3xf32>
    %541 = tpu.matmul %539, %540, %cst_271 {dimension_numbers = #tpu.dot_dimension_numbers<[1], [0], [0], [1], [0, 0, 1, 1], [], []>} : vector<2x16xf32>, vector<16x3xf32>, vector<2x3xf32> -> vector<2x3xf32>
    %c0_272 = arith.constant 0 : index
    %c0_273 = arith.constant 0 : index
    %542 = vector.load %arg21[%c0_272, %c0_273] : memref<1x3xf32, #tpu.memory_space<vmem>>, vector<1x3xf32>
    %543 = vector.broadcast %542 : vector<1x3xf32> to vector<2x3xf32>
    %544 = arith.addf %541, %543 : vector<2x3xf32>
    %c0_274 = arith.constant 0 : index
    %c0_275 = arith.constant 0 : index
    %c0_276 = arith.constant 0 : index
    %545 = vector.load %arg22[%c0_274, %c0_275, %c0_276] : memref<1x2x3xf32, #tpu.memory_space<vmem>>, vector<1x2x3xf32>
    %546 = vector.shape_cast %545 : vector<1x2x3xf32> to vector<2x3xf32>
    %547 = vector.shape_cast %544 : vector<2x3xf32> to vector<1x2x3xf32>
    tpu.vector_store %arg22[%c0_274, %c0_275, %c0_276], %547 {strides = array<i32>} : memref<1x2x3xf32, #tpu.memory_space<vmem>>, vector<1x2x3xf32>,
    return
  }
  func.func @transform_0(%arg0: i32) -> (i32, i32, i32) {
    %c0_i32 = arith.constant 0 : i32
    %c0_i32_0 = arith.constant 0 : i32
    %c0_i32_1 = arith.constant 0 : i32
    return %arg0, %c0_i32, %c0_i32_0 : i32, i32, i32
  }
  func.func @transform_1(%arg0: i32) -> (i32, i32) {
    %c0_i32 = arith.constant 0 : i32
    %c0_i32_0 = arith.constant 0 : i32
    %c0_i32_1 = arith.constant 0 : i32
    return %c0_i32, %c0_i32_0 : i32, i32
  }
  func.func @transform_2(%arg0: i32) -> (i32, i32) {
    %c0_i32 = arith.constant 0 : i32
    %c0_i32_0 = arith.constant 0 : i32
    %c0_i32_1 = arith.constant 0 : i32
    return %c0_i32, %c0_i32_0 : i32, i32
  }
  func.func @transform_3(%arg0: i32) -> (i32, i32, i32) {
    %c0_i32 = arith.constant 0 : i32
    %c0_i32_0 = arith.constant 0 : i32
    %c0_i32_1 = arith.constant 0 : i32
    %c0_i32_2 = arith.constant 0 : i32
    return %c0_i32, %c0_i32_0, %c0_i32_1 : i32, i32, i32
  }
  func.func @transform_4(%arg0: i32) -> (i32, i32, i32) {
    %c0_i32 = arith.constant 0 : i32
    %c0_i32_0 = arith.constant 0 : i32
    %c0_i32_1 = arith.constant 0 : i32
    %c0_i32_2 = arith.constant 0 : i32
    return %c0_i32, %c0_i32_0, %c0_i32_1 : i32, i32, i32
  }
  func.func @transform_5(%arg0: i32) -> (i32, i32, i32, i32) {
    %c0_i32 = arith.constant 0 : i32
    %c0_i32_0 = arith.constant 0 : i32
    %c0_i32_1 = arith.constant 0 : i32
    %c0_i32_2 = arith.constant 0 : i32
    %c0_i32_3 = arith.constant 0 : i32
    return %c0_i32, %c0_i32_0, %c0_i32_1, %c0_i32_2 : i32, i32, i32, i32
  }
  func.func @transform_6(%arg0: i32) -> (i32, i32, i32) {
    %c0_i32 = arith.constant 0 : i32
    %c0_i32_0 = arith.constant 0 : i32
    %c0_i32_1 = arith.constant 0 : i32
    %c0_i32_2 = arith.constant 0 : i32
    return %c0_i32, %c0_i32_0, %c0_i32_1 : i32, i32, i32
  }
  func.func @transform_7(%arg0: i32) -> (i32, i32, i32) {
    %c0_i32 = arith.constant 0 : i32
    %c0_i32_0 = arith.constant 0 : i32
    %c0_i32_1 = arith.constant 0 : i32
    %c0_i32_2 = arith.constant 0 : i32
    return %c0_i32, %c0_i32_0, %c0_i32_1 : i32, i32, i32
  }
  func.func @transform_8(%arg0: i32) -> (i32, i32, i32) {
    %c0_i32 = arith.constant 0 : i32
    %c0_i32_0 = arith.constant 0 : i32
    %c0_i32_1 = arith.constant 0 : i32
    %c0_i32_2 = arith.constant 0 : i32
    return %c0_i32, %c0_i32_0, %c0_i32_1 : i32, i32, i32
  }
  func.func @transform_9(%arg0: i32) -> (i32, i32, i32) {
    %c0_i32 = arith.constant 0 : i32
    %c0_i32_0 = arith.constant 0 : i32
    %c0_i32_1 = arith.constant 0 : i32
    %c0_i32_2 = arith.constant 0 : i32
    return %c0_i32, %c0_i32_0, %c0_i32_1 : i32, i32, i32
  }
  func.func @transform_10(%arg0: i32) -> (i32, i32, i32) {
    %c0_i32 = arith.constant 0 : i32
    %c0_i32_0 = arith.constant 0 : i32
    %c0_i32_1 = arith.constant 0 : i32
    %c0_i32_2 = arith.constant 0 : i32
    return %c0_i32, %c0_i32_0, %c0_i32_1 : i32, i32, i32
  }
  func.func @transform_11(%arg0: i32) -> (i32, i32, i32) {
    %c0_i32 = arith.constant 0 : i32
    %c0_i32_0 = arith.constant 0 : i32
    %c0_i32_1 = arith.constant 0 : i32
    %c0_i32_2 = arith.constant 0 : i32
    return %c0_i32, %c0_i32_0, %c0_i32_1 : i32, i32, i32
  }
  func.func @transform_12(%arg0: i32) -> (i32, i32, i32) {
    %c0_i32 = arith.constant 0 : i32
    %c0_i32_0 = arith.constant 0 : i32
    %c0_i32_1 = arith.constant 0 : i32
    %c0_i32_2 = arith.constant 0 : i32
    return %c0_i32, %c0_i32_0, %c0_i32_1 : i32, i32, i32
  }
  func.func @transform_13(%arg0: i32) -> (i32, i32, i32) {
    %c0_i32 = arith.constant 0 : i32
    %c0_i32_0 = arith.constant 0 : i32
    %c0_i32_1 = arith.constant 0 : i32
    %c0_i32_2 = arith.constant 0 : i32
    return %c0_i32, %c0_i32_0, %c0_i32_1 : i32, i32, i32
  }
  func.func @transform_14(%arg0: i32) -> (i32, i32, i32) {
    %c0_i32 = arith.constant 0 : i32
    %c0_i32_0 = arith.constant 0 : i32
    %c0_i32_1 = arith.constant 0 : i32
    %c0_i32_2 = arith.constant 0 : i32
    return %c0_i32, %c0_i32_0, %c0_i32_1 : i32, i32, i32
  }
  func.func @transform_15(%arg0: i32) -> (i32, i32) {
    %c0_i32 = arith.constant 0 : i32
    %c0_i32_0 = arith.constant 0 : i32
    %c0_i32_1 = arith.constant 0 : i32
    return %c0_i32, %c0_i32_0 : i32, i32
  }
  func.func @transform_16(%arg0: i32) -> (i32, i32) {
    %c0_i32 = arith.constant 0 : i32
    %c0_i32_0 = arith.constant 0 : i32
    %c0_i32_1 = arith.constant 0 : i32
    return %c0_i32, %c0_i32_0 : i32, i32
  }
  func.func @transform_17(%arg0: i32) -> (i32, i32) {
    %c0_i32 = arith.constant 0 : i32
    %c0_i32_0 = arith.constant 0 : i32
    %c0_i32_1 = arith.constant 0 : i32
    return %c0_i32, %c0_i32_0 : i32, i32
  }
  func.func @transform_18(%arg0: i32) -> (i32, i32) {
    %c0_i32 = arith.constant 0 : i32
    %c0_i32_0 = arith.constant 0 : i32
    %c0_i32_1 = arith.constant 0 : i32
    return %c0_i32, %c0_i32_0 : i32, i32
  }
  func.func @transform_19(%arg0: i32) -> (i32, i32) {
    %c0_i32 = arith.constant 0 : i32
    %c0_i32_0 = arith.constant 0 : i32
    %c0_i32_1 = arith.constant 0 : i32
    return %c0_i32, %c0_i32_0 : i32, i32
  }
  func.func @transform_20(%arg0: i32) -> (i32, i32) {
    %c0_i32 = arith.constant 0 : i32
    %c0_i32_0 = arith.constant 0 : i32
    %c0_i32_1 = arith.constant 0 : i32
    return %c0_i32, %c0_i32_0 : i32, i32
  }
  func.func @transform_21(%arg0: i32) -> (i32, i32, i32) {
    %c0_i32 = arith.constant 0 : i32
    %c0_i32_0 = arith.constant 0 : i32
    %c0_i32_1 = arith.constant 0 : i32
    return %arg0, %c0_i32, %c0_i32_0 : i32, i32, i32
  }
}

</mosaic_0001>

<llo_original>
// kernel: tpu_custom_call.1
$region0: #{tpu_custom_call.1}
  #allocation0 [shape = 'u32[]', space=smem, size = 0x4, offset = 0x4, fixed_abs, tag = 'smem constant byte address 0x4 - core index']
  #allocation1 [shape = 'u32[72,128]{1,0:T(1,128)}', space=vmem, size = 0x9000, scoped, tag = 'internal scratch']
  #allocation2 [shape = 'f32[1,1]{1,0:T(1,128)S(1)}', space=vmem, size = 0x200, scoped, tag = 'scoped memory for tpu_custom_call.1']
  %s0 = inlined_call_operand.vmem [shape: f32[4,8,5], index: 0, kind: input, shape index: {}]
  %s1 = inlined_call_operand.hbm [shape: f32[5,16], index: 1, kind: input, shape index: {}]
  %s2 = inlined_call_operand.hbm [shape: f32[16,16], index: 2, kind: input, shape index: {}]
  %s3 = inlined_call_operand.vmem [shape: f32[3,16,48], index: 3, kind: input, shape index: {}]
  %s4 = inlined_call_operand.vmem [shape: f32[3,1,48], index: 4, kind: input, shape index: {}]
  %s5 = inlined_call_operand.hbm [shape: f32[3,4,4,16], index: 5, kind: input, shape index: {}]
  %s6 = inlined_call_operand.vmem [shape: f32[3,1,16], index: 6, kind: input, shape index: {}]
  %s7 = inlined_call_operand.hbm [shape: f32[3,1,16], index: 7, kind: input, shape index: {}]
  %s8 = inlined_call_operand.vmem [shape: f32[3,1,16], index: 8, kind: input, shape index: {}]
  %s9 = inlined_call_operand.hbm [shape: f32[3,16,16], index: 9, kind: input, shape index: {}]
  %s10 = inlined_call_operand.hbm [shape: f32[3,1,16], index: 10, kind: input, shape index: {}]
  %s11 = inlined_call_operand.hbm [shape: f32[3,16,16], index: 11, kind: input, shape index: {}]
  %s12 = inlined_call_operand.vmem [shape: f32[3,1,16], index: 12, kind: input, shape index: {}]
  %s13 = inlined_call_operand.hbm [shape: f32[3,1,16], index: 13, kind: input, shape index: {}]
  %s14 = inlined_call_operand.vmem [shape: f32[3,1,16], index: 14, kind: input, shape index: {}]
  %s15 = inlined_call_operand.hbm [shape: f32[16,16], index: 15, kind: input, shape index: {}]
  %s16 = inlined_call_operand.vmem [shape: f32[1,16], index: 16, kind: input, shape index: {}]
  %s17 = inlined_call_operand.vmem [shape: f32[1,16], index: 17, kind: input, shape index: {}]
  %s18 = inlined_call_operand.<no memory space> [shape: f32[1,1], index: 18, kind: input, shape index: {}]
  %s19 = inlined_call_operand.vmem [shape: f32[16,3], index: 19, kind: input, shape index: {}]
  %s20 = inlined_call_operand.vmem [shape: f32[1,3], index: 20, kind: input, shape index: {}]
  %s21 = inlined_call_operand.hbm [shape: f32[2,2,3], index: 21, kind: output, shape index: {}]
  %s22 = sld [smem:[#allocation0]]
  $region153: #{tpu_custom_call.1} parent=0
    _
  %s24 = ssub.s32 1, %s22
  %s25 = scalar_select 0, %s24, %s22
  %v26 = vstv %s18
  %27 = vst [vmem:[#allocation2] sm:$0x1] %v26
  $region1: #{tpu_custom_call.1} parent=0
    #allocation3 [shape = 'u8[4096]{0}', space=vmem, size = 0x1000, scoped, tag = 'input window, operand 1, single buffered']
    #allocation4 [shape = 's32[2]{0}', space=sflag, size = 0x8, scoped, tag = 'scoped memory for tpu_custom_call.1']
    #allocation5 [shape = 's32[2]{0}', space=sflag, size = 0x8, scoped, tag = 'scoped memory for tpu_custom_call.1']
    #allocation6 [shape = 'u8[8192]{0}', space=vmem, size = 0x2000, scoped, tag = 'input window, operand 2, single buffered']
    #allocation7 [shape = 's32[1]{0}', space=sflag, size = 0x4, scoped, tag = 'scoped memory for tpu_custom_call.1']
    #allocation8 [shape = 'u8[24576]{0}', space=vmem, size = 0x6000, scoped, tag = 'input window, operand 5, single buffered']
    #allocation9 [shape = 'u8[1536]{0}', space=vmem, size = 0x800, scoped, tag = 'input window, operand 7, single buffered']
    #allocation10 [shape = 's32[1]{0}', space=sflag, size = 0x4, scoped, tag = 'scoped memory for tpu_custom_call.1']
    #allocation11 [shape = 'u8[24576]{0}', space=vmem, size = 0x6000, scoped, tag = 'input window, operand 9, single buffered']
    #allocation12 [shape = 'u8[1536]{0}', space=vmem, size = 0x800, scoped, tag = 'input window, operand 10, single buffered']
    #allocation13 [shape = 's32[1]{0}', space=sflag, size = 0x4, scoped, tag = 'scoped memory for tpu_custom_call.1']
    #allocation14 [shape = 'u8[24576]{0}', space=vmem, size = 0x6000, scoped, tag = 'input window, operand 11, single buffered']
    #allocation15 [shape = 'u8[1536]{0}', space=vmem, size = 0x800, scoped, tag = 'input window, operand 13, single buffered']
    #allocation16 [shape = 's32[1]{0}', space=sflag, size = 0x4, scoped, tag = 'scoped memory for tpu_custom_call.1']
    #allocation17 [shape = 'u8[8192]{0}', space=vmem, size = 0x2000, scoped, tag = 'input window, operand 15, single buffered']
    #allocation18 [shape = 'u8[2048]{0}', space=vmem, size = 0x800, scoped, tag = 'output window, operand 0']
    %28 = vsyncpa [#allocation4], 0
    %29 = vsyncpa [#allocation7], 0
    %30 = vsyncpa [#allocation10], 0
    %31 = vsyncpa [#allocation13], 0
    %32 = vsyncpa [#allocation16], 0
    %33 = vsyncpa [#allocation5], 0
    %s34 = scalar_lea.sflag [#allocation5], 1
    %35 = vsyncpa %s34, 0
    loop: start=0, step=1, limit=4
    $region2: #{tpu_custom_call.1} parent=1 // loop_pre_header
      _
    $region3: #{tpu_custom_call.1} parent=1 // loop_header
      %s37 = sphi 0, %s41
      %p38 = scmp.ge.s32.totalorder %s37, 4
      %s47 = sphi 0, %s49
      %s50 = sphi 0, %s47
      %s51 = sphi 0, %s50
      %s67 = sphi 0, %s51
      %s71 = sphi 0, %s71
      %s73 = sphi 0, %s71
      %s74 = sphi 0, %s73
      %s88 = sphi 0, %s74
      %s92 = sphi 0, %s92
      %s94 = sphi 0, %s92
      %s95 = sphi 0, %s94
      %s109 = sphi 0, %s95
      %s113 = sphi 0, %s113
      %s115 = sphi 0, %s113
      %s116 = sphi 0, %s115
      %s130 = sphi 0, %s116
      %s134 = sphi 0, %s134
      %s136 = sphi 0, %s134
      %s137 = sphi 0, %s136
      %s151 = sphi 0, %s137
      %s155 = sphi 0, %s155
      %s157 = sphi 0, %s155
      %s158 = sphi 0, %s157
      %s172 = sphi 0, %s158
      %s176 = sphi 0, %s176
      %s178 = sphi 0, %s176
      %s179 = sphi 0, %s178
      %s193 = sphi 0, %s179
      %s197 = sphi 0, %s197
      %s199 = sphi 0, %s197
      %s200 = sphi 0, %s199
      %s214 = sphi 0, %s200
      %s218 = sphi 0, %s218
      %s220 = sphi 0, %s218
      %s221 = sphi 0, %s220
      %s235 = sphi 0, %s221
      %s239 = sphi 0, %s239
      %s241 = sphi 0, %s239
      %s242 = sphi 0, %s241
      %s256 = sphi 0, %s242
      %s260 = sphi 0, %s260
      %s262 = sphi 0, %s260
      %s263 = sphi 0, %s262
      %s277 = sphi 0, %s263
      %s281 = sphi 0, %s281
      %s283 = sphi 0, %s281
      %s284 = sphi 0, %s283
      %s298 = sphi 0, %s284
      %s302 = sphi 0, %s302
      %s304 = sphi 0, %s302
      %s305 = sphi 0, %s304
      %s319 = sphi 0, %s305
      %s323 = sphi 0, %s323
      %s325 = sphi 0, %s323
      %s326 = sphi 0, %s325
      %s340 = sphi 0, %s326
      %s344 = sphi 0, %s344
      %s346 = sphi 0, %s344
      %s347 = sphi 0, %s346
      %s361 = sphi 0, %s347
      %s365 = sphi 0, %s365
      %s367 = sphi 0, %s365
      %s368 = sphi 0, %s367
      %s382 = sphi 0, %s368
      %s386 = sphi 0, %s386
      %s388 = sphi 0, %s386
      %s389 = sphi 0, %s388
      %s403 = sphi 0, %s389
      %s407 = sphi 0, %s407
      %s409 = sphi 0, %s407
      %s410 = sphi 0, %s409
      %s424 = sphi 0, %s410
      %s428 = sphi 0, %s428
      %s430 = sphi 0, %s428
      %s431 = sphi 0, %s430
      %s445 = sphi 0, %s431
      %s449 = sphi 0, %s449
      %s451 = sphi 0, %s449
      %s452 = sphi 0, %s451
      %s466 = sphi 0, %s452
      %s470 = sphi 0, %s470
      %s472 = sphi 0, %s470
      %s473 = sphi 0, %s472
      %s487 = sphi 0, %s473
      %s493 = sphi 0, %s495
      %s496 = sphi 0, %s493
      %s497 = sphi 0, %s496
      %s513 = sphi 0, %s497
    $region4: #{tpu_custom_call.1} parent=1 // loop_header_branch
      %40 = sbr.rel (%p38) target = $region8
    $region5: #{tpu_custom_call.1} parent=1 // loop_body
      %s42 = ssub.s32 %s37, 1
      %s43 = ssub.s32 %s37, 2
      %s44 = sadd.s32 %s37, 1
      %s45 = ssub.s32 %s37, %s44
      %p46 = scmp.eq.s32.totalorder %s45, 0
      %s48 = sadd.s32 %s47, 1
      %s49 = scalar_select %p46, %s47, %s48
      %p52 = pneg %p46
      %p53 = scmp.eq.s32.totalorder %s37, 1
      %p54 = por %p52, %p53
      %p55 = scmp.ne.s32.totalorder %s47, %s50
      %p56 = scmp.eq.s32.totalorder %s37, 0
      %p57 = por %p55, %p56
      %p58 = scmp.ne.s32.totalorder %s47, %s50
      %p59 = scmp.eq.s32.totalorder %s42, 1
      %p60 = por %p58, %p59
      %p61 = scmp.ne.s32.totalorder %s50, %s51
      %p62 = scmp.eq.s32.totalorder %s42, 0
      %p63 = por %p61, %p62
      %p64 = scmp.ne.s32.totalorder %s50, %s51
      %p65 = scmp.eq.s32.totalorder %s43, 1
      %p66 = por %p64, %p65
      %p68 = scmp.ne.s32.totalorder %s51, %s67
      %p69 = scmp.eq.s32.totalorder %s43, 0
      %p70 = por %p68, %p69
      %s72 = sadd.s32 %s71, 1
      %p75 = scmp.eq.s32.totalorder %s37, 1
      %p76 = scmp.ne.s32.totalorder %s71, %s73
      %p77 = scmp.eq.s32.totalorder %s37, 0
      %p78 = por %p76, %p77
      %p79 = scmp.ne.s32.totalorder %s71, %s73
      %p80 = scmp.eq.s32.totalorder %s42, 1
      %p81 = por %p79, %p80
      %p82 = scmp.ne.s32.totalorder %s73, %s74
      %p83 = scmp.eq.s32.totalorder %s42, 0
      %p84 = por %p82, %p83
      %p85 = scmp.ne.s32.totalorder %s73, %s74
      %p86 = scmp.eq.s32.totalorder %s43, 1
      %p87 = por %p85, %p86
      %p89 = scmp.ne.s32.totalorder %s74, %s88
      %p90 = scmp.eq.s32.totalorder %s43, 0
      %p91 = por %p89, %p90
      %s93 = sadd.s32 %s92, 1
      %p96 = scmp.eq.s32.totalorder %s37, 1
      %p97 = scmp.ne.s32.totalorder %s92, %s94
      %p98 = scmp.eq.s32.totalorder %s37, 0
      %p99 = por %p97, %p98
      %p100 = scmp.ne.s32.totalorder %s92, %s94
      %p101 = scmp.eq.s32.totalorder %s42, 1
      %p102 = por %p100, %p101
      %p103 = scmp.ne.s32.totalorder %s94, %s95
      %p104 = scmp.eq.s32.totalorder %s42, 0
      %p105 = por %p103, %p104
      %p106 = scmp.ne.s32.totalorder %s94, %s95
      %p107 = scmp.eq.s32.totalorder %s43, 1
      %p108 = por %p106, %p107
      %p110 = scmp.ne.s32.totalorder %s95, %s109
      %p111 = scmp.eq.s32.totalorder %s43, 0
      %p112 = por %p110, %p111
      %s114 = sadd.s32 %s113, 1
      %p117 = scmp.eq.s32.totalorder %s37, 1
      %p118 = scmp.ne.s32.totalorder %s113, %s115
      %p119 = scmp.eq.s32.totalorder %s37, 0
      %p120 = por %p118, %p119
      %p121 = scmp.ne.s32.totalorder %s113, %s115
      %p122 = scmp.eq.s32.totalorder %s42, 1
      %p123 = por %p121, %p122
      %p124 = scmp.ne.s32.totalorder %s115, %s116
      %p125 = scmp.eq.s32.totalorder %s42, 0
      %p126 = por %p124, %p125
      %p127 = scmp.ne.s32.totalorder %s115, %s116
      %p128 = scmp.eq.s32.totalorder %s43, 1
      %p129 = por %p127, %p128
      %p131 = scmp.ne.s32.totalorder %s116, %s130
      %p132 = scmp.eq.s32.totalorder %s43, 0
      %p133 = por %p131, %p132
      %s135 = sadd.s32 %s134, 1
      %p138 = scmp.eq.s32.totalorder %s37, 1
      %p139 = scmp.ne.s32.totalorder %s134, %s136
      %p140 = scmp.eq.s32.totalorder %s37, 0
      %p141 = por %p139, %p140
      %p142 = scmp.ne.s32.totalorder %s134, %s136
      %p143 = scmp.eq.s32.totalorder %s42, 1
      %p144 = por %p142, %p143
      %p145 = scmp.ne.s32.totalorder %s136, %s137
      %p146 = scmp.eq.s32.totalorder %s42, 0
      %p147 = por %p145, %p146
      %p148 = scmp.ne.s32.totalorder %s136, %s137
      %p149 = scmp.eq.s32.totalorder %s43, 1
      %p150 = por %p148, %p149
      %p152 = scmp.ne.s32.totalorder %s137, %s151
      %p153 = scmp.eq.s32.totalorder %s43, 0
      %p154 = por %p152, %p153
      %s156 = sadd.s32 %s155, 1
      %p159 = scmp.eq.s32.totalorder %s37, 1
      %p160 = scmp.ne.s32.totalorder %s155, %s157
      %p161 = scmp.eq.s32.totalorder %s37, 0
      %p162 = por %p160, %p161
      %p163 = scmp.ne.s32.totalorder %s155, %s157
      %p164 = scmp.eq.s32.totalorder %s42, 1
      %p165 = por %p163, %p164
      %p166 = scmp.ne.s32.totalorder %s157, %s158
      %p167 = scmp.eq.s32.totalorder %s42, 0
      %p168 = por %p166, %p167
      %p169 = scmp.ne.s32.totalorder %s157, %s158
      %p170 = scmp.eq.s32.totalorder %s43, 1
      %p171 = por %p169, %p170
      %p173 = scmp.ne.s32.totalorder %s158, %s172
      %p174 = scmp.eq.s32.totalorder %s43, 0
      %p175 = por %p173, %p174
      %s177 = sadd.s32 %s176, 1
      %p180 = scmp.eq.s32.totalorder %s37, 1
      %p181 = scmp.ne.s32.totalorder %s176, %s178
      %p182 = scmp.eq.s32.totalorder %s37, 0
      %p183 = por %p181, %p182
      %p184 = scmp.ne.s32.totalorder %s176, %s178
      %p185 = scmp.eq.s32.totalorder %s42, 1
      %p186 = por %p184, %p185
      %p187 = scmp.ne.s32.totalorder %s178, %s179
      %p188 = scmp.eq.s32.totalorder %s42, 0
      %p189 = por %p187, %p188
      %p190 = scmp.ne.s32.totalorder %s178, %s179
      %p191 = scmp.eq.s32.totalorder %s43, 1
      %p192 = por %p190, %p191
      %p194 = scmp.ne.s32.totalorder %s179, %s193
      %p195 = scmp.eq.s32.totalorder %s43, 0
      %p196 = por %p194, %p195
      %s198 = sadd.s32 %s197, 1
      %p201 = scmp.eq.s32.totalorder %s37, 1
      %p202 = scmp.ne.s32.totalorder %s197, %s199
      %p203 = scmp.eq.s32.totalorder %s37, 0
      %p204 = por %p202, %p203
      %p205 = scmp.ne.s32.totalorder %s197, %s199
      %p206 = scmp.eq.s32.totalorder %s42, 1
      %p207 = por %p205, %p206
      %p208 = scmp.ne.s32.totalorder %s199, %s200
      %p209 = scmp.eq.s32.totalorder %s42, 0
      %p210 = por %p208, %p209
      %p211 = scmp.ne.s32.totalorder %s199, %s200
      %p212 = scmp.eq.s32.totalorder %s43, 1
      %p213 = por %p211, %p212
      %p215 = scmp.ne.s32.totalorder %s200, %s214
      %p216 = scmp.eq.s32.totalorder %s43, 0
      %p217 = por %p215, %p216
      %s219 = sadd.s32 %s218, 1
      %p222 = scmp.eq.s32.totalorder %s37, 1
      %p223 = scmp.ne.s32.totalorder %s218, %s220
      %p224 = scmp.eq.s32.totalorder %s37, 0
      %p225 = por %p223, %p224
      %p226 = scmp.ne.s32.totalorder %s218, %s220
      %p227 = scmp.eq.s32.totalorder %s42, 1
      %p228 = por %p226, %p227
      %p229 = scmp.ne.s32.totalorder %s220, %s221
      %p230 = scmp.eq.s32.totalorder %s42, 0
      %p231 = por %p229, %p230
      %p232 = scmp.ne.s32.totalorder %s220, %s221
      %p233 = scmp.eq.s32.totalorder %s43, 1
      %p234 = por %p232, %p233
      %p236 = scmp.ne.s32.totalorder %s221, %s235
      %p237 = scmp.eq.s32.totalorder %s43, 0
      %p238 = por %p236, %p237
      %s240 = sadd.s32 %s239, 1
      %p243 = scmp.eq.s32.totalorder %s37, 1
      %p244 = scmp.ne.s32.totalorder %s239, %s241
      %p245 = scmp.eq.s32.totalorder %s37, 0
      %p246 = por %p244, %p245
      %p247 = scmp.ne.s32.totalorder %s239, %s241
      %p248 = scmp.eq.s32.totalorder %s42, 1
      %p249 = por %p247, %p248
      %p250 = scmp.ne.s32.totalorder %s241, %s242
      %p251 = scmp.eq.s32.totalorder %s42, 0
      %p252 = por %p250, %p251
      %p253 = scmp.ne.s32.totalorder %s241, %s242
      %p254 = scmp.eq.s32.totalorder %s43, 1
      %p255 = por %p253, %p254
      %p257 = scmp.ne.s32.totalorder %s242, %s256
      %p258 = scmp.eq.s32.totalorder %s43, 0
      %p259 = por %p257, %p258
      %s261 = sadd.s32 %s260, 1
      %p264 = scmp.eq.s32.totalorder %s37, 1
      %p265 = scmp.ne.s32.totalorder %s260, %s262
      %p266 = scmp.eq.s32.totalorder %s37, 0
      %p267 = por %p265, %p266
      %p268 = scmp.ne.s32.totalorder %s260, %s262
      %p269 = scmp.eq.s32.totalorder %s42, 1
      %p270 = por %p268, %p269
      %p271 = scmp.ne.s32.totalorder %s262, %s263
      %p272 = scmp.eq.s32.totalorder %s42, 0
      %p273 = por %p271, %p272
      %p274 = scmp.ne.s32.totalorder %s262, %s263
      %p275 = scmp.eq.s32.totalorder %s43, 1
      %p276 = por %p274, %p275
      %p278 = scmp.ne.s32.totalorder %s263, %s277
      %p279 = scmp.eq.s32.totalorder %s43, 0
      %p280 = por %p278, %p279
      %s282 = sadd.s32 %s281, 1
      %p285 = scmp.eq.s32.totalorder %s37, 1
      %p286 = scmp.ne.s32.totalorder %s281, %s283
      %p287 = scmp.eq.s32.totalorder %s37, 0
      %p288 = por %p286, %p287
      %p289 = scmp.ne.s32.totalorder %s281, %s283
      %p290 = scmp.eq.s32.totalorder %s42, 1
      %p291 = por %p289, %p290
      %p292 = scmp.ne.s32.totalorder %s283, %s284
      %p293 = scmp.eq.s32.totalorder %s42, 0
      %p294 = por %p292, %p293
      %p295 = scmp.ne.s32.totalorder %s283, %s284
      %p296 = scmp.eq.s32.totalorder %s43, 1
      %p297 = por %p295, %p296
      %p299 = scmp.ne.s32.totalorder %s284, %s298
      %p300 = scmp.eq.s32.totalorder %s43, 0
      %p301 = por %p299, %p300
      %s303 = sadd.s32 %s302, 1
      %p306 = scmp.eq.s32.totalorder %s37, 1
      %p307 = scmp.ne.s32.totalorder %s302, %s304
      %p308 = scmp.eq.s32.totalorder %s37, 0
      %p309 = por %p307, %p308
      %p310 = scmp.ne.s32.totalorder %s302, %s304
      %p311 = scmp.eq.s32.totalorder %s42, 1
      %p312 = por %p310, %p311
      %p313 = scmp.ne.s32.totalorder %s304, %s305
      %p314 = scmp.eq.s32.totalorder %s42, 0
      %p315 = por %p313, %p314
      %p316 = scmp.ne.s32.totalorder %s304, %s305
      %p317 = scmp.eq.s32.totalorder %s43, 1
      %p318 = por %p316, %p317
      %p320 = scmp.ne.s32.totalorder %s305, %s319
      %p321 = scmp.eq.s32.totalorder %s43, 0
      %p322 = por %p320, %p321
      %s324 = sadd.s32 %s323, 1
      %p327 = scmp.eq.s32.totalorder %s37, 1
      %p328 = scmp.ne.s32.totalorder %s323, %s325
      %p329 = scmp.eq.s32.totalorder %s37, 0
      %p330 = por %p328, %p329
      %p331 = scmp.ne.s32.totalorder %s323, %s325
      %p332 = scmp.eq.s32.totalorder %s42, 1
      %p333 = por %p331, %p332
      %p334 = scmp.ne.s32.totalorder %s325, %s326
      %p335 = scmp.eq.s32.totalorder %s42, 0
      %p336 = por %p334, %p335
      %p337 = scmp.ne.s32.totalorder %s325, %s326
      %p338 = scmp.eq.s32.totalorder %s43, 1
      %p339 = por %p337, %p338
      %p341 = scmp.ne.s32.totalorder %s326, %s340
      %p342 = scmp.eq.s32.totalorder %s43, 0
      %p343 = por %p341, %p342
      %s345 = sadd.s32 %s344, 1
      %p348 = scmp.eq.s32.totalorder %s37, 1
      %p349 = scmp.ne.s32.totalorder %s344, %s346
      %p350 = scmp.eq.s32.totalorder %s37, 0
      %p351 = por %p349, %p350
      %p352 = scmp.ne.s32.totalorder %s344, %s346
      %p353 = scmp.eq.s32.totalorder %s42, 1
      %p354 = por %p352, %p353
      %p355 = scmp.ne.s32.totalorder %s346, %s347
      %p356 = scmp.eq.s32.totalorder %s42, 0
      %p357 = por %p355, %p356
      %p358 = scmp.ne.s32.totalorder %s346, %s347
      %p359 = scmp.eq.s32.totalorder %s43, 1
      %p360 = por %p358, %p359
      %p362 = scmp.ne.s32.totalorder %s347, %s361
      %p363 = scmp.eq.s32.totalorder %s43, 0
      %p364 = por %p362, %p363
      %s366 = sadd.s32 %s365, 1
      %p369 = scmp.eq.s32.totalorder %s37, 1
      %p370 = scmp.ne.s32.totalorder %s365, %s367
      %p371 = scmp.eq.s32.totalorder %s37, 0
      %p372 = por %p370, %p371
      %p373 = scmp.ne.s32.totalorder %s365, %s367
      %p374 = scmp.eq.s32.totalorder %s42, 1
      %p375 = por %p373, %p374
      %p376 = scmp.ne.s32.totalorder %s367, %s368
      %p377 = scmp.eq.s32.totalorder %s42, 0
      %p378 = por %p376, %p377
      %p379 = scmp.ne.s32.totalorder %s367, %s368
      %p380 = scmp.eq.s32.totalorder %s43, 1
      %p381 = por %p379, %p380
      %p383 = scmp.ne.s32.totalorder %s368, %s382
      %p384 = scmp.eq.s32.totalorder %s43, 0
      %p385 = por %p383, %p384
      %s387 = sadd.s32 %s386, 1
      %p390 = scmp.eq.s32.totalorder %s37, 1
      %p391 = scmp.ne.s32.totalorder %s386, %s388
      %p392 = scmp.eq.s32.totalorder %s37, 0
      %p393 = por %p391, %p392
      %p394 = scmp.ne.s32.totalorder %s386, %s388
      %p395 = scmp.eq.s32.totalorder %s42, 1
      %p396 = por %p394, %p395
      %p397 = scmp.ne.s32.totalorder %s388, %s389
      %p398 = scmp.eq.s32.totalorder %s42, 0
      %p399 = por %p397, %p398
      %p400 = scmp.ne.s32.totalorder %s388, %s389
      %p401 = scmp.eq.s32.totalorder %s43, 1
      %p402 = por %p400, %p401
      %p404 = scmp.ne.s32.totalorder %s389, %s403
      %p405 = scmp.eq.s32.totalorder %s43, 0
      %p406 = por %p404, %p405
      %s408 = sadd.s32 %s407, 1
      %p411 = scmp.eq.s32.totalorder %s37, 1
      %p412 = scmp.ne.s32.totalorder %s407, %s409
      %p413 = scmp.eq.s32.totalorder %s37, 0
      %p414 = por %p412, %p413
      %p415 = scmp.ne.s32.totalorder %s407, %s409
      %p416 = scmp.eq.s32.totalorder %s42, 1
      %p417 = por %p415, %p416
      %p418 = scmp.ne.s32.totalorder %s409, %s410
      %p419 = scmp.eq.s32.totalorder %s42, 0
      %p420 = por %p418, %p419
      %p421 = scmp.ne.s32.totalorder %s409, %s410
      %p422 = scmp.eq.s32.totalorder %s43, 1
      %p423 = por %p421, %p422
      %p425 = scmp.ne.s32.totalorder %s410, %s424
      %p426 = scmp.eq.s32.totalorder %s43, 0
      %p427 = por %p425, %p426
      %s429 = sadd.s32 %s428, 1
      %p432 = scmp.eq.s32.totalorder %s37, 1
      %p433 = scmp.ne.s32.totalorder %s428, %s430
      %p434 = scmp.eq.s32.totalorder %s37, 0
      %p435 = por %p433, %p434
      %p436 = scmp.ne.s32.totalorder %s428, %s430
      %p437 = scmp.eq.s32.totalorder %s42, 1
      %p438 = por %p436, %p437
      %p439 = scmp.ne.s32.totalorder %s430, %s431
      %p440 = scmp.eq.s32.totalorder %s42, 0
      %p441 = por %p439, %p440
      %p442 = scmp.ne.s32.totalorder %s430, %s431
      %p443 = scmp.eq.s32.totalorder %s43, 1
      %p444 = por %p442, %p443
      %p446 = scmp.ne.s32.totalorder %s431, %s445
      %p447 = scmp.eq.s32.totalorder %s43, 0
      %p448 = por %p446, %p447
      %s450 = sadd.s32 %s449, 1
      %p453 = scmp.eq.s32.totalorder %s37, 1
      %p454 = scmp.ne.s32.totalorder %s449, %s451
      %p455 = scmp.eq.s32.totalorder %s37, 0
      %p456 = por %p454, %p455
      %p457 = scmp.ne.s32.totalorder %s449, %s451
      %p458 = scmp.eq.s32.totalorder %s42, 1
      %p459 = por %p457, %p458
      %p460 = scmp.ne.s32.totalorder %s451, %s452
      %p461 = scmp.eq.s32.totalorder %s42, 0
      %p462 = por %p460, %p461
      %p463 = scmp.ne.s32.totalorder %s451, %s452
      %p464 = scmp.eq.s32.totalorder %s43, 1
      %p465 = por %p463, %p464
      %p467 = scmp.ne.s32.totalorder %s452, %s466
      %p468 = scmp.eq.s32.totalorder %s43, 0
      %p469 = por %p467, %p468
      %s471 = sadd.s32 %s470, 1
      %p474 = scmp.eq.s32.totalorder %s37, 1
      %p475 = scmp.ne.s32.totalorder %s470, %s472
      %p476 = scmp.eq.s32.totalorder %s37, 0
      %p477 = por %p475, %p476
      %p478 = scmp.ne.s32.totalorder %s470, %s472
      %p479 = scmp.eq.s32.totalorder %s42, 1
      %p480 = por %p478, %p479
      %p481 = scmp.ne.s32.totalorder %s472, %s473
      %p482 = scmp.eq.s32.totalorder %s42, 0
      %p483 = por %p481, %p482
      %p484 = scmp.ne.s32.totalorder %s472, %s473
      %p485 = scmp.eq.s32.totalorder %s43, 1
      %p486 = por %p484, %p485
      %p488 = scmp.ne.s32.totalorder %s473, %s487
      %p489 = scmp.eq.s32.totalorder %s43, 0
      %p490 = por %p488, %p489
      %s491 = ssub.s32 %s37, %s44
      %p492 = scmp.eq.s32.totalorder %s491, 0
      %s494 = sadd.s32 %s493, 1
      %s495 = scalar_select %p492, %s493, %s494
      %p498 = pneg %p492
      %p499 = scmp.eq.s32.totalorder %s37, 1
      %p500 = por %p498, %p499
      %p501 = scmp.ne.s32.totalorder %s493, %s496
      %p502 = scmp.eq.s32.totalorder %s37, 0
      %p503 = por %p501, %p502
      %p504 = scmp.ne.s32.totalorder %s493, %s496
      %p505 = scmp.eq.s32.totalorder %s42, 1
      %p506 = por %p504, %p505
      %p507 = scmp.ne.s32.totalorder %s496, %s497
      %p508 = scmp.eq.s32.totalorder %s42, 0
      %p509 = por %p507, %p508
      %p510 = scmp.ne.s32.totalorder %s496, %s497
      %p511 = scmp.eq.s32.totalorder %s43, 1
      %p512 = por %p510, %p511
      %p514 = scmp.ne.s32.totalorder %s497, %s513
      %p515 = scmp.eq.s32.totalorder %s43, 0
      %p516 = por %p514, %p515
      %p517 = scmp.le.s32.totalorder 1, %s37
      %p518 = scmp.lt.s32.totalorder %s37, 3
      %p519 = pnand %p517, %p518
      %p520 = pneg %p519
      // Predicated region
      $region9: #{tpu_custom_call.1} parent=5 // pred_check
        _
      $region10: #{tpu_custom_call.1} parent=5 // pred_check_branch
        %522 = sbr.rel (%p519) target = $region12
      $region11: #{tpu_custom_call.1} parent=5 // pred_region
        %s523 = ssub.s32 %s37, 1
        // Predicated region
        $region13: #{tpu_custom_call.1} parent=11 // pred_check
          %p524 = pneg %p84
        $region14: #{tpu_custom_call.1} parent=11 // pred_check_branch
          %526 = sbr.rel (%p524) target = $region16
        $region15: #{tpu_custom_call.1} parent=11 // pred_region
          %528 = vsyncadd [#allocation4], 0
          %s530 = sshll.u32 %s1, 4
          %s531 = int_to_ptr.hbm [resolvable:$true] %s530
          %s532 = sshll.u32 [#allocation3], 4
          %s533 = int_to_ptr.vmem [resolvable:$true] %s532
          %535 = dma.hbm_to_vmem [thread:$0]  %s531, 128, %s533, [#allocation4]
        $region16: #{tpu_custom_call.1} parent=11 // pred_fallthru
          _
        // Predicated region
        $region17: #{tpu_custom_call.1} parent=11 // pred_check
          %p536 = pneg %p105
        $region18: #{tpu_custom_call.1} parent=11 // pred_check_branch
          %538 = sbr.rel (%p536) target = $region20
        $region19: #{tpu_custom_call.1} parent=11 // pred_region
          %540 = vsyncadd [#allocation7], 0
          %s541 = sshll.u32 %s2, 4
          %s542 = int_to_ptr.hbm [resolvable:$true] %s541
          %s543 = sshll.u32 [#allocation6], 4
          %s544 = int_to_ptr.vmem [resolvable:$true] %s543
          %549 = dma.hbm_to_vmem [thread:$0]  %s542, 256, %s544, [#allocation7], 128, 128, 8
        $region20: #{tpu_custom_call.1} parent=11 // pred_fallthru
          _
        // Predicated region
        $region21: #{tpu_custom_call.1} parent=11 // pred_check
          %p550 = pneg %p126
        $region22: #{tpu_custom_call.1} parent=11 // pred_check_branch
          %552 = sbr.rel (%p550) target = $region24
        $region23: #{tpu_custom_call.1} parent=11 // pred_region
          _
        $region24: #{tpu_custom_call.1} parent=11 // pred_fallthru
          _
        // Predicated region
        $region25: #{tpu_custom_call.1} parent=11 // pred_check
          %p553 = pneg %p147
        $region26: #{tpu_custom_call.1} parent=11 // pred_check_branch
          %555 = sbr.rel (%p553) target = $region28
        $region27: #{tpu_custom_call.1} parent=11 // pred_region
          _
        $region28: #{tpu_custom_call.1} parent=11 // pred_fallthru
          _
        // Predicated region
        $region29: #{tpu_custom_call.1} parent=11 // pred_check
          %p556 = pneg %p168
        $region30: #{tpu_custom_call.1} parent=11 // pred_check_branch
          %558 = sbr.rel (%p556) target = $region32
        $region31: #{tpu_custom_call.1} parent=11 // pred_region
          %560 = vsyncadd [#allocation7], 0
          %s561 = sshll.u32 %s5, 4
          %s562 = int_to_ptr.hbm [resolvable:$true] %s561
          %s563 = sshll.u32 [#allocation8], 4
          %s564 = int_to_ptr.vmem [resolvable:$true] %s563
          %569 = dma.hbm_to_vmem [thread:$0]  %s562, 768, %s564, [#allocation7], 64, 64, 4
        $region32: #{tpu_custom_call.1} parent=11 // pred_fallthru
          _
        // Predicated region
        $region33: #{tpu_custom_call.1} parent=11 // pred_check
          %p570 = pneg %p189
        $region34: #{tpu_custom_call.1} parent=11 // pred_check_branch
          %572 = sbr.rel (%p570) target = $region36
        $region35: #{tpu_custom_call.1} parent=11 // pred_region
          _
        $region36: #{tpu_custom_call.1} parent=11 // pred_fallthru
          _
        // Predicated region
        $region37: #{tpu_custom_call.1} parent=11 // pred_check
          %p573 = pneg %p210
        $region38: #{tpu_custom_call.1} parent=11 // pred_check_branch
          %575 = sbr.rel (%p573) target = $region40
        $region39: #{tpu_custom_call.1} parent=11 // pred_region
          %577 = vsyncadd [#allocation10], 0
          %s578 = sshll.u32 %s7, 4
          %s579 = int_to_ptr.hbm [resolvable:$true] %s578
          %s580 = sshll.u32 [#allocation9], 4
          %s581 = int_to_ptr.vmem [resolvable:$true] %s580
          %586 = dma.hbm_to_vmem [thread:$0]  %s579, 48, %s581, [#allocation10], 16, 16, 1
        $region40: #{tpu_custom_call.1} parent=11 // pred_fallthru
          _
        // Predicated region
        $region41: #{tpu_custom_call.1} parent=11 // pred_check
          %p587 = pneg %p231
        $region42: #{tpu_custom_call.1} parent=11 // pred_check_branch
          %589 = sbr.rel (%p587) target = $region44
        $region43: #{tpu_custom_call.1} parent=11 // pred_region
          _
        $region44: #{tpu_custom_call.1} parent=11 // pred_fallthru
          _
        // Predicated region
        $region45: #{tpu_custom_call.1} parent=11 // pred_check
          %p590 = pneg %p252
        $region46: #{tpu_custom_call.1} parent=11 // pred_check_branch
          %592 = sbr.rel (%p590) target = $region48
        $region47: #{tpu_custom_call.1} parent=11 // pred_region
          %594 = vsyncadd [#allocation10], 0
          %s595 = sshll.u32 %s9, 4
          %s596 = int_to_ptr.hbm [resolvable:$true] %s595
          %s597 = sshll.u32 [#allocation11], 4
          %s598 = int_to_ptr.vmem [resolvable:$true] %s597
          %603 = dma.hbm_to_vmem [thread:$0]  %s596, 768, %s598, [#allocation10], 128, 128, 8
        $region48: #{tpu_custom_call.1} parent=11 // pred_fallthru
          _
        // Predicated region
        $region49: #{tpu_custom_call.1} parent=11 // pred_check
          %p604 = pneg %p273
        $region50: #{tpu_custom_call.1} parent=11 // pred_check_branch
          %606 = sbr.rel (%p604) target = $region52
        $region51: #{tpu_custom_call.1} parent=11 // pred_region
          %608 = vsyncadd [#allocation13], 0
          %s609 = sshll.u32 %s10, 4
          %s610 = int_to_ptr.hbm [resolvable:$true] %s609
          %s611 = sshll.u32 [#allocation12], 4
          %s612 = int_to_ptr.vmem [resolvable:$true] %s611
          %617 = dma.hbm_to_vmem [thread:$0]  %s610, 48, %s612, [#allocation13], 16, 16, 1
        $region52: #{tpu_custom_call.1} parent=11 // pred_fallthru
          _
        // Predicated region
        $region53: #{tpu_custom_call.1} parent=11 // pred_check
          %p618 = pneg %p294
        $region54: #{tpu_custom_call.1} parent=11 // pred_check_branch
          %620 = sbr.rel (%p618) target = $region56
        $region55: #{tpu_custom_call.1} parent=11 // pred_region
          %622 = vsyncadd [#allocation13], 0
          %s623 = sshll.u32 %s11, 4
          %s624 = int_to_ptr.hbm [resolvable:$true] %s623
          %s625 = sshll.u32 [#allocation14], 4
          %s626 = int_to_ptr.vmem [resolvable:$true] %s625
          %631 = dma.hbm_to_vmem [thread:$0]  %s624, 768, %s626, [#allocation13], 128, 128, 8
        $region56: #{tpu_custom_call.1} parent=11 // pred_fallthru
          _
        // Predicated region
        $region57: #{tpu_custom_call.1} parent=11 // pred_check
          %p632 = pneg %p315
        $region58: #{tpu_custom_call.1} parent=11 // pred_check_branch
          %634 = sbr.rel (%p632) target = $region60
        $region59: #{tpu_custom_call.1} parent=11 // pred_region
          _
        $region60: #{tpu_custom_call.1} parent=11 // pred_fallthru
          _
        // Predicated region
        $region61: #{tpu_custom_call.1} parent=11 // pred_check
          %p635 = pneg %p336
        $region62: #{tpu_custom_call.1} parent=11 // pred_check_branch
          %637 = sbr.rel (%p635) target = $region64
        $region63: #{tpu_custom_call.1} parent=11 // pred_region
          %639 = vsyncadd [#allocation16], 0
          %s640 = sshll.u32 %s13, 4
          %s641 = int_to_ptr.hbm [resolvable:$true] %s640
          %s642 = sshll.u32 [#allocation15], 4
          %s643 = int_to_ptr.vmem [resolvable:$true] %s642
          %648 = dma.hbm_to_vmem [thread:$0]  %s641, 48, %s643, [#allocation16], 16, 16, 1
        $region64: #{tpu_custom_call.1} parent=11 // pred_fallthru
          _
        // Predicated region
        $region65: #{tpu_custom_call.1} parent=11 // pred_check
          %p649 = pneg %p357
        $region66: #{tpu_custom_call.1} parent=11 // pred_check_branch
          %651 = sbr.rel (%p649) target = $region68
        $region67: #{tpu_custom_call.1} parent=11 // pred_region
          _
        $region68: #{tpu_custom_call.1} parent=11 // pred_fallthru
          _
        // Predicated region
        $region69: #{tpu_custom_call.1} parent=11 // pred_check
          %p652 = pneg %p378
        $region70: #{tpu_custom_call.1} parent=11 // pred_check_branch
          %654 = sbr.rel (%p652) target = $region72
        $region71: #{tpu_custom_call.1} parent=11 // pred_region
          %656 = vsyncadd [#allocation16], 0
          %s657 = sshll.u32 %s15, 4
          %s658 = int_to_ptr.hbm [resolvable:$true] %s657
          %s659 = sshll.u32 [#allocation17], 4
          %s660 = int_to_ptr.vmem [resolvable:$true] %s659
          %665 = dma.hbm_to_vmem [thread:$0]  %s658, 256, %s660, [#allocation16], 128, 128, 8
        $region72: #{tpu_custom_call.1} parent=11 // pred_fallthru
          _
        // Predicated region
        $region73: #{tpu_custom_call.1} parent=11 // pred_check
          %p666 = pneg %p399
        $region74: #{tpu_custom_call.1} parent=11 // pred_check_branch
          %668 = sbr.rel (%p666) target = $region76
        $region75: #{tpu_custom_call.1} parent=11 // pred_region
          _
        $region76: #{tpu_custom_call.1} parent=11 // pred_fallthru
          _
        // Predicated region
        $region77: #{tpu_custom_call.1} parent=11 // pred_check
          %p669 = pneg %p420
        $region78: #{tpu_custom_call.1} parent=11 // pred_check_branch
          %671 = sbr.rel (%p669) target = $region80
        $region79: #{tpu_custom_call.1} parent=11 // pred_region
          _
        $region80: #{tpu_custom_call.1} parent=11 // pred_fallthru
          _
        // Predicated region
        $region81: #{tpu_custom_call.1} parent=11 // pred_check
          %p672 = pneg %p441
        $region82: #{tpu_custom_call.1} parent=11 // pred_check_branch
          %674 = sbr.rel (%p672) target = $region84
        $region83: #{tpu_custom_call.1} parent=11 // pred_region
          _
        $region84: #{tpu_custom_call.1} parent=11 // pred_fallthru
          _
        // Predicated region
        $region85: #{tpu_custom_call.1} parent=11 // pred_check
          %p675 = pneg %p462
        $region86: #{tpu_custom_call.1} parent=11 // pred_check_branch
          %677 = sbr.rel (%p675) target = $region88
        $region87: #{tpu_custom_call.1} parent=11 // pred_region
          _
        $region88: #{tpu_custom_call.1} parent=11 // pred_fallthru
          _
        // Predicated region
        $region89: #{tpu_custom_call.1} parent=11 // pred_check
          %p678 = pneg %p483
        $region90: #{tpu_custom_call.1} parent=11 // pred_check_branch
          %680 = sbr.rel (%p678) target = $region92
        $region91: #{tpu_custom_call.1} parent=11 // pred_region
          _
        $region92: #{tpu_custom_call.1} parent=11 // pred_fallthru
          _
      $region12: #{tpu_custom_call.1} parent=5 // pred_fallthru
        _
      %p681 = scmp.lt.s32.totalorder %s37, 2
      // Predicated region
      $region93: #{tpu_custom_call.1} parent=5 // pred_check
        %p682 = pneg %p681
      $region94: #{tpu_custom_call.1} parent=5 // pred_check_branch
        %684 = sbr.rel (%p682) target = $region96
      $region95: #{tpu_custom_call.1} parent=5 // pred_region
        // Predicated region
        $region97: #{tpu_custom_call.1} parent=95 // pred_check
          %p685 = pneg %p57
        $region98: #{tpu_custom_call.1} parent=95 // pred_check_branch
          %687 = sbr.rel (%p685) target = $region100
        $region99: #{tpu_custom_call.1} parent=95 // pred_region
          %s688 = smul.u32 2, %s37
          %p689 = scmp.lt.s32.totalorder %s688, 3
          %s690 = scalar_select %p689, %s688, 3
          %s691 = smul.addr %s690, 8
          %s692 = scalar_lea.vmem %s0, %s691
          %s693 = smul.u32 2, %s37
        $region100: #{tpu_custom_call.1} parent=95 // pred_fallthru
          _
      $region96: #{tpu_custom_call.1} parent=5 // pred_fallthru
        _
      %p694 = scmp.le.s32.totalorder 1, %s37
      %p695 = scmp.lt.s32.totalorder %s37, 3
      %p696 = pnand %p694, %p695
      %p697 = pneg %p696
      // Predicated region
      $region101: #{tpu_custom_call.1} parent=5 // pred_check
        _
      $region102: #{tpu_custom_call.1} parent=5 // pred_check_branch
        %699 = sbr.rel (%p696) target = $region104
      $region103: #{tpu_custom_call.1} parent=5 // pred_region
        %s700 = ssub.s32 %s37, 1
        // Predicated region
        $region105: #{tpu_custom_call.1} parent=103 // pred_check
          %p701 = pneg %p84
        $region106: #{tpu_custom_call.1} parent=103 // pred_check_branch
          %703 = sbr.rel (%p701) target = $region108
        $region107: #{tpu_custom_call.1} parent=103 // pred_region
          %705 = dma.done [#allocation4], 128
        $region108: #{tpu_custom_call.1} parent=103 // pred_fallthru
          _
        // Predicated region
        $region109: #{tpu_custom_call.1} parent=103 // pred_check
          %p706 = pneg %p105
        $region110: #{tpu_custom_call.1} parent=103 // pred_check_branch
          %708 = sbr.rel (%p706) target = $region112
        $region111: #{tpu_custom_call.1} parent=103 // pred_region
          %710 = dma.done [#allocation7], 256
        $region112: #{tpu_custom_call.1} parent=103 // pred_fallthru
          _
        // Predicated region
        $region113: #{tpu_custom_call.1} parent=103 // pred_check
          %p711 = pneg %p168
        $region114: #{tpu_custom_call.1} parent=103 // pred_check_branch
          %713 = sbr.rel (%p711) target = $region116
        $region115: #{tpu_custom_call.1} parent=103 // pred_region
          %715 = dma.done [#allocation7], 768
        $region116: #{tpu_custom_call.1} parent=103 // pred_fallthru
          _
        // Predicated region
        $region117: #{tpu_custom_call.1} parent=103 // pred_check
          %p716 = pneg %p210
        $region118: #{tpu_custom_call.1} parent=103 // pred_check_branch
          %718 = sbr.rel (%p716) target = $region120
        $region119: #{tpu_custom_call.1} parent=103 // pred_region
          %720 = dma.done [#allocation10], 48
        $region120: #{tpu_custom_call.1} parent=103 // pred_fallthru
          _
        // Predicated region
        $region121: #{tpu_custom_call.1} parent=103 // pred_check
          %p721 = pneg %p252
        $region122: #{tpu_custom_call.1} parent=103 // pred_check_branch
          %723 = sbr.rel (%p721) target = $region124
        $region123: #{tpu_custom_call.1} parent=103 // pred_region
          %725 = dma.done [#allocation10], 768
        $region124: #{tpu_custom_call.1} parent=103 // pred_fallthru
          _
        // Predicated region
        $region125: #{tpu_custom_call.1} parent=103 // pred_check
          %p726 = pneg %p273
        $region126: #{tpu_custom_call.1} parent=103 // pred_check_branch
          %728 = sbr.rel (%p726) target = $region128
        $region127: #{tpu_custom_call.1} parent=103 // pred_region
          %730 = dma.done [#allocation13], 48
        $region128: #{tpu_custom_call.1} parent=103 // pred_fallthru
          _
        // Predicated region
        $region129: #{tpu_custom_call.1} parent=103 // pred_check
          %p731 = pneg %p294
        $region130: #{tpu_custom_call.1} parent=103 // pred_check_branch
          %733 = sbr.rel (%p731) target = $region132
        $region131: #{tpu_custom_call.1} parent=103 // pred_region
          %735 = dma.done [#allocation13], 768
        $region132: #{tpu_custom_call.1} parent=103 // pred_fallthru
          _
        // Predicated region
        $region133: #{tpu_custom_call.1} parent=103 // pred_check
          %p736 = pneg %p336
        $region134: #{tpu_custom_call.1} parent=103 // pred_check_branch
          %738 = sbr.rel (%p736) target = $region136
        $region135: #{tpu_custom_call.1} parent=103 // pred_region
          %740 = dma.done [#allocation16], 48
        $region136: #{tpu_custom_call.1} parent=103 // pred_fallthru
          _
        // Predicated region
        $region137: #{tpu_custom_call.1} parent=103 // pred_check
          %p741 = pneg %p378
        $region138: #{tpu_custom_call.1} parent=103 // pred_check_branch
          %743 = sbr.rel (%p741) target = $region140
        $region139: #{tpu_custom_call.1} parent=103 // pred_region
          %745 = dma.done [#allocation16], 256
        $region140: #{tpu_custom_call.1} parent=103 // pred_fallthru
          _
        %s746 = smul.u32 2, %s42
        %p747 = scmp.lt.s32.totalorder %s746, 3
        %s748 = scalar_select %p747, %s746, 3
        %s749 = smul.addr %s748, 8
        %s750 = scalar_lea.vmem %s0, %s749
        %p751 = pneg %p63
        %p752 = pneg %p60
        %p753 = pneg %p84
        %p754 = pneg %p81
        %p755 = pneg %p105
        %p756 = pneg %p102
        %p757 = pneg %p126
        %p758 = pneg %p123
        %p759 = pneg %p147
        %p760 = pneg %p144
        %p761 = pneg %p168
        %p762 = pneg %p165
        %p763 = pneg %p189
        %p764 = pneg %p186
        %p765 = pneg %p210
        %p766 = pneg %p207
        %p767 = pneg %p231
        %p768 = pneg %p228
        %p769 = pneg %p252
        %p770 = pneg %p249
        %p771 = pneg %p273
        %p772 = pneg %p270
        %p773 = pneg %p294
        %p774 = pneg %p291
        %p775 = pneg %p315
        %p776 = pneg %p312
        %p777 = pneg %p336
        %p778 = pneg %p333
        %p779 = pneg %p357
        %p780 = pneg %p354
        %p781 = pneg %p378
        %p782 = pneg %p375
        %p783 = pneg %p399
        %p784 = pneg %p396
        %p785 = pneg %p420
        %p786 = pneg %p417
        %p787 = pneg %p441
        %p788 = pneg %p438
        %p789 = pneg %p462
        %p790 = pneg %p459
        %p791 = pneg %p483
        %p792 = pneg %p480
        %p793 = pneg %p509
        %p794 = pneg %p506
        %s795 = sand.u32 %s496, 1
        %s796 = scalar_lea.sflag [#allocation5], %s795
        %s797 = sand.u32 %s496, 1
        %s798 = smul.addr %s797, 2
        %s799 = scalar_lea.vmem [#allocation18], %s798
        %s800 = smul.u32 2, %s42
        %p801 = scmp.lt.s32.totalorder %s800, 3
        %s802 = scalar_select %p801, %s800, 3
        %s803 = smul.addr %s802, 8
        %s804 = scalar_lea.vmem %s0, %s803
        %s805 = smul.u32 2, %s42
        %v806 = vld [vmem:[%s804] sm:$0xff]
        %v807 = vld [vmem:[%s804 + $0x8] sm:$0xff]
        %v808 = vld [vmem:[#allocation3] sm:$0x1f]
        %v809 = vld [vmem:[#allocation6] sm:$0xff]
        %v810 = vld [vmem:[#allocation6 + $0x8] sm:$0xff]
        %vm811 = vcmask 39936
        %v813 = vsel %vm811, %v806, 0
        %v816 = vsel %vm811, %v807, 0
        %vm818 = vcmask 1044480
        %v820 = vsel %vm818, %v808, 0
        %822 = vmatpush.msra.mxu0 0.0
        %823 = vmatpush.msra.mxu0 0.0
        %824 = vmatpush.msra.mxu0 0.0
        %825 = vmatpush.msra.mxu0 0.0
        %826 = vmatpush.msra.mxu0 0.0
        %827 = vmatpush.msra.mxu0 0.0
        %828 = vmatpush.msra.mxu0 0.0
        %829 = vmatpush.msra.mxu0 0.0
        %830 = vmatpush.msra.mxu0 0.0
        %831 = vmatpush.msra.mxu0 0.0
        %832 = vmatpush.msra.mxu0 0.0
        %833 = vmatpush.msra.mxu0 0.0
        %834 = vmatpush.msra.mxu0 0.0
        %835 = vmatpush.msra.mxu0 0.0
        %836 = vmatpush.msra.mxu0 0.0
        %837 = vmatpush.msra.mxu0 %v820
        %838 = vmatmul.f32.gmra.mxu0 %v813
        %v839 = vpop.f32.mrf.mxu0
        %v840 = vadd.f32 %v809, %v839
        %841 = vmatmul.f32.gmra.mxu0 %v816
        %v842 = vpop.f32.mrf.mxu0
        %v843 = vadd.f32 %v810, %v842
        %844 = vdwg.mxu0
        %v845 = vld [vmem:[%s3] sm:$0xff]
        %v846 = vld [vmem:[%s3 + $0x8] sm:$0xff]
        %v847 = vld [vmem:[%s4] sm:$0x1]
        %v849 = vperm.slane %v847, 0
        %vm851 = vcmask 130048
        %v853 = vsel %vm851, %v840, 0
        %v856 = vsel %vm851, %v843, 0
        %858 = vmatpush.msra.mxu0 0.0
        %859 = vmatpush.msra.mxu0 0.0
        %860 = vmatpush.msra.mxu0 0.0
        %861 = vmatpush.msra.mxu0 0.0
        %862 = vmatpush.msra.mxu0 0.0
        %863 = vmatpush.msra.mxu0 0.0
        %864 = vmatpush.msra.mxu0 0.0
        %865 = vmatpush.msra.mxu0 0.0
        %866 = vmatpush.msra.mxu0 0.0
        %867 = vmatpush.msra.mxu0 0.0
        %868 = vmatpush.msra.mxu0 0.0
        %869 = vmatpush.msra.mxu0 0.0
        %870 = vmatpush.msra.mxu0 0.0
        %871 = vmatpush.msra.mxu0 0.0
        %872 = vmatpush.msra.mxu0 %v846
        %873 = vmatpush.msra.mxu0 %v845
        %874 = vmatmul.f32.gmra.mxu0 %v853
        %v875 = vpop.f32.mrf.mxu0
        %v876 = vadd.f32 %v849, %v875
        %877 = vmatmul.f32.gmra.mxu0 %v856
        %v878 = vpop.f32.mrf.mxu0
        %v879 = vadd.f32 %v849, %v878
        %880 = vdwg.mxu0
        %v881 = vmul.f32 %v876, 0.5
        %v882 = vmul.f32 %v879, 0.5
        %884 = vrot.lane.b32.xlu0 %v876, 112
        %v885 = vpop.permute.xlu0 %884
        %vm886 = vcmask 31744
        %v888 = vsel %vm886, %v881, 0
        %v890 = vsel %vm886, %v885, 0
        %892 = vmatpush.xpose.msra.mxu0 0.0
        %893 = vmatpush.xpose.msra.mxu0 0.0
        %894 = vmatpush.xpose.msra.mxu0 0.0
        %895 = vmatpush.xpose.msra.mxu0 0.0
        %896 = vmatpush.xpose.msra.mxu0 0.0
        %897 = vmatpush.xpose.msra.mxu0 0.0
        %898 = vmatpush.xpose.msra.mxu0 0.0
        %899 = vmatpush.xpose.msra.mxu0 0.0
        %900 = vmatpush.xpose.msra.mxu0 0.0
        %901 = vmatpush.xpose.msra.mxu0 0.0
        %902 = vmatpush.xpose.msra.mxu0 0.0
        %903 = vmatpush.xpose.msra.mxu0 0.0
        %904 = vmatpush.xpose.msra.mxu0 0.0
        %905 = vmatpush.xpose.msra.mxu0 0.0
        %906 = vmatpush.xpose.msra.mxu0 0.0
        %907 = vmatpush.xpose.msra.mxu0 %v890
        %908 = vmatmul.f32.gmra.mxu0 %v888
        %v909 = vpop.f32.mrf.mxu0
        %v910 = vadd.f32 0.0, %v909
        %911 = vdwg.mxu0
        %913 = vrot.lane.b32.xlu0 %v879, 112
        %v914 = vpop.permute.xlu0 %913
        %v916 = vsel %vm886, %v882, 0
        %v918 = vsel %vm886, %v914, 0
        %920 = vmatpush.xpose.msra.mxu0 0.0
        %921 = vmatpush.xpose.msra.mxu0 0.0
        %922 = vmatpush.xpose.msra.mxu0 0.0
        %923 = vmatpush.xpose.msra.mxu0 0.0
        %924 = vmatpush.xpose.msra.mxu0 0.0
        %925 = vmatpush.xpose.msra.mxu0 0.0
        %926 = vmatpush.xpose.msra.mxu0 0.0
        %927 = vmatpush.xpose.msra.mxu0 0.0
        %928 = vmatpush.xpose.msra.mxu0 0.0
        %929 = vmatpush.xpose.msra.mxu0 0.0
        %930 = vmatpush.xpose.msra.mxu0 0.0
        %931 = vmatpush.xpose.msra.mxu0 0.0
        %932 = vmatpush.xpose.msra.mxu0 0.0
        %933 = vmatpush.xpose.msra.mxu0 0.0
        %934 = vmatpush.xpose.msra.mxu0 0.0
        %935 = vmatpush.xpose.msra.mxu0 %v918
        %936 = vmatmul.f32.gmra.mxu0 %v916
        %v937 = vpop.f32.mrf.mxu0
        %v938 = vadd.f32 0.0, %v937
        %939 = vdwg.mxu0
        %vm940 = vcmask 64512
        %v941 = vsel %vm940, %v910, -inf
        %942 = vmax.xlane.f32.xlu0 %v941
        %v943 = vpop.xlane.xlu0 %942
        %v944 = vsel %vm940, %v938, -inf
        %945 = vmax.xlane.f32.xlu0 %v944
        %v946 = vpop.xlane.xlu0 %945
        %v947 = vsub.f32 %v910, %v943
        %v948 = vsub.f32 %v938, %v946
        %v949 = vmul.f32 %v947, 1.442695
        %v950 = vpow.pop %v949
        %v951 = vmul.f32 %v948, 1.442695
        %v952 = vpow.pop %v951
        %v953 = vsel %vm940, %v950, 0.0
        %954 = vadd.xlane.f32.xlu0 %v953
        %v955 = vpop.xlane.xlu0 %954
        %v956 = vsel %vm940, %v952, 0.0
        %957 = vadd.xlane.f32.xlu0 %v956
        %v958 = vpop.xlane.xlu0 %957
        %v959 = vrcp.pop %v955
        %v960 = vrcp.pop %v958
        %961 = vrot.lane.b32.xlu0 %v876, 96
        %v962 = vpop.permute.xlu0 %961
        %v965 = vsel %vm940, %v950, 0
        %967 = vmatpush.msra.mxu0 0.0
        %968 = vmatpush.msra.mxu0 0.0
        %969 = vmatpush.msra.mxu0 0.0
        %970 = vmatpush.msra.mxu0 0.0
        %971 = vmatpush.msra.mxu0 0.0
        %972 = vmatpush.msra.mxu0 0.0
        %973 = vmatpush.msra.mxu0 0.0
        %974 = vmatpush.msra.mxu0 0.0
        %975 = vmatpush.msra.mxu0 0.0
        %976 = vmatpush.msra.mxu0 0.0
        %977 = vmatpush.msra.mxu0 0.0
        %978 = vmatpush.msra.mxu0 0.0
        %979 = vmatpush.msra.mxu0 0.0
        %980 = vmatpush.msra.mxu0 0.0
        %981 = vmatpush.msra.mxu0 0.0
        %982 = vmatpush.msra.mxu0 %v962
        %983 = vmatmul.f32.gmra.mxu0 %v965
        %v984 = vpop.f32.mrf.mxu0
        %v985 = vadd.f32 0.0, %v984
        %986 = vdwg.mxu0
        %987 = vrot.lane.b32.xlu0 %v879, 96
        %v988 = vpop.permute.xlu0 %987
        %v991 = vsel %vm940, %v952, 0
        %993 = vmatpush.msra.mxu0 0.0
        %994 = vmatpush.msra.mxu0 0.0
        %995 = vmatpush.msra.mxu0 0.0
        %996 = vmatpush.msra.mxu0 0.0
        %997 = vmatpush.msra.mxu0 0.0
        %998 = vmatpush.msra.mxu0 0.0
        %999 = vmatpush.msra.mxu0 0.0
        %1000 = vmatpush.msra.mxu0 0.0
        %1001 = vmatpush.msra.mxu0 0.0
        %1002 = vmatpush.msra.mxu0 0.0
        %1003 = vmatpush.msra.mxu0 0.0
        %1004 = vmatpush.msra.mxu0 0.0
        %1005 = vmatpush.msra.mxu0 0.0
        %1006 = vmatpush.msra.mxu0 0.0
        %1007 = vmatpush.msra.mxu0 0.0
        %1008 = vmatpush.msra.mxu0 %v988
        %1009 = vmatmul.f32.gmra.mxu0 %v991
        %v1010 = vpop.f32.mrf.mxu0
        %v1011 = vadd.f32 0.0, %v1010
        %1012 = vdwg.mxu0
        %v1013 = vmul.f32 %v985, %v959
        %v1014 = vmul.f32 %v1011, %v960
        %v1015 = vld [vmem:[#allocation8] sm:$0xf]
        %1016 = vrot.lane.b32.xlu0 %v881, 124
        %v1017 = vpop.permute.xlu0 %1016
        %1018 = vrot.lane.b32.xlu0 %v876, 108
        %v1019 = vpop.permute.xlu0 %1018
        %v1020 = vsel %vm886, %v1017, 0
        %v1022 = vsel %vm886, %v1019, 0
        %1024 = vmatpush.xpose.msra.mxu0 0.0
        %1025 = vmatpush.xpose.msra.mxu0 0.0
        %1026 = vmatpush.xpose.msra.mxu0 0.0
        %1027 = vmatpush.xpose.msra.mxu0 0.0
        %1028 = vmatpush.xpose.msra.mxu0 0.0
        %1029 = vmatpush.xpose.msra.mxu0 0.0
        %1030 = vmatpush.xpose.msra.mxu0 0.0
        %1031 = vmatpush.xpose.msra.mxu0 0.0
        %1032 = vmatpush.xpose.msra.mxu0 0.0
        %1033 = vmatpush.xpose.msra.mxu0 0.0
        %1034 = vmatpush.xpose.msra.mxu0 0.0
        %1035 = vmatpush.xpose.msra.mxu0 0.0
        %1036 = vmatpush.xpose.msra.mxu0 0.0
        %1037 = vmatpush.xpose.msra.mxu0 0.0
        %1038 = vmatpush.xpose.msra.mxu0 0.0
        %1039 = vmatpush.xpose.msra.mxu0 %v1022
        %1040 = vmatmul.f32.gmra.mxu0 %v1020
        %v1041 = vpop.f32.mrf.mxu0
        %v1042 = vadd.f32 0.0, %v1041
        %1043 = vdwg.mxu0
        %1044 = vrot.lane.b32.xlu0 %v882, 124
        %v1045 = vpop.permute.xlu0 %1044
        %1046 = vrot.lane.b32.xlu0 %v879, 108
        %v1047 = vpop.permute.xlu0 %1046
        %v1048 = vsel %vm886, %v1045, 0
        %v1050 = vsel %vm886, %v1047, 0
        %1052 = vmatpush.xpose.msra.mxu0 0.0
        %1053 = vmatpush.xpose.msra.mxu0 0.0
        %1054 = vmatpush.xpose.msra.mxu0 0.0
        %1055 = vmatpush.xpose.msra.mxu0 0.0
        %1056 = vmatpush.xpose.msra.mxu0 0.0
        %1057 = vmatpush.xpose.msra.mxu0 0.0
        %1058 = vmatpush.xpose.msra.mxu0 0.0
        %1059 = vmatpush.xpose.msra.mxu0 0.0
        %1060 = vmatpush.xpose.msra.mxu0 0.0
        %1061 = vmatpush.xpose.msra.mxu0 0.0
        %1062 = vmatpush.xpose.msra.mxu0 0.0
        %1063 = vmatpush.xpose.msra.mxu0 0.0
        %1064 = vmatpush.xpose.msra.mxu0 0.0
        %1065 = vmatpush.xpose.msra.mxu0 0.0
        %1066 = vmatpush.xpose.msra.mxu0 0.0
        %1067 = vmatpush.xpose.msra.mxu0 %v1050
        %1068 = vmatmul.f32.gmra.mxu0 %v1048
        %v1069 = vpop.f32.mrf.mxu0
        %v1070 = vadd.f32 0.0, %v1069
        %1071 = vdwg.mxu0
        %v1072 = vsel %vm940, %v1042, -inf
        %1073 = vmax.xlane.f32.xlu0 %v1072
        %v1074 = vpop.xlane.xlu0 %1073
        %v1075 = vsel %vm940, %v1070, -inf
        %1076 = vmax.xlane.f32.xlu0 %v1075
        %v1077 = vpop.xlane.xlu0 %1076
        %v1078 = vsub.f32 %v1042, %v1074
        %v1079 = vsub.f32 %v1070, %v1077
        %v1080 = vmul.f32 %v1078, 1.442695
        %v1081 = vpow.pop %v1080
        %v1082 = vmul.f32 %v1079, 1.442695
        %v1083 = vpow.pop %v1082
        %v1084 = vsel %vm940, %v1081, 0.0
        %1085 = vadd.xlane.f32.xlu0 %v1084
        %v1086 = vpop.xlane.xlu0 %1085
        %v1087 = vsel %vm940, %v1083, 0.0
        %1088 = vadd.xlane.f32.xlu0 %v1087
        %v1089 = vpop.xlane.xlu0 %1088
        %v1090 = vrcp.pop %v1086
        %v1091 = vrcp.pop %v1089
        %1092 = vrot.lane.b32.xlu0 %v876, 92
        %v1093 = vpop.permute.xlu0 %1092
        %v1096 = vsel %vm940, %v1081, 0
        %1098 = vmatpush.msra.mxu0 0.0
        %1099 = vmatpush.msra.mxu0 0.0
        %1100 = vmatpush.msra.mxu0 0.0
        %1101 = vmatpush.msra.mxu0 0.0
        %1102 = vmatpush.msra.mxu0 0.0
        %1103 = vmatpush.msra.mxu0 0.0
        %1104 = vmatpush.msra.mxu0 0.0
        %1105 = vmatpush.msra.mxu0 0.0
        %1106 = vmatpush.msra.mxu0 0.0
        %1107 = vmatpush.msra.mxu0 0.0
        %1108 = vmatpush.msra.mxu0 0.0
        %1109 = vmatpush.msra.mxu0 0.0
        %1110 = vmatpush.msra.mxu0 0.0
        %1111 = vmatpush.msra.mxu0 0.0
        %1112 = vmatpush.msra.mxu0 0.0
        %1113 = vmatpush.msra.mxu0 %v1093
        %1114 = vmatmul.f32.gmra.mxu0 %v1096
        %v1115 = vpop.f32.mrf.mxu0
        %v1116 = vadd.f32 0.0, %v1115
        %1117 = vdwg.mxu0
        %1118 = vrot.lane.b32.xlu0 %v879, 92
        %v1119 = vpop.permute.xlu0 %1118
        %v1122 = vsel %vm940, %v1083, 0
        %1124 = vmatpush.msra.mxu0 0.0
        %1125 = vmatpush.msra.mxu0 0.0
        %1126 = vmatpush.msra.mxu0 0.0
        %1127 = vmatpush.msra.mxu0 0.0
        %1128 = vmatpush.msra.mxu0 0.0
        %1129 = vmatpush.msra.mxu0 0.0
        %1130 = vmatpush.msra.mxu0 0.0
        %1131 = vmatpush.msra.mxu0 0.0
        %1132 = vmatpush.msra.mxu0 0.0
        %1133 = vmatpush.msra.mxu0 0.0
        %1134 = vmatpush.msra.mxu0 0.0
        %1135 = vmatpush.msra.mxu0 0.0
        %1136 = vmatpush.msra.mxu0 0.0
        %1137 = vmatpush.msra.mxu0 0.0
        %1138 = vmatpush.msra.mxu0 0.0
        %1139 = vmatpush.msra.mxu0 %v1119
        %1140 = vmatmul.f32.gmra.mxu0 %v1122
        %v1141 = vpop.f32.mrf.mxu0
        %v1142 = vadd.f32 0.0, %v1141
        %1143 = vdwg.mxu0
        %v1144 = vmul.f32 %v1116, %v1090
        %v1145 = vmul.f32 %v1142, %v1091
        %s1146 = scalar_lea.vmem [#allocation8], 4
        %v1147 = vld [vmem:[%s1146] sm:$0xf]
        %v1149 = vsel %vm886, %v1144, 0
        %v1152 = vsel %vm886, %v1145, 0
        %vm1154 = vcmask 1043456
        %v1156 = vsel %vm1154, %v1147, 0
        %1158 = vmatpush.msra.mxu0 0.0
        %1159 = vmatpush.msra.mxu0 0.0
        %1160 = vmatpush.msra.mxu0 0.0
        %1161 = vmatpush.msra.mxu0 0.0
        %1162 = vmatpush.msra.mxu0 0.0
        %1163 = vmatpush.msra.mxu0 0.0
        %1164 = vmatpush.msra.mxu0 0.0
        %1165 = vmatpush.msra.mxu0 0.0
        %1166 = vmatpush.msra.mxu0 0.0
        %1167 = vmatpush.msra.mxu0 0.0
        %1168 = vmatpush.msra.mxu0 0.0
        %1169 = vmatpush.msra.mxu0 0.0
        %1170 = vmatpush.msra.mxu0 0.0
        %1171 = vmatpush.msra.mxu0 0.0
        %1172 = vmatpush.msra.mxu0 0.0
        %1173 = vmatpush.msra.mxu0 %v1156
        %1174 = vmatmul.f32.gmra.mxu0 %v1149
        %v1175 = vpop.f32.mrf.mxu0
        %v1176 = vadd.f32 0.0, %v1175
        %1177 = vmatmul.f32.gmra.mxu0 %v1152
        %v1178 = vpop.f32.mrf.mxu0
        %v1179 = vadd.f32 0.0, %v1178
        %1180 = vdwg.mxu0
        %v1182 = vsel %vm886, %v1013, 0
        %v1185 = vsel %vm886, %v1014, 0
        %v1188 = vsel %vm1154, %v1015, 0
        %1190 = vmatpush.msra.mxu0 0.0
        %1191 = vmatpush.msra.mxu0 0.0
        %1192 = vmatpush.msra.mxu0 0.0
        %1193 = vmatpush.msra.mxu0 0.0
        %1194 = vmatpush.msra.mxu0 0.0
        %1195 = vmatpush.msra.mxu0 0.0
        %1196 = vmatpush.msra.mxu0 0.0
        %1197 = vmatpush.msra.mxu0 0.0
        %1198 = vmatpush.msra.mxu0 0.0
        %1199 = vmatpush.msra.mxu0 0.0
        %1200 = vmatpush.msra.mxu0 0.0
        %1201 = vmatpush.msra.mxu0 0.0
        %1202 = vmatpush.msra.mxu0 0.0
        %1203 = vmatpush.msra.mxu0 0.0
        %1204 = vmatpush.msra.mxu0 0.0
        %1205 = vmatpush.msra.mxu0 %v1188
        %1206 = vmatmul.f32.gmra.mxu0 %v1182
        %v1207 = vpop.f32.mrf.mxu0
        %v1208 = vadd.f32 %v1176, %v1207
        %1209 = vmatmul.f32.gmra.mxu0 %v1185
        %v1210 = vpop.f32.mrf.mxu0
        %v1211 = vadd.f32 %v1179, %v1210
        %1212 = vdwg.mxu0
        %1213 = vrot.lane.b32.xlu0 %v881, 120
        %v1214 = vpop.permute.xlu0 %1213
        %1215 = vrot.lane.b32.xlu0 %v876, 104
        %v1216 = vpop.permute.xlu0 %1215
        %v1217 = vsel %vm886, %v1214, 0
        %v1219 = vsel %vm886, %v1216, 0
        %1221 = vmatpush.xpose.msra.mxu0 0.0
        %1222 = vmatpush.xpose.msra.mxu0 0.0
        %1223 = vmatpush.xpose.msra.mxu0 0.0
        %1224 = vmatpush.xpose.msra.mxu0 0.0
        %1225 = vmatpush.xpose.msra.mxu0 0.0
        %1226 = vmatpush.xpose.msra.mxu0 0.0
        %1227 = vmatpush.xpose.msra.mxu0 0.0
        %1228 = vmatpush.xpose.msra.mxu0 0.0
        %1229 = vmatpush.xpose.msra.mxu0 0.0
        %1230 = vmatpush.xpose.msra.mxu0 0.0
        %1231 = vmatpush.xpose.msra.mxu0 0.0
        %1232 = vmatpush.xpose.msra.mxu0 0.0
        %1233 = vmatpush.xpose.msra.mxu0 0.0
        %1234 = vmatpush.xpose.msra.mxu0 0.0
        %1235 = vmatpush.xpose.msra.mxu0 0.0
        %1236 = vmatpush.xpose.msra.mxu0 %v1219
        %1237 = vmatmul.f32.gmra.mxu0 %v1217
        %v1238 = vpop.f32.mrf.mxu0
        %v1239 = vadd.f32 0.0, %v1238
        %1240 = vdwg.mxu0
        %1241 = vrot.lane.b32.xlu0 %v882, 120
        %v1242 = vpop.permute.xlu0 %1241
        %1243 = vrot.lane.b32.xlu0 %v879, 104
        %v1244 = vpop.permute.xlu0 %1243
        %v1245 = vsel %vm886, %v1242, 0
        %v1247 = vsel %vm886, %v1244, 0
        %1249 = vmatpush.xpose.msra.mxu0 0.0
        %1250 = vmatpush.xpose.msra.mxu0 0.0
        %1251 = vmatpush.xpose.msra.mxu0 0.0
        %1252 = vmatpush.xpose.msra.mxu0 0.0
        %1253 = vmatpush.xpose.msra.mxu0 0.0
        %1254 = vmatpush.xpose.msra.mxu0 0.0
        %1255 = vmatpush.xpose.msra.mxu0 0.0
        %1256 = vmatpush.xpose.msra.mxu0 0.0
        %1257 = vmatpush.xpose.msra.mxu0 0.0
        %1258 = vmatpush.xpose.msra.mxu0 0.0
        %1259 = vmatpush.xpose.msra.mxu0 0.0
        %1260 = vmatpush.xpose.msra.mxu0 0.0
        %1261 = vmatpush.xpose.msra.mxu0 0.0
        %1262 = vmatpush.xpose.msra.mxu0 0.0
        %1263 = vmatpush.xpose.msra.mxu0 0.0
        %1264 = vmatpush.xpose.msra.mxu0 %v1247
        %1265 = vmatmul.f32.gmra.mxu0 %v1245
        %v1266 = vpop.f32.mrf.mxu0
        %v1267 = vadd.f32 0.0, %v1266
        %1268 = vdwg.mxu0
        %v1269 = vsel %vm940, %v1239, -inf
        %1270 = vmax.xlane.f32.xlu0 %v1269
        %v1271 = vpop.xlane.xlu0 %1270
        %v1272 = vsel %vm940, %v1267, -inf
        %1273 = vmax.xlane.f32.xlu0 %v1272
        %v1274 = vpop.xlane.xlu0 %1273
        %v1275 = vsub.f32 %v1239, %v1271
        %v1276 = vsub.f32 %v1267, %v1274
        %v1277 = vmul.f32 %v1275, 1.442695
        %v1278 = vpow.pop %v1277
        %v1279 = vmul.f32 %v1276, 1.442695
        %v1280 = vpow.pop %v1279
        %v1281 = vsel %vm940, %v1278, 0.0
        %1282 = vadd.xlane.f32.xlu0 %v1281
        %v1283 = vpop.xlane.xlu0 %1282
        %v1284 = vsel %vm940, %v1280, 0.0
        %1285 = vadd.xlane.f32.xlu0 %v1284
        %v1286 = vpop.xlane.xlu0 %1285
        %v1287 = vrcp.pop %v1283
        %v1288 = vrcp.pop %v1286
        %1289 = vrot.lane.b32.xlu0 %v876, 88
        %v1290 = vpop.permute.xlu0 %1289
        %v1293 = vsel %vm940, %v1278, 0
        %1295 = vmatpush.msra.mxu0 0.0
        %1296 = vmatpush.msra.mxu0 0.0
        %1297 = vmatpush.msra.mxu0 0.0
        %1298 = vmatpush.msra.mxu0 0.0
        %1299 = vmatpush.msra.mxu0 0.0
        %1300 = vmatpush.msra.mxu0 0.0
        %1301 = vmatpush.msra.mxu0 0.0
        %1302 = vmatpush.msra.mxu0 0.0
        %1303 = vmatpush.msra.mxu0 0.0
        %1304 = vmatpush.msra.mxu0 0.0
        %1305 = vmatpush.msra.mxu0 0.0
        %1306 = vmatpush.msra.mxu0 0.0
        %1307 = vmatpush.msra.mxu0 0.0
        %1308 = vmatpush.msra.mxu0 0.0
        %1309 = vmatpush.msra.mxu0 0.0
        %1310 = vmatpush.msra.mxu0 %v1290
        %1311 = vmatmul.f32.gmra.mxu0 %v1293
        %v1312 = vpop.f32.mrf.mxu0
        %v1313 = vadd.f32 0.0, %v1312
        %1314 = vdwg.mxu0
        %1315 = vrot.lane.b32.xlu0 %v879, 88
        %v1316 = vpop.permute.xlu0 %1315
        %v1319 = vsel %vm940, %v1280, 0
        %1321 = vmatpush.msra.mxu0 0.0
        %1322 = vmatpush.msra.mxu0 0.0
        %1323 = vmatpush.msra.mxu0 0.0
        %1324 = vmatpush.msra.mxu0 0.0
        %1325 = vmatpush.msra.mxu0 0.0
        %1326 = vmatpush.msra.mxu0 0.0
        %1327 = vmatpush.msra.mxu0 0.0
        %1328 = vmatpush.msra.mxu0 0.0
        %1329 = vmatpush.msra.mxu0 0.0
        %1330 = vmatpush.msra.mxu0 0.0
        %1331 = vmatpush.msra.mxu0 0.0
        %1332 = vmatpush.msra.mxu0 0.0
        %1333 = vmatpush.msra.mxu0 0.0
        %1334 = vmatpush.msra.mxu0 0.0
        %1335 = vmatpush.msra.mxu0 0.0
        %1336 = vmatpush.msra.mxu0 %v1316
        %1337 = vmatmul.f32.gmra.mxu0 %v1319
        %v1338 = vpop.f32.mrf.mxu0
        %v1339 = vadd.f32 0.0, %v1338
        %1340 = vdwg.mxu0
        %v1341 = vmul.f32 %v1313, %v1287
        %v1342 = vmul.f32 %v1339, %v1288
        %s1343 = scalar_lea.vmem [#allocation8], 8
        %v1344 = vld [vmem:[%s1343] sm:$0xf]
        %v1346 = vsel %vm886, %v1341, 0
        %v1349 = vsel %vm886, %v1342, 0
        %v1352 = vsel %vm1154, %v1344, 0
        %1354 = vmatpush.msra.mxu0 0.0
        %1355 = vmatpush.msra.mxu0 0.0
        %1356 = vmatpush.msra.mxu0 0.0
        %1357 = vmatpush.msra.mxu0 0.0
        %1358 = vmatpush.msra.mxu0 0.0
        %1359 = vmatpush.msra.mxu0 0.0
        %1360 = vmatpush.msra.mxu0 0.0
        %1361 = vmatpush.msra.mxu0 0.0
        %1362 = vmatpush.msra.mxu0 0.0
        %1363 = vmatpush.msra.mxu0 0.0
        %1364 = vmatpush.msra.mxu0 0.0
        %1365 = vmatpush.msra.mxu0 0.0
        %1366 = vmatpush.msra.mxu0 0.0
        %1367 = vmatpush.msra.mxu0 0.0
        %1368 = vmatpush.msra.mxu0 0.0
        %1369 = vmatpush.msra.mxu0 %v1352
        %1370 = vmatmul.f32.gmra.mxu0 %v1346
        %v1371 = vpop.f32.mrf.mxu0
        %v1372 = vadd.f32 0.0, %v1371
        %1373 = vmatmul.f32.gmra.mxu0 %v1349
        %v1374 = vpop.f32.mrf.mxu0
        %v1375 = vadd.f32 0.0, %v1374
        %1376 = vdwg.mxu0
        %v1377 = vadd.f32 %v1208, %v1372
        %v1378 = vadd.f32 %v1211, %v1375
        %1379 = vrot.lane.b32.xlu0 %v881, 116
        %v1380 = vpop.permute.xlu0 %1379
        %1381 = vrot.lane.b32.xlu0 %v876, 100
        %v1382 = vpop.permute.xlu0 %1381
        %v1383 = vsel %vm886, %v1380, 0
        %v1385 = vsel %vm886, %v1382, 0
        %1387 = vmatpush.xpose.msra.mxu0 0.0
        %1388 = vmatpush.xpose.msra.mxu0 0.0
        %1389 = vmatpush.xpose.msra.mxu0 0.0
        %1390 = vmatpush.xpose.msra.mxu0 0.0
        %1391 = vmatpush.xpose.msra.mxu0 0.0
        %1392 = vmatpush.xpose.msra.mxu0 0.0
        %1393 = vmatpush.xpose.msra.mxu0 0.0
        %1394 = vmatpush.xpose.msra.mxu0 0.0
        %1395 = vmatpush.xpose.msra.mxu0 0.0
        %1396 = vmatpush.xpose.msra.mxu0 0.0
        %1397 = vmatpush.xpose.msra.mxu0 0.0
        %1398 = vmatpush.xpose.msra.mxu0 0.0
        %1399 = vmatpush.xpose.msra.mxu0 0.0
        %1400 = vmatpush.xpose.msra.mxu0 0.0
        %1401 = vmatpush.xpose.msra.mxu0 0.0
        %1402 = vmatpush.xpose.msra.mxu0 %v1385
        %1403 = vmatmul.f32.gmra.mxu0 %v1383
        %v1404 = vpop.f32.mrf.mxu0
        %v1405 = vadd.f32 0.0, %v1404
        %1406 = vdwg.mxu0
        %1407 = vrot.lane.b32.xlu0 %v882, 116
        %v1408 = vpop.permute.xlu0 %1407
        %1409 = vrot.lane.b32.xlu0 %v879, 100
        %v1410 = vpop.permute.xlu0 %1409
        %v1411 = vsel %vm886, %v1408, 0
        %v1413 = vsel %vm886, %v1410, 0
        %1415 = vmatpush.xpose.msra.mxu0 0.0
        %1416 = vmatpush.xpose.msra.mxu0 0.0
        %1417 = vmatpush.xpose.msra.mxu0 0.0
        %1418 = vmatpush.xpose.msra.mxu0 0.0
        %1419 = vmatpush.xpose.msra.mxu0 0.0
        %1420 = vmatpush.xpose.msra.mxu0 0.0
        %1421 = vmatpush.xpose.msra.mxu0 0.0
        %1422 = vmatpush.xpose.msra.mxu0 0.0
        %1423 = vmatpush.xpose.msra.mxu0 0.0
        %1424 = vmatpush.xpose.msra.mxu0 0.0
        %1425 = vmatpush.xpose.msra.mxu0 0.0
        %1426 = vmatpush.xpose.msra.mxu0 0.0
        %1427 = vmatpush.xpose.msra.mxu0 0.0
        %1428 = vmatpush.xpose.msra.mxu0 0.0
        %1429 = vmatpush.xpose.msra.mxu0 0.0
        %1430 = vmatpush.xpose.msra.mxu0 %v1413
        %1431 = vmatmul.f32.gmra.mxu0 %v1411
        %v1432 = vpop.f32.mrf.mxu0
        %v1433 = vadd.f32 0.0, %v1432
        %1434 = vdwg.mxu0
        %v1435 = vsel %vm940, %v1405, -inf
        %1436 = vmax.xlane.f32.xlu0 %v1435
        %v1437 = vpop.xlane.xlu0 %1436
        %v1438 = vsel %vm940, %v1433, -inf
        %1439 = vmax.xlane.f32.xlu0 %v1438
        %v1440 = vpop.xlane.xlu0 %1439
        %v1441 = vsub.f32 %v1405, %v1437
        %v1442 = vsub.f32 %v1433, %v1440
        %v1443 = vmul.f32 %v1441, 1.442695
        %v1444 = vpow.pop %v1443
        %v1445 = vmul.f32 %v1442, 1.442695
        %v1446 = vpow.pop %v1445
        %v1447 = vsel %vm940, %v1444, 0.0
        %1448 = vadd.xlane.f32.xlu0 %v1447
        %v1449 = vpop.xlane.xlu0 %1448
        %v1450 = vsel %vm940, %v1446, 0.0
        %1451 = vadd.xlane.f32.xlu0 %v1450
        %v1452 = vpop.xlane.xlu0 %1451
        %v1453 = vrcp.pop %v1449
        %v1454 = vrcp.pop %v1452
        %1455 = vrot.lane.b32.xlu0 %v876, 84
        %v1456 = vpop.permute.xlu0 %1455
        %v1459 = vsel %vm940, %v1444, 0
        %1461 = vmatpush.msra.mxu0 0.0
        %1462 = vmatpush.msra.mxu0 0.0
        %1463 = vmatpush.msra.mxu0 0.0
        %1464 = vmatpush.msra.mxu0 0.0
        %1465 = vmatpush.msra.mxu0 0.0
        %1466 = vmatpush.msra.mxu0 0.0
        %1467 = vmatpush.msra.mxu0 0.0
        %1468 = vmatpush.msra.mxu0 0.0
        %1469 = vmatpush.msra.mxu0 0.0
        %1470 = vmatpush.msra.mxu0 0.0
        %1471 = vmatpush.msra.mxu0 0.0
        %1472 = vmatpush.msra.mxu0 0.0
        %1473 = vmatpush.msra.mxu0 0.0
        %1474 = vmatpush.msra.mxu0 0.0
        %1475 = vmatpush.msra.mxu0 0.0
        %1476 = vmatpush.msra.mxu0 %v1456
        %1477 = vmatmul.f32.gmra.mxu0 %v1459
        %v1478 = vpop.f32.mrf.mxu0
        %v1479 = vadd.f32 0.0, %v1478
        %1480 = vdwg.mxu0
        %1481 = vrot.lane.b32.xlu0 %v879, 84
        %v1482 = vpop.permute.xlu0 %1481
        %v1485 = vsel %vm940, %v1446, 0
        %1487 = vmatpush.msra.mxu0 0.0
        %1488 = vmatpush.msra.mxu0 0.0
        %1489 = vmatpush.msra.mxu0 0.0
        %1490 = vmatpush.msra.mxu0 0.0
        %1491 = vmatpush.msra.mxu0 0.0
        %1492 = vmatpush.msra.mxu0 0.0
        %1493 = vmatpush.msra.mxu0 0.0
        %1494 = vmatpush.msra.mxu0 0.0
        %1495 = vmatpush.msra.mxu0 0.0
        %1496 = vmatpush.msra.mxu0 0.0
        %1497 = vmatpush.msra.mxu0 0.0
        %1498 = vmatpush.msra.mxu0 0.0
        %1499 = vmatpush.msra.mxu0 0.0
        %1500 = vmatpush.msra.mxu0 0.0
        %1501 = vmatpush.msra.mxu0 0.0
        %1502 = vmatpush.msra.mxu0 %v1482
        %1503 = vmatmul.f32.gmra.mxu0 %v1485
        %v1504 = vpop.f32.mrf.mxu0
        %v1505 = vadd.f32 0.0, %v1504
        %1506 = vdwg.mxu0
        %v1507 = vmul.f32 %v1479, %v1453
        %v1508 = vmul.f32 %v1505, %v1454
        %s1509 = scalar_lea.vmem [#allocation8], 12
        %v1510 = vld [vmem:[%s1509] sm:$0xf]
        %v1512 = vsel %vm886, %v1507, 0
        %v1515 = vsel %vm886, %v1508, 0
        %v1518 = vsel %vm1154, %v1510, 0
        %1520 = vmatpush.msra.mxu0 0.0
        %1521 = vmatpush.msra.mxu0 0.0
        %1522 = vmatpush.msra.mxu0 0.0
        %1523 = vmatpush.msra.mxu0 0.0
        %1524 = vmatpush.msra.mxu0 0.0
        %1525 = vmatpush.msra.mxu0 0.0
        %1526 = vmatpush.msra.mxu0 0.0
        %1527 = vmatpush.msra.mxu0 0.0
        %1528 = vmatpush.msra.mxu0 0.0
        %1529 = vmatpush.msra.mxu0 0.0
        %1530 = vmatpush.msra.mxu0 0.0
        %1531 = vmatpush.msra.mxu0 0.0
        %1532 = vmatpush.msra.mxu0 0.0
        %1533 = vmatpush.msra.mxu0 0.0
        %1534 = vmatpush.msra.mxu0 0.0
        %1535 = vmatpush.msra.mxu0 %v1518
        %1536 = vmatmul.f32.gmra.mxu0 %v1512
        %v1537 = vpop.f32.mrf.mxu0
        %v1538 = vadd.f32 0.0, %v1537
        %1539 = vmatmul.f32.gmra.mxu0 %v1515
        %v1540 = vpop.f32.mrf.mxu0
        %v1541 = vadd.f32 0.0, %v1540
        %1542 = vdwg.mxu0
        %v1543 = vadd.f32 %v1377, %v1538
        %v1544 = vadd.f32 %v1378, %v1541
        %v1545 = vld [vmem:[%s6] sm:$0x1]
        %v1547 = vperm.slane %v1545, 0
        %v1549 = vadd.f32 %v1543, %v1547
        %v1550 = vadd.f32 %v1544, %v1547
        %v1551 = vadd.f32 %v840, %v1549
        %v1552 = vadd.f32 %v843, %v1550
        %v1553 = vld [vmem:[#allocation9] sm:$0x1]
        %v1554 = vld [vmem:[%s8] sm:$0x1]
        %v1555 = vsel %vm851, %v1551, 0.0
        %1556 = vadd.xlane.f32.xlu0 %v1555
        %v1557 = vpop.xlane.xlu0 %1556
        %v1558 = vsel %vm851, %v1552, 0.0
        %1559 = vadd.xlane.f32.xlu0 %v1558
        %v1560 = vpop.xlane.xlu0 %1559
        %v1561 = vrcp.pop 16.0
        %v1562 = vmul.f32 16.0, %v1561
        %v1563 = vsub.f32 1.0, %v1562
        %v1564 = vmul.f32 %v1561, %v1563
        %v1565 = vadd.f32 %v1561, %v1564
        %vm1566 = vweird.f32 %v1561
        %v1567 = vsel %vm1566, %v1561, %v1565
        %v1568 = vmul.f32 %v1557, %v1567
        %v1569 = vmul.f32 %v1560, %v1567
        %v1570 = vsub.f32 %v1551, %v1568
        %v1571 = vsub.f32 %v1552, %v1569
        %v1572 = vmul.f32 %v1570, %v1570
        %v1573 = vmul.f32 %v1571, %v1571
        %v1574 = vsel %vm851, %v1572, 0.0
        %1575 = vadd.xlane.f32.xlu0 %v1574
        %v1576 = vpop.xlane.xlu0 %1575
        %v1577 = vsel %vm851, %v1573, 0.0
        %1578 = vadd.xlane.f32.xlu0 %v1577
        %v1579 = vpop.xlane.xlu0 %1578
        %v1580 = vmul.f32 %v1576, %v1567
        %v1581 = vmul.f32 %v1579, %v1567
        %v1582 = vadd.f32 %v1580, 1e-05
        %v1583 = vadd.f32 %v1581, 1e-05
        %v1584 = vrsqrt.pop %v1582
        %v1585 = vmul.f32 %v1584, %v1582
        %v1586 = vmul.f32 %v1585, %v1584
        %v1587 = vmul.f32 0.5, %v1586
        %v1588 = vsub.f32 1.5, %v1587
        %v1589 = vmul.f32 %v1584, %v1588
        %vm1590 = vweird.f32 %v1582
        %vm1591 = vweird.f32 %v1584
        %vm1592 = vmor %vm1590, %vm1591
        %v1593 = vsel %vm1592, %v1584, %v1589
        %v1594 = vrsqrt.pop %v1583
        %v1595 = vmul.f32 %v1594, %v1583
        %v1596 = vmul.f32 %v1595, %v1594
        %v1597 = vmul.f32 0.5, %v1596
        %v1598 = vsub.f32 1.5, %v1597
        %v1599 = vmul.f32 %v1594, %v1598
        %vm1600 = vweird.f32 %v1583
        %vm1601 = vweird.f32 %v1594
        %vm1602 = vmor %vm1600, %vm1601
        %v1603 = vsel %vm1602, %v1594, %v1599
        %v1604 = vmul.f32 %v1570, %v1593
        %v1605 = vmul.f32 %v1571, %v1603
        %v1607 = vperm.slane %v1553, 0
        %v1609 = vmul.f32 %v1604, %v1607
        %v1610 = vmul.f32 %v1605, %v1607
        %v1612 = vperm.slane %v1554, 0
        %v1614 = vadd.f32 %v1609, %v1612
        %v1615 = vadd.f32 %v1610, %v1612
        %v1616 = vld [vmem:[#allocation11] sm:$0xff]
        %v1617 = vld [vmem:[#allocation11 + $0x8] sm:$0xff]
        %v1618 = vld [vmem:[#allocation12] sm:$0x1]
        %v1620 = vperm.slane %v1618, 0
        %v1623 = vsel %vm851, %v1614, 0
        %v1626 = vsel %vm851, %v1615, 0
        %1628 = vmatpush.msra.mxu0 0.0
        %1629 = vmatpush.msra.mxu0 0.0
        %1630 = vmatpush.msra.mxu0 0.0
        %1631 = vmatpush.msra.mxu0 0.0
        %1632 = vmatpush.msra.mxu0 0.0
        %1633 = vmatpush.msra.mxu0 0.0
        %1634 = vmatpush.msra.mxu0 0.0
        %1635 = vmatpush.msra.mxu0 0.0
        %1636 = vmatpush.msra.mxu0 0.0
        %1637 = vmatpush.msra.mxu0 0.0
        %1638 = vmatpush.msra.mxu0 0.0
        %1639 = vmatpush.msra.mxu0 0.0
        %1640 = vmatpush.msra.mxu0 0.0
        %1641 = vmatpush.msra.mxu0 0.0
        %1642 = vmatpush.msra.mxu0 %v1617
        %1643 = vmatpush.msra.mxu0 %v1616
        %1644 = vmatmul.f32.gmra.mxu0 %v1623
        %v1645 = vpop.f32.mrf.mxu0
        %v1646 = vadd.f32 %v1620, %v1645
        %1647 = vmatmul.f32.gmra.mxu0 %v1626
        %v1648 = vpop.f32.mrf.mxu0
        %v1649 = vadd.f32 %v1620, %v1648
        %1650 = vdwg.mxu0
        %v1651 = vmax.f32 %v1646, 0.0
        %v1652 = vmax.f32 %v1649, 0.0
        %v1653 = vld [vmem:[#allocation14] sm:$0xff]
        %v1654 = vld [vmem:[#allocation14 + $0x8] sm:$0xff]
        %v1655 = vld [vmem:[%s12] sm:$0x1]
        %v1657 = vperm.slane %v1655, 0
        %v1660 = vsel %vm851, %v1651, 0
        %v1663 = vsel %vm851, %v1652, 0
        %1665 = vmatpush.msra.mxu0 0.0
        %1666 = vmatpush.msra.mxu0 0.0
        %1667 = vmatpush.msra.mxu0 0.0
        %1668 = vmatpush.msra.mxu0 0.0
        %1669 = vmatpush.msra.mxu0 0.0
        %1670 = vmatpush.msra.mxu0 0.0
        %1671 = vmatpush.msra.mxu0 0.0
        %1672 = vmatpush.msra.mxu0 0.0
        %1673 = vmatpush.msra.mxu0 0.0
        %1674 = vmatpush.msra.mxu0 0.0
        %1675 = vmatpush.msra.mxu0 0.0
        %1676 = vmatpush.msra.mxu0 0.0
        %1677 = vmatpush.msra.mxu0 0.0
        %1678 = vmatpush.msra.mxu0 0.0
        %1679 = vmatpush.msra.mxu0 %v1654
        %1680 = vmatpush.msra.mxu0 %v1653
        %1681 = vmatmul.f32.gmra.mxu0 %v1660
        %v1682 = vpop.f32.mrf.mxu0
        %v1683 = vadd.f32 %v1657, %v1682
        %1684 = vmatmul.f32.gmra.mxu0 %v1663
        %v1685 = vpop.f32.mrf.mxu0
        %v1686 = vadd.f32 %v1657, %v1685
        %1687 = vdwg.mxu0
        %v1688 = vadd.f32 %v1614, %v1683
        %v1689 = vadd.f32 %v1615, %v1686
        %v1690 = vld [vmem:[#allocation15] sm:$0x1]
        %v1691 = vld [vmem:[%s14] sm:$0x1]
        %v1692 = vsel %vm851, %v1688, 0.0
        %1693 = vadd.xlane.f32.xlu0 %v1692
        %v1694 = vpop.xlane.xlu0 %1693
        %v1695 = vsel %vm851, %v1689, 0.0
        %1696 = vadd.xlane.f32.xlu0 %v1695
        %v1697 = vpop.xlane.xlu0 %1696
        %v1698 = vmul.f32 %v1694, %v1567
        %v1699 = vmul.f32 %v1697, %v1567
        %v1700 = vsub.f32 %v1688, %v1698
        %v1701 = vsub.f32 %v1689, %v1699
        %v1702 = vmul.f32 %v1700, %v1700
        %v1703 = vmul.f32 %v1701, %v1701
        %v1704 = vsel %vm851, %v1702, 0.0
        %1705 = vadd.xlane.f32.xlu0 %v1704
        %v1706 = vpop.xlane.xlu0 %1705
        %v1707 = vsel %vm851, %v1703, 0.0
        %1708 = vadd.xlane.f32.xlu0 %v1707
        %v1709 = vpop.xlane.xlu0 %1708
        %v1710 = vmul.f32 %v1706, %v1567
        %v1711 = vmul.f32 %v1709, %v1567
        %v1712 = vadd.f32 %v1710, 1e-05
        %v1713 = vadd.f32 %v1711, 1e-05
        %v1714 = vrsqrt.pop %v1712
        %v1715 = vmul.f32 %v1714, %v1712
        %v1716 = vmul.f32 %v1715, %v1714
        %v1717 = vmul.f32 0.5, %v1716
        %v1718 = vsub.f32 1.5, %v1717
        %v1719 = vmul.f32 %v1714, %v1718
        %vm1720 = vweird.f32 %v1712
        %vm1721 = vweird.f32 %v1714
        %vm1722 = vmor %vm1720, %vm1721
        %v1723 = vsel %vm1722, %v1714, %v1719
        %v1724 = vrsqrt.pop %v1713
        %v1725 = vmul.f32 %v1724, %v1713
        %v1726 = vmul.f32 %v1725, %v1724
        %v1727 = vmul.f32 0.5, %v1726
        %v1728 = vsub.f32 1.5, %v1727
        %v1729 = vmul.f32 %v1724, %v1728
        %vm1730 = vweird.f32 %v1713
        %vm1731 = vweird.f32 %v1724
        %vm1732 = vmor %vm1730, %vm1731
        %v1733 = vsel %vm1732, %v1724, %v1729
        %v1734 = vmul.f32 %v1700, %v1723
        %v1735 = vmul.f32 %v1701, %v1733
        %v1737 = vperm.slane %v1690, 0
        %v1739 = vmul.f32 %v1734, %v1737
        %v1740 = vmul.f32 %v1735, %v1737
        %v1742 = vperm.slane %v1691, 0
        %v1744 = vadd.f32 %v1739, %v1742
        %v1745 = vadd.f32 %v1740, %v1742
        %s1746 = scalar_lea.vmem %s3, 16
        %v1747 = vld [vmem:[%s1746] sm:$0xff]
        %v1748 = vld [vmem:[%s1746 + $0x8] sm:$0xff]
        %s1749 = scalar_lea.vmem %s4, 1
        %v1750 = vld [vmem:[%s1749] sm:$0x1]
        %v1752 = vperm.slane %v1750, 0
        %v1755 = vsel %vm851, %v1744, 0
        %v1758 = vsel %vm851, %v1745, 0
        %1760 = vmatpush.msra.mxu0 0.0
        %1761 = vmatpush.msra.mxu0 0.0
        %1762 = vmatpush.msra.mxu0 0.0
        %1763 = vmatpush.msra.mxu0 0.0
        %1764 = vmatpush.msra.mxu0 0.0
        %1765 = vmatpush.msra.mxu0 0.0
        %1766 = vmatpush.msra.mxu0 0.0
        %1767 = vmatpush.msra.mxu0 0.0
        %1768 = vmatpush.msra.mxu0 0.0
        %1769 = vmatpush.msra.mxu0 0.0
        %1770 = vmatpush.msra.mxu0 0.0
        %1771 = vmatpush.msra.mxu0 0.0
        %1772 = vmatpush.msra.mxu0 0.0
        %1773 = vmatpush.msra.mxu0 0.0
        %1774 = vmatpush.msra.mxu0 %v1748
        %1775 = vmatpush.msra.mxu0 %v1747
        %1776 = vmatmul.f32.gmra.mxu0 %v1755
        %v1777 = vpop.f32.mrf.mxu0
        %v1778 = vadd.f32 %v1752, %v1777
        %1779 = vmatmul.f32.gmra.mxu0 %v1758
        %v1780 = vpop.f32.mrf.mxu0
        %v1781 = vadd.f32 %v1752, %v1780
        %1782 = vdwg.mxu0
        %v1783 = vmul.f32 %v1778, 0.5
        %v1784 = vmul.f32 %v1781, 0.5
        %1786 = vrot.lane.b32.xlu0 %v1778, 112
        %v1787 = vpop.permute.xlu0 %1786
        %v1789 = vsel %vm886, %v1783, 0
        %v1791 = vsel %vm886, %v1787, 0
        %1793 = vmatpush.xpose.msra.mxu0 0.0
        %1794 = vmatpush.xpose.msra.mxu0 0.0
        %1795 = vmatpush.xpose.msra.mxu0 0.0
        %1796 = vmatpush.xpose.msra.mxu0 0.0
        %1797 = vmatpush.xpose.msra.mxu0 0.0
        %1798 = vmatpush.xpose.msra.mxu0 0.0
        %1799 = vmatpush.xpose.msra.mxu0 0.0
        %1800 = vmatpush.xpose.msra.mxu0 0.0
        %1801 = vmatpush.xpose.msra.mxu0 0.0
        %1802 = vmatpush.xpose.msra.mxu0 0.0
        %1803 = vmatpush.xpose.msra.mxu0 0.0
        %1804 = vmatpush.xpose.msra.mxu0 0.0
        %1805 = vmatpush.xpose.msra.mxu0 0.0
        %1806 = vmatpush.xpose.msra.mxu0 0.0
        %1807 = vmatpush.xpose.msra.mxu0 0.0
        %1808 = vmatpush.xpose.msra.mxu0 %v1791
        %1809 = vmatmul.f32.gmra.mxu0 %v1789
        %v1810 = vpop.f32.mrf.mxu0
        %v1811 = vadd.f32 0.0, %v1810
        %1812 = vdwg.mxu0
        %1814 = vrot.lane.b32.xlu0 %v1781, 112
        %v1815 = vpop.permute.xlu0 %1814
        %v1817 = vsel %vm886, %v1784, 0
        %v1819 = vsel %vm886, %v1815, 0
        %1821 = vmatpush.xpose.msra.mxu0 0.0
        %1822 = vmatpush.xpose.msra.mxu0 0.0
        %1823 = vmatpush.xpose.msra.mxu0 0.0
        %1824 = vmatpush.xpose.msra.mxu0 0.0
        %1825 = vmatpush.xpose.msra.mxu0 0.0
        %1826 = vmatpush.xpose.msra.mxu0 0.0
        %1827 = vmatpush.xpose.msra.mxu0 0.0
        %1828 = vmatpush.xpose.msra.mxu0 0.0
        %1829 = vmatpush.xpose.msra.mxu0 0.0
        %1830 = vmatpush.xpose.msra.mxu0 0.0
        %1831 = vmatpush.xpose.msra.mxu0 0.0
        %1832 = vmatpush.xpose.msra.mxu0 0.0
        %1833 = vmatpush.xpose.msra.mxu0 0.0
        %1834 = vmatpush.xpose.msra.mxu0 0.0
        %1835 = vmatpush.xpose.msra.mxu0 0.0
        %1836 = vmatpush.xpose.msra.mxu0 %v1819
        %1837 = vmatmul.f32.gmra.mxu0 %v1817
        %v1838 = vpop.f32.mrf.mxu0
        %v1839 = vadd.f32 0.0, %v1838
        %1840 = vdwg.mxu0
        %v1841 = vsel %vm940, %v1811, -inf
        %1842 = vmax.xlane.f32.xlu0 %v1841
        %v1843 = vpop.xlane.xlu0 %1842
        %v1844 = vsel %vm940, %v1839, -inf
        %1845 = vmax.xlane.f32.xlu0 %v1844
        %v1846 = vpop.xlane.xlu0 %1845
        %v1847 = vsub.f32 %v1811, %v1843
        %v1848 = vsub.f32 %v1839, %v1846
        %v1849 = vmul.f32 %v1847, 1.442695
        %v1850 = vpow.pop %v1849
        %v1851 = vmul.f32 %v1848, 1.442695
        %v1852 = vpow.pop %v1851
        %v1853 = vsel %vm940, %v1850, 0.0
        %1854 = vadd.xlane.f32.xlu0 %v1853
        %v1855 = vpop.xlane.xlu0 %1854
        %v1856 = vsel %vm940, %v1852, 0.0
        %1857 = vadd.xlane.f32.xlu0 %v1856
        %v1858 = vpop.xlane.xlu0 %1857
        %v1859 = vrcp.pop %v1855
        %v1860 = vrcp.pop %v1858
        %1861 = vrot.lane.b32.xlu0 %v1778, 96
        %v1862 = vpop.permute.xlu0 %1861
        %v1865 = vsel %vm940, %v1850, 0
        %1867 = vmatpush.msra.mxu0 0.0
        %1868 = vmatpush.msra.mxu0 0.0
        %1869 = vmatpush.msra.mxu0 0.0
        %1870 = vmatpush.msra.mxu0 0.0
        %1871 = vmatpush.msra.mxu0 0.0
        %1872 = vmatpush.msra.mxu0 0.0
        %1873 = vmatpush.msra.mxu0 0.0
        %1874 = vmatpush.msra.mxu0 0.0
        %1875 = vmatpush.msra.mxu0 0.0
        %1876 = vmatpush.msra.mxu0 0.0
        %1877 = vmatpush.msra.mxu0 0.0
        %1878 = vmatpush.msra.mxu0 0.0
        %1879 = vmatpush.msra.mxu0 0.0
        %1880 = vmatpush.msra.mxu0 0.0
        %1881 = vmatpush.msra.mxu0 0.0
        %1882 = vmatpush.msra.mxu0 %v1862
        %1883 = vmatmul.f32.gmra.mxu0 %v1865
        %v1884 = vpop.f32.mrf.mxu0
        %v1885 = vadd.f32 0.0, %v1884
        %1886 = vdwg.mxu0
        %1887 = vrot.lane.b32.xlu0 %v1781, 96
        %v1888 = vpop.permute.xlu0 %1887
        %v1891 = vsel %vm940, %v1852, 0
        %1893 = vmatpush.msra.mxu0 0.0
        %1894 = vmatpush.msra.mxu0 0.0
        %1895 = vmatpush.msra.mxu0 0.0
        %1896 = vmatpush.msra.mxu0 0.0
        %1897 = vmatpush.msra.mxu0 0.0
        %1898 = vmatpush.msra.mxu0 0.0
        %1899 = vmatpush.msra.mxu0 0.0
        %1900 = vmatpush.msra.mxu0 0.0
        %1901 = vmatpush.msra.mxu0 0.0
        %1902 = vmatpush.msra.mxu0 0.0
        %1903 = vmatpush.msra.mxu0 0.0
        %1904 = vmatpush.msra.mxu0 0.0
        %1905 = vmatpush.msra.mxu0 0.0
        %1906 = vmatpush.msra.mxu0 0.0
        %1907 = vmatpush.msra.mxu0 0.0
        %1908 = vmatpush.msra.mxu0 %v1888
        %1909 = vmatmul.f32.gmra.mxu0 %v1891
        %v1910 = vpop.f32.mrf.mxu0
        %v1911 = vadd.f32 0.0, %v1910
        %1912 = vdwg.mxu0
        %v1913 = vmul.f32 %v1885, %v1859
        %v1914 = vmul.f32 %v1911, %v1860
        %s1915 = scalar_lea.vmem [#allocation8], 16
        %v1916 = vld [vmem:[%s1915] sm:$0xf]
        %1917 = vrot.lane.b32.xlu0 %v1783, 124
        %v1918 = vpop.permute.xlu0 %1917
        %1919 = vrot.lane.b32.xlu0 %v1778, 108
        %v1920 = vpop.permute.xlu0 %1919
        %v1921 = vsel %vm886, %v1918, 0
        %v1923 = vsel %vm886, %v1920, 0
        %1925 = vmatpush.xpose.msra.mxu0 0.0
        %1926 = vmatpush.xpose.msra.mxu0 0.0
        %1927 = vmatpush.xpose.msra.mxu0 0.0
        %1928 = vmatpush.xpose.msra.mxu0 0.0
        %1929 = vmatpush.xpose.msra.mxu0 0.0
        %1930 = vmatpush.xpose.msra.mxu0 0.0
        %1931 = vmatpush.xpose.msra.mxu0 0.0
        %1932 = vmatpush.xpose.msra.mxu0 0.0
        %1933 = vmatpush.xpose.msra.mxu0 0.0
        %1934 = vmatpush.xpose.msra.mxu0 0.0
        %1935 = vmatpush.xpose.msra.mxu0 0.0
        %1936 = vmatpush.xpose.msra.mxu0 0.0
        %1937 = vmatpush.xpose.msra.mxu0 0.0
        %1938 = vmatpush.xpose.msra.mxu0 0.0
        %1939 = vmatpush.xpose.msra.mxu0 0.0
        %1940 = vmatpush.xpose.msra.mxu0 %v1923
        %1941 = vmatmul.f32.gmra.mxu0 %v1921
        %v1942 = vpop.f32.mrf.mxu0
        %v1943 = vadd.f32 0.0, %v1942
        %1944 = vdwg.mxu0
        %1945 = vrot.lane.b32.xlu0 %v1784, 124
        %v1946 = vpop.permute.xlu0 %1945
        %1947 = vrot.lane.b32.xlu0 %v1781, 108
        %v1948 = vpop.permute.xlu0 %1947
        %v1949 = vsel %vm886, %v1946, 0
        %v1951 = vsel %vm886, %v1948, 0
        %1953 = vmatpush.xpose.msra.mxu0 0.0
        %1954 = vmatpush.xpose.msra.mxu0 0.0
        %1955 = vmatpush.xpose.msra.mxu0 0.0
        %1956 = vmatpush.xpose.msra.mxu0 0.0
        %1957 = vmatpush.xpose.msra.mxu0 0.0
        %1958 = vmatpush.xpose.msra.mxu0 0.0
        %1959 = vmatpush.xpose.msra.mxu0 0.0
        %1960 = vmatpush.xpose.msra.mxu0 0.0
        %1961 = vmatpush.xpose.msra.mxu0 0.0
        %1962 = vmatpush.xpose.msra.mxu0 0.0
        %1963 = vmatpush.xpose.msra.mxu0 0.0
        %1964 = vmatpush.xpose.msra.mxu0 0.0
        %1965 = vmatpush.xpose.msra.mxu0 0.0
        %1966 = vmatpush.xpose.msra.mxu0 0.0
        %1967 = vmatpush.xpose.msra.mxu0 0.0
        %1968 = vmatpush.xpose.msra.mxu0 %v1951
        %1969 = vmatmul.f32.gmra.mxu0 %v1949
        %v1970 = vpop.f32.mrf.mxu0
        %v1971 = vadd.f32 0.0, %v1970
        %1972 = vdwg.mxu0
        %v1973 = vsel %vm940, %v1943, -inf
        %1974 = vmax.xlane.f32.xlu0 %v1973
        %v1975 = vpop.xlane.xlu0 %1974
        %v1976 = vsel %vm940, %v1971, -inf
        %1977 = vmax.xlane.f32.xlu0 %v1976
        %v1978 = vpop.xlane.xlu0 %1977
        %v1979 = vsub.f32 %v1943, %v1975
        %v1980 = vsub.f32 %v1971, %v1978
        %v1981 = vmul.f32 %v1979, 1.442695
        %v1982 = vpow.pop %v1981
        %v1983 = vmul.f32 %v1980, 1.442695
        %v1984 = vpow.pop %v1983
        %v1985 = vsel %vm940, %v1982, 0.0
        %1986 = vadd.xlane.f32.xlu0 %v1985
        %v1987 = vpop.xlane.xlu0 %1986
        %v1988 = vsel %vm940, %v1984, 0.0
        %1989 = vadd.xlane.f32.xlu0 %v1988
        %v1990 = vpop.xlane.xlu0 %1989
        %v1991 = vrcp.pop %v1987
        %v1992 = vrcp.pop %v1990
        %1993 = vrot.lane.b32.xlu0 %v1778, 92
        %v1994 = vpop.permute.xlu0 %1993
        %v1997 = vsel %vm940, %v1982, 0
        %1999 = vmatpush.msra.mxu0 0.0
        %2000 = vmatpush.msra.mxu0 0.0
        %2001 = vmatpush.msra.mxu0 0.0
        %2002 = vmatpush.msra.mxu0 0.0
        %2003 = vmatpush.msra.mxu0 0.0
        %2004 = vmatpush.msra.mxu0 0.0
        %2005 = vmatpush.msra.mxu0 0.0
        %2006 = vmatpush.msra.mxu0 0.0
        %2007 = vmatpush.msra.mxu0 0.0
        %2008 = vmatpush.msra.mxu0 0.0
        %2009 = vmatpush.msra.mxu0 0.0
        %2010 = vmatpush.msra.mxu0 0.0
        %2011 = vmatpush.msra.mxu0 0.0
        %2012 = vmatpush.msra.mxu0 0.0
        %2013 = vmatpush.msra.mxu0 0.0
        %2014 = vmatpush.msra.mxu0 %v1994
        %2015 = vmatmul.f32.gmra.mxu0 %v1997
        %v2016 = vpop.f32.mrf.mxu0
        %v2017 = vadd.f32 0.0, %v2016
        %2018 = vdwg.mxu0
        %2019 = vrot.lane.b32.xlu0 %v1781, 92
        %v2020 = vpop.permute.xlu0 %2019
        %v2023 = vsel %vm940, %v1984, 0
        %2025 = vmatpush.msra.mxu0 0.0
        %2026 = vmatpush.msra.mxu0 0.0
        %2027 = vmatpush.msra.mxu0 0.0
        %2028 = vmatpush.msra.mxu0 0.0
        %2029 = vmatpush.msra.mxu0 0.0
        %2030 = vmatpush.msra.mxu0 0.0
        %2031 = vmatpush.msra.mxu0 0.0
        %2032 = vmatpush.msra.mxu0 0.0
        %2033 = vmatpush.msra.mxu0 0.0
        %2034 = vmatpush.msra.mxu0 0.0
        %2035 = vmatpush.msra.mxu0 0.0
        %2036 = vmatpush.msra.mxu0 0.0
        %2037 = vmatpush.msra.mxu0 0.0
        %2038 = vmatpush.msra.mxu0 0.0
        %2039 = vmatpush.msra.mxu0 0.0
        %2040 = vmatpush.msra.mxu0 %v2020
        %2041 = vmatmul.f32.gmra.mxu0 %v2023
        %v2042 = vpop.f32.mrf.mxu0
        %v2043 = vadd.f32 0.0, %v2042
        %2044 = vdwg.mxu0
        %v2045 = vmul.f32 %v2017, %v1991
        %v2046 = vmul.f32 %v2043, %v1992
        %s2047 = scalar_lea.vmem [#allocation8], 20
        %v2048 = vld [vmem:[%s2047] sm:$0xf]
        %v2050 = vsel %vm886, %v2045, 0
        %v2053 = vsel %vm886, %v2046, 0
        %v2056 = vsel %vm1154, %v2048, 0
        %2058 = vmatpush.msra.mxu0 0.0
        %2059 = vmatpush.msra.mxu0 0.0
        %2060 = vmatpush.msra.mxu0 0.0
        %2061 = vmatpush.msra.mxu0 0.0
        %2062 = vmatpush.msra.mxu0 0.0
        %2063 = vmatpush.msra.mxu0 0.0
        %2064 = vmatpush.msra.mxu0 0.0
        %2065 = vmatpush.msra.mxu0 0.0
        %2066 = vmatpush.msra.mxu0 0.0
        %2067 = vmatpush.msra.mxu0 0.0
        %2068 = vmatpush.msra.mxu0 0.0
        %2069 = vmatpush.msra.mxu0 0.0
        %2070 = vmatpush.msra.mxu0 0.0
        %2071 = vmatpush.msra.mxu0 0.0
        %2072 = vmatpush.msra.mxu0 0.0
        %2073 = vmatpush.msra.mxu0 %v2056
        %2074 = vmatmul.f32.gmra.mxu0 %v2050
        %v2075 = vpop.f32.mrf.mxu0
        %v2076 = vadd.f32 0.0, %v2075
        %2077 = vmatmul.f32.gmra.mxu0 %v2053
        %v2078 = vpop.f32.mrf.mxu0
        %v2079 = vadd.f32 0.0, %v2078
        %2080 = vdwg.mxu0
        %v2082 = vsel %vm886, %v1913, 0
        %v2085 = vsel %vm886, %v1914, 0
        %v2088 = vsel %vm1154, %v1916, 0
        %2090 = vmatpush.msra.mxu0 0.0
        %2091 = vmatpush.msra.mxu0 0.0
        %2092 = vmatpush.msra.mxu0 0.0
        %2093 = vmatpush.msra.mxu0 0.0
        %2094 = vmatpush.msra.mxu0 0.0
        %2095 = vmatpush.msra.mxu0 0.0
        %2096 = vmatpush.msra.mxu0 0.0
        %2097 = vmatpush.msra.mxu0 0.0
        %2098 = vmatpush.msra.mxu0 0.0
        %2099 = vmatpush.msra.mxu0 0.0
        %2100 = vmatpush.msra.mxu0 0.0
        %2101 = vmatpush.msra.mxu0 0.0
        %2102 = vmatpush.msra.mxu0 0.0
        %2103 = vmatpush.msra.mxu0 0.0
        %2104 = vmatpush.msra.mxu0 0.0
        %2105 = vmatpush.msra.mxu0 %v2088
        %2106 = vmatmul.f32.gmra.mxu0 %v2082
        %v2107 = vpop.f32.mrf.mxu0
        %v2108 = vadd.f32 %v2076, %v2107
        %2109 = vmatmul.f32.gmra.mxu0 %v2085
        %v2110 = vpop.f32.mrf.mxu0
        %v2111 = vadd.f32 %v2079, %v2110
        %2112 = vdwg.mxu0
        %2113 = vrot.lane.b32.xlu0 %v1783, 120
        %v2114 = vpop.permute.xlu0 %2113
        %2115 = vrot.lane.b32.xlu0 %v1778, 104
        %v2116 = vpop.permute.xlu0 %2115
        %v2117 = vsel %vm886, %v2114, 0
        %v2119 = vsel %vm886, %v2116, 0
        %2121 = vmatpush.xpose.msra.mxu0 0.0
        %2122 = vmatpush.xpose.msra.mxu0 0.0
        %2123 = vmatpush.xpose.msra.mxu0 0.0
        %2124 = vmatpush.xpose.msra.mxu0 0.0
        %2125 = vmatpush.xpose.msra.mxu0 0.0
        %2126 = vmatpush.xpose.msra.mxu0 0.0
        %2127 = vmatpush.xpose.msra.mxu0 0.0
        %2128 = vmatpush.xpose.msra.mxu0 0.0
        %2129 = vmatpush.xpose.msra.mxu0 0.0
        %2130 = vmatpush.xpose.msra.mxu0 0.0
        %2131 = vmatpush.xpose.msra.mxu0 0.0
        %2132 = vmatpush.xpose.msra.mxu0 0.0
        %2133 = vmatpush.xpose.msra.mxu0 0.0
        %2134 = vmatpush.xpose.msra.mxu0 0.0
        %2135 = vmatpush.xpose.msra.mxu0 0.0
        %2136 = vmatpush.xpose.msra.mxu0 %v2119
        %2137 = vmatmul.f32.gmra.mxu0 %v2117
        %v2138 = vpop.f32.mrf.mxu0
        %v2139 = vadd.f32 0.0, %v2138
        %2140 = vdwg.mxu0
        %2141 = vrot.lane.b32.xlu0 %v1784, 120
        %v2142 = vpop.permute.xlu0 %2141
        %2143 = vrot.lane.b32.xlu0 %v1781, 104
        %v2144 = vpop.permute.xlu0 %2143
        %v2145 = vsel %vm886, %v2142, 0
        %v2147 = vsel %vm886, %v2144, 0
        %2149 = vmatpush.xpose.msra.mxu0 0.0
        %2150 = vmatpush.xpose.msra.mxu0 0.0
        %2151 = vmatpush.xpose.msra.mxu0 0.0
        %2152 = vmatpush.xpose.msra.mxu0 0.0
        %2153 = vmatpush.xpose.msra.mxu0 0.0
        %2154 = vmatpush.xpose.msra.mxu0 0.0
        %2155 = vmatpush.xpose.msra.mxu0 0.0
        %2156 = vmatpush.xpose.msra.mxu0 0.0
        %2157 = vmatpush.xpose.msra.mxu0 0.0
        %2158 = vmatpush.xpose.msra.mxu0 0.0
        %2159 = vmatpush.xpose.msra.mxu0 0.0
        %2160 = vmatpush.xpose.msra.mxu0 0.0
        %2161 = vmatpush.xpose.msra.mxu0 0.0
        %2162 = vmatpush.xpose.msra.mxu0 0.0
        %2163 = vmatpush.xpose.msra.mxu0 0.0
        %2164 = vmatpush.xpose.msra.mxu0 %v2147
        %2165 = vmatmul.f32.gmra.mxu0 %v2145
        %v2166 = vpop.f32.mrf.mxu0
        %v2167 = vadd.f32 0.0, %v2166
        %2168 = vdwg.mxu0
        %v2169 = vsel %vm940, %v2139, -inf
        %2170 = vmax.xlane.f32.xlu0 %v2169
        %v2171 = vpop.xlane.xlu0 %2170
        %v2172 = vsel %vm940, %v2167, -inf
        %2173 = vmax.xlane.f32.xlu0 %v2172
        %v2174 = vpop.xlane.xlu0 %2173
        %v2175 = vsub.f32 %v2139, %v2171
        %v2176 = vsub.f32 %v2167, %v2174
        %v2177 = vmul.f32 %v2175, 1.442695
        %v2178 = vpow.pop %v2177
        %v2179 = vmul.f32 %v2176, 1.442695
        %v2180 = vpow.pop %v2179
        %v2181 = vsel %vm940, %v2178, 0.0
        %2182 = vadd.xlane.f32.xlu0 %v2181
        %v2183 = vpop.xlane.xlu0 %2182
        %v2184 = vsel %vm940, %v2180, 0.0
        %2185 = vadd.xlane.f32.xlu0 %v2184
        %v2186 = vpop.xlane.xlu0 %2185
        %v2187 = vrcp.pop %v2183
        %v2188 = vrcp.pop %v2186
        %2189 = vrot.lane.b32.xlu0 %v1778, 88
        %v2190 = vpop.permute.xlu0 %2189
        %v2193 = vsel %vm940, %v2178, 0
        %2195 = vmatpush.msra.mxu0 0.0
        %2196 = vmatpush.msra.mxu0 0.0
        %2197 = vmatpush.msra.mxu0 0.0
        %2198 = vmatpush.msra.mxu0 0.0
        %2199 = vmatpush.msra.mxu0 0.0
        %2200 = vmatpush.msra.mxu0 0.0
        %2201 = vmatpush.msra.mxu0 0.0
        %2202 = vmatpush.msra.mxu0 0.0
        %2203 = vmatpush.msra.mxu0 0.0
        %2204 = vmatpush.msra.mxu0 0.0
        %2205 = vmatpush.msra.mxu0 0.0
        %2206 = vmatpush.msra.mxu0 0.0
        %2207 = vmatpush.msra.mxu0 0.0
        %2208 = vmatpush.msra.mxu0 0.0
        %2209 = vmatpush.msra.mxu0 0.0
        %2210 = vmatpush.msra.mxu0 %v2190
        %2211 = vmatmul.f32.gmra.mxu0 %v2193
        %v2212 = vpop.f32.mrf.mxu0
        %v2213 = vadd.f32 0.0, %v2212
        %2214 = vdwg.mxu0
        %2215 = vrot.lane.b32.xlu0 %v1781, 88
        %v2216 = vpop.permute.xlu0 %2215
        %v2219 = vsel %vm940, %v2180, 0
        %2221 = vmatpush.msra.mxu0 0.0
        %2222 = vmatpush.msra.mxu0 0.0
        %2223 = vmatpush.msra.mxu0 0.0
        %2224 = vmatpush.msra.mxu0 0.0
        %2225 = vmatpush.msra.mxu0 0.0
        %2226 = vmatpush.msra.mxu0 0.0
        %2227 = vmatpush.msra.mxu0 0.0
        %2228 = vmatpush.msra.mxu0 0.0
        %2229 = vmatpush.msra.mxu0 0.0
        %2230 = vmatpush.msra.mxu0 0.0
        %2231 = vmatpush.msra.mxu0 0.0
        %2232 = vmatpush.msra.mxu0 0.0
        %2233 = vmatpush.msra.mxu0 0.0
        %2234 = vmatpush.msra.mxu0 0.0
        %2235 = vmatpush.msra.mxu0 0.0
        %2236 = vmatpush.msra.mxu0 %v2216
        %2237 = vmatmul.f32.gmra.mxu0 %v2219
        %v2238 = vpop.f32.mrf.mxu0
        %v2239 = vadd.f32 0.0, %v2238
        %2240 = vdwg.mxu0
        %v2241 = vmul.f32 %v2213, %v2187
        %v2242 = vmul.f32 %v2239, %v2188
        %s2243 = scalar_lea.vmem [#allocation8], 24
        %v2244 = vld [vmem:[%s2243] sm:$0xf]
        %v2246 = vsel %vm886, %v2241, 0
        %v2249 = vsel %vm886, %v2242, 0
        %v2252 = vsel %vm1154, %v2244, 0
        %2254 = vmatpush.msra.mxu0 0.0
        %2255 = vmatpush.msra.mxu0 0.0
        %2256 = vmatpush.msra.mxu0 0.0
        %2257 = vmatpush.msra.mxu0 0.0
        %2258 = vmatpush.msra.mxu0 0.0
        %2259 = vmatpush.msra.mxu0 0.0
        %2260 = vmatpush.msra.mxu0 0.0
        %2261 = vmatpush.msra.mxu0 0.0
        %2262 = vmatpush.msra.mxu0 0.0
        %2263 = vmatpush.msra.mxu0 0.0
        %2264 = vmatpush.msra.mxu0 0.0
        %2265 = vmatpush.msra.mxu0 0.0
        %2266 = vmatpush.msra.mxu0 0.0
        %2267 = vmatpush.msra.mxu0 0.0
        %2268 = vmatpush.msra.mxu0 0.0
        %2269 = vmatpush.msra.mxu0 %v2252
        %2270 = vmatmul.f32.gmra.mxu0 %v2246
        %v2271 = vpop.f32.mrf.mxu0
        %v2272 = vadd.f32 0.0, %v2271
        %2273 = vmatmul.f32.gmra.mxu0 %v2249
        %v2274 = vpop.f32.mrf.mxu0
        %v2275 = vadd.f32 0.0, %v2274
        %2276 = vdwg.mxu0
        %v2277 = vadd.f32 %v2108, %v2272
        %v2278 = vadd.f32 %v2111, %v2275
        %2279 = vrot.lane.b32.xlu0 %v1783, 116
        %v2280 = vpop.permute.xlu0 %2279
        %2281 = vrot.lane.b32.xlu0 %v1778, 100
        %v2282 = vpop.permute.xlu0 %2281
        %v2283 = vsel %vm886, %v2280, 0
        %v2285 = vsel %vm886, %v2282, 0
        %2287 = vmatpush.xpose.msra.mxu0 0.0
        %2288 = vmatpush.xpose.msra.mxu0 0.0
        %2289 = vmatpush.xpose.msra.mxu0 0.0
        %2290 = vmatpush.xpose.msra.mxu0 0.0
        %2291 = vmatpush.xpose.msra.mxu0 0.0
        %2292 = vmatpush.xpose.msra.mxu0 0.0
        %2293 = vmatpush.xpose.msra.mxu0 0.0
        %2294 = vmatpush.xpose.msra.mxu0 0.0
        %2295 = vmatpush.xpose.msra.mxu0 0.0
        %2296 = vmatpush.xpose.msra.mxu0 0.0
        %2297 = vmatpush.xpose.msra.mxu0 0.0
        %2298 = vmatpush.xpose.msra.mxu0 0.0
        %2299 = vmatpush.xpose.msra.mxu0 0.0
        %2300 = vmatpush.xpose.msra.mxu0 0.0
        %2301 = vmatpush.xpose.msra.mxu0 0.0
        %2302 = vmatpush.xpose.msra.mxu0 %v2285
        %2303 = vmatmul.f32.gmra.mxu0 %v2283
        %v2304 = vpop.f32.mrf.mxu0
        %v2305 = vadd.f32 0.0, %v2304
        %2306 = vdwg.mxu0
        %2307 = vrot.lane.b32.xlu0 %v1784, 116
        %v2308 = vpop.permute.xlu0 %2307
        %2309 = vrot.lane.b32.xlu0 %v1781, 100
        %v2310 = vpop.permute.xlu0 %2309
        %v2311 = vsel %vm886, %v2308, 0
        %v2313 = vsel %vm886, %v2310, 0
        %2315 = vmatpush.xpose.msra.mxu0 0.0
        %2316 = vmatpush.xpose.msra.mxu0 0.0
        %2317 = vmatpush.xpose.msra.mxu0 0.0
        %2318 = vmatpush.xpose.msra.mxu0 0.0
        %2319 = vmatpush.xpose.msra.mxu0 0.0
        %2320 = vmatpush.xpose.msra.mxu0 0.0
        %2321 = vmatpush.xpose.msra.mxu0 0.0
        %2322 = vmatpush.xpose.msra.mxu0 0.0
        %2323 = vmatpush.xpose.msra.mxu0 0.0
        %2324 = vmatpush.xpose.msra.mxu0 0.0
        %2325 = vmatpush.xpose.msra.mxu0 0.0
        %2326 = vmatpush.xpose.msra.mxu0 0.0
        %2327 = vmatpush.xpose.msra.mxu0 0.0
        %2328 = vmatpush.xpose.msra.mxu0 0.0
        %2329 = vmatpush.xpose.msra.mxu0 0.0
        %2330 = vmatpush.xpose.msra.mxu0 %v2313
        %2331 = vmatmul.f32.gmra.mxu0 %v2311
        %v2332 = vpop.f32.mrf.mxu0
        %v2333 = vadd.f32 0.0, %v2332
        %2334 = vdwg.mxu0
        %v2335 = vsel %vm940, %v2305, -inf
        %2336 = vmax.xlane.f32.xlu0 %v2335
        %v2337 = vpop.xlane.xlu0 %2336
        %v2338 = vsel %vm940, %v2333, -inf
        %2339 = vmax.xlane.f32.xlu0 %v2338
        %v2340 = vpop.xlane.xlu0 %2339
        %v2341 = vsub.f32 %v2305, %v2337
        %v2342 = vsub.f32 %v2333, %v2340
        %v2343 = vmul.f32 %v2341, 1.442695
        %v2344 = vpow.pop %v2343
        %v2345 = vmul.f32 %v2342, 1.442695
        %v2346 = vpow.pop %v2345
        %v2347 = vsel %vm940, %v2344, 0.0
        %2348 = vadd.xlane.f32.xlu0 %v2347
        %v2349 = vpop.xlane.xlu0 %2348
        %v2350 = vsel %vm940, %v2346, 0.0
        %2351 = vadd.xlane.f32.xlu0 %v2350
        %v2352 = vpop.xlane.xlu0 %2351
        %v2353 = vrcp.pop %v2349
        %v2354 = vrcp.pop %v2352
        %2355 = vrot.lane.b32.xlu0 %v1778, 84
        %v2356 = vpop.permute.xlu0 %2355
        %v2359 = vsel %vm940, %v2344, 0
        %2361 = vmatpush.msra.mxu0 0.0
        %2362 = vmatpush.msra.mxu0 0.0
        %2363 = vmatpush.msra.mxu0 0.0
        %2364 = vmatpush.msra.mxu0 0.0
        %2365 = vmatpush.msra.mxu0 0.0
        %2366 = vmatpush.msra.mxu0 0.0
        %2367 = vmatpush.msra.mxu0 0.0
        %2368 = vmatpush.msra.mxu0 0.0
        %2369 = vmatpush.msra.mxu0 0.0
        %2370 = vmatpush.msra.mxu0 0.0
        %2371 = vmatpush.msra.mxu0 0.0
        %2372 = vmatpush.msra.mxu0 0.0
        %2373 = vmatpush.msra.mxu0 0.0
        %2374 = vmatpush.msra.mxu0 0.0
        %2375 = vmatpush.msra.mxu0 0.0
        %2376 = vmatpush.msra.mxu0 %v2356
        %2377 = vmatmul.f32.gmra.mxu0 %v2359
        %v2378 = vpop.f32.mrf.mxu0
        %v2379 = vadd.f32 0.0, %v2378
        %2380 = vdwg.mxu0
        %2381 = vrot.lane.b32.xlu0 %v1781, 84
        %v2382 = vpop.permute.xlu0 %2381
        %v2385 = vsel %vm940, %v2346, 0
        %2387 = vmatpush.msra.mxu0 0.0
        %2388 = vmatpush.msra.mxu0 0.0
        %2389 = vmatpush.msra.mxu0 0.0
        %2390 = vmatpush.msra.mxu0 0.0
        %2391 = vmatpush.msra.mxu0 0.0
        %2392 = vmatpush.msra.mxu0 0.0
        %2393 = vmatpush.msra.mxu0 0.0
        %2394 = vmatpush.msra.mxu0 0.0
        %2395 = vmatpush.msra.mxu0 0.0
        %2396 = vmatpush.msra.mxu0 0.0
        %2397 = vmatpush.msra.mxu0 0.0
        %2398 = vmatpush.msra.mxu0 0.0
        %2399 = vmatpush.msra.mxu0 0.0
        %2400 = vmatpush.msra.mxu0 0.0
        %2401 = vmatpush.msra.mxu0 0.0
        %2402 = vmatpush.msra.mxu0 %v2382
        %2403 = vmatmul.f32.gmra.mxu0 %v2385
        %v2404 = vpop.f32.mrf.mxu0
        %v2405 = vadd.f32 0.0, %v2404
        %2406 = vdwg.mxu0
        %v2407 = vmul.f32 %v2379, %v2353
        %v2408 = vmul.f32 %v2405, %v2354
        %s2409 = scalar_lea.vmem [#allocation8], 28
        %v2410 = vld [vmem:[%s2409] sm:$0xf]
        %v2412 = vsel %vm886, %v2407, 0
        %v2415 = vsel %vm886, %v2408, 0
        %v2418 = vsel %vm1154, %v2410, 0
        %2420 = vmatpush.msra.mxu0 0.0
        %2421 = vmatpush.msra.mxu0 0.0
        %2422 = vmatpush.msra.mxu0 0.0
        %2423 = vmatpush.msra.mxu0 0.0
        %2424 = vmatpush.msra.mxu0 0.0
        %2425 = vmatpush.msra.mxu0 0.0
        %2426 = vmatpush.msra.mxu0 0.0
        %2427 = vmatpush.msra.mxu0 0.0
        %2428 = vmatpush.msra.mxu0 0.0
        %2429 = vmatpush.msra.mxu0 0.0
        %2430 = vmatpush.msra.mxu0 0.0
        %2431 = vmatpush.msra.mxu0 0.0
        %2432 = vmatpush.msra.mxu0 0.0
        %2433 = vmatpush.msra.mxu0 0.0
        %2434 = vmatpush.msra.mxu0 0.0
        %2435 = vmatpush.msra.mxu0 %v2418
        %2436 = vmatmul.f32.gmra.mxu0 %v2412
        %v2437 = vpop.f32.mrf.mxu0
        %v2438 = vadd.f32 0.0, %v2437
        %2439 = vmatmul.f32.gmra.mxu0 %v2415
        %v2440 = vpop.f32.mrf.mxu0
        %v2441 = vadd.f32 0.0, %v2440
        %2442 = vdwg.mxu0
        %v2443 = vadd.f32 %v2277, %v2438
        %v2444 = vadd.f32 %v2278, %v2441
        %s2445 = scalar_lea.vmem %s6, 1
        %v2446 = vld [vmem:[%s2445] sm:$0x1]
        %v2448 = vperm.slane %v2446, 0
        %v2450 = vadd.f32 %v2443, %v2448
        %v2451 = vadd.f32 %v2444, %v2448
        %v2452 = vadd.f32 %v1744, %v2450
        %v2453 = vadd.f32 %v1745, %v2451
        %s2454 = scalar_lea.vmem [#allocation9], 1
        %v2455 = vld [vmem:[%s2454] sm:$0x1]
        %s2456 = scalar_lea.vmem %s8, 1
        %v2457 = vld [vmem:[%s2456] sm:$0x1]
        %v2458 = vsel %vm851, %v2452, 0.0
        %2459 = vadd.xlane.f32.xlu0 %v2458
        %v2460 = vpop.xlane.xlu0 %2459
        %v2461 = vsel %vm851, %v2453, 0.0
        %2462 = vadd.xlane.f32.xlu0 %v2461
        %v2463 = vpop.xlane.xlu0 %2462
        %v2464 = vmul.f32 %v2460, %v1567
        %v2465 = vmul.f32 %v2463, %v1567
        %v2466 = vsub.f32 %v2452, %v2464
        %v2467 = vsub.f32 %v2453, %v2465
        %v2468 = vmul.f32 %v2466, %v2466
        %v2469 = vmul.f32 %v2467, %v2467
        %v2470 = vsel %vm851, %v2468, 0.0
        %2471 = vadd.xlane.f32.xlu0 %v2470
        %v2472 = vpop.xlane.xlu0 %2471
        %v2473 = vsel %vm851, %v2469, 0.0
        %2474 = vadd.xlane.f32.xlu0 %v2473
        %v2475 = vpop.xlane.xlu0 %2474
        %v2476 = vmul.f32 %v2472, %v1567
        %v2477 = vmul.f32 %v2475, %v1567
        %v2478 = vadd.f32 %v2476, 1e-05
        %v2479 = vadd.f32 %v2477, 1e-05
        %v2480 = vrsqrt.pop %v2478
        %v2481 = vmul.f32 %v2480, %v2478
        %v2482 = vmul.f32 %v2481, %v2480
        %v2483 = vmul.f32 0.5, %v2482
        %v2484 = vsub.f32 1.5, %v2483
        %v2485 = vmul.f32 %v2480, %v2484
        %vm2486 = vweird.f32 %v2478
        %vm2487 = vweird.f32 %v2480
        %vm2488 = vmor %vm2486, %vm2487
        %v2489 = vsel %vm2488, %v2480, %v2485
        %v2490 = vrsqrt.pop %v2479
        %v2491 = vmul.f32 %v2490, %v2479
        %v2492 = vmul.f32 %v2491, %v2490
        %v2493 = vmul.f32 0.5, %v2492
        %v2494 = vsub.f32 1.5, %v2493
        %v2495 = vmul.f32 %v2490, %v2494
        %vm2496 = vweird.f32 %v2479
        %vm2497 = vweird.f32 %v2490
        %vm2498 = vmor %vm2496, %vm2497
        %v2499 = vsel %vm2498, %v2490, %v2495
        %v2500 = vmul.f32 %v2466, %v2489
        %v2501 = vmul.f32 %v2467, %v2499
        %v2503 = vperm.slane %v2455, 0
        %v2505 = vmul.f32 %v2500, %v2503
        %v2506 = vmul.f32 %v2501, %v2503
        %v2508 = vperm.slane %v2457, 0
        %v2510 = vadd.f32 %v2505, %v2508
        %v2511 = vadd.f32 %v2506, %v2508
        %s2512 = scalar_lea.vmem [#allocation11], 16
        %v2513 = vld [vmem:[%s2512] sm:$0xff]
        %v2514 = vld [vmem:[%s2512 + $0x8] sm:$0xff]
        %s2515 = scalar_lea.vmem [#allocation12], 1
        %v2516 = vld [vmem:[%s2515] sm:$0x1]
        %v2518 = vperm.slane %v2516, 0
        %v2521 = vsel %vm851, %v2510, 0
        %v2524 = vsel %vm851, %v2511, 0
        %2526 = vmatpush.msra.mxu0 0.0
        %2527 = vmatpush.msra.mxu0 0.0
        %2528 = vmatpush.msra.mxu0 0.0
        %2529 = vmatpush.msra.mxu0 0.0
        %2530 = vmatpush.msra.mxu0 0.0
        %2531 = vmatpush.msra.mxu0 0.0
        %2532 = vmatpush.msra.mxu0 0.0
        %2533 = vmatpush.msra.mxu0 0.0
        %2534 = vmatpush.msra.mxu0 0.0
        %2535 = vmatpush.msra.mxu0 0.0
        %2536 = vmatpush.msra.mxu0 0.0
        %2537 = vmatpush.msra.mxu0 0.0
        %2538 = vmatpush.msra.mxu0 0.0
        %2539 = vmatpush.msra.mxu0 0.0
        %2540 = vmatpush.msra.mxu0 %v2514
        %2541 = vmatpush.msra.mxu0 %v2513
        %2542 = vmatmul.f32.gmra.mxu0 %v2521
        %v2543 = vpop.f32.mrf.mxu0
        %v2544 = vadd.f32 %v2518, %v2543
        %2545 = vmatmul.f32.gmra.mxu0 %v2524
        %v2546 = vpop.f32.mrf.mxu0
        %v2547 = vadd.f32 %v2518, %v2546
        %2548 = vdwg.mxu0
        %v2549 = vmax.f32 %v2544, 0.0
        %v2550 = vmax.f32 %v2547, 0.0
        %s2551 = scalar_lea.vmem [#allocation14], 16
        %v2552 = vld [vmem:[%s2551] sm:$0xff]
        %v2553 = vld [vmem:[%s2551 + $0x8] sm:$0xff]
        %s2554 = scalar_lea.vmem %s12, 1
        %v2555 = vld [vmem:[%s2554] sm:$0x1]
        %v2557 = vperm.slane %v2555, 0
        %v2560 = vsel %vm851, %v2549, 0
        %v2563 = vsel %vm851, %v2550, 0
        %2565 = vmatpush.msra.mxu0 0.0
        %2566 = vmatpush.msra.mxu0 0.0
        %2567 = vmatpush.msra.mxu0 0.0
        %2568 = vmatpush.msra.mxu0 0.0
        %2569 = vmatpush.msra.mxu0 0.0
        %2570 = vmatpush.msra.mxu0 0.0
        %2571 = vmatpush.msra.mxu0 0.0
        %2572 = vmatpush.msra.mxu0 0.0
        %2573 = vmatpush.msra.mxu0 0.0
        %2574 = vmatpush.msra.mxu0 0.0
        %2575 = vmatpush.msra.mxu0 0.0
        %2576 = vmatpush.msra.mxu0 0.0
        %2577 = vmatpush.msra.mxu0 0.0
        %2578 = vmatpush.msra.mxu0 0.0
        %2579 = vmatpush.msra.mxu0 %v2553
        %2580 = vmatpush.msra.mxu0 %v2552
        %2581 = vmatmul.f32.gmra.mxu0 %v2560
        %v2582 = vpop.f32.mrf.mxu0
        %v2583 = vadd.f32 %v2557, %v2582
        %2584 = vmatmul.f32.gmra.mxu0 %v2563
        %v2585 = vpop.f32.mrf.mxu0
        %v2586 = vadd.f32 %v2557, %v2585
        %2587 = vdwg.mxu0
        %v2588 = vadd.f32 %v2510, %v2583
        %v2589 = vadd.f32 %v2511, %v2586
        %s2590 = scalar_lea.vmem [#allocation15], 1
        %v2591 = vld [vmem:[%s2590] sm:$0x1]
        %s2592 = scalar_lea.vmem %s14, 1
        %v2593 = vld [vmem:[%s2592] sm:$0x1]
        %v2594 = vsel %vm851, %v2588, 0.0
        %2595 = vadd.xlane.f32.xlu0 %v2594
        %v2596 = vpop.xlane.xlu0 %2595
        %v2597 = vsel %vm851, %v2589, 0.0
        %2598 = vadd.xlane.f32.xlu0 %v2597
        %v2599 = vpop.xlane.xlu0 %2598
        %v2600 = vmul.f32 %v2596, %v1567
        %v2601 = vmul.f32 %v2599, %v1567
        %v2602 = vsub.f32 %v2588, %v2600
        %v2603 = vsub.f32 %v2589, %v2601
        %v2604 = vmul.f32 %v2602, %v2602
        %v2605 = vmul.f32 %v2603, %v2603
        %v2606 = vsel %vm851, %v2604, 0.0
        %2607 = vadd.xlane.f32.xlu0 %v2606
        %v2608 = vpop.xlane.xlu0 %2607
        %v2609 = vsel %vm851, %v2605, 0.0
        %2610 = vadd.xlane.f32.xlu0 %v2609
        %v2611 = vpop.xlane.xlu0 %2610
        %v2612 = vmul.f32 %v2608, %v1567
        %v2613 = vmul.f32 %v2611, %v1567
        %v2614 = vadd.f32 %v2612, 1e-05
        %v2615 = vadd.f32 %v2613, 1e-05
        %v2616 = vrsqrt.pop %v2614
        %v2617 = vmul.f32 %v2616, %v2614
        %v2618 = vmul.f32 %v2617, %v2616
        %v2619 = vmul.f32 0.5, %v2618
        %v2620 = vsub.f32 1.5, %v2619
        %v2621 = vmul.f32 %v2616, %v2620
        %vm2622 = vweird.f32 %v2614
        %vm2623 = vweird.f32 %v2616
        %vm2624 = vmor %vm2622, %vm2623
        %v2625 = vsel %vm2624, %v2616, %v2621
        %v2626 = vrsqrt.pop %v2615
        %v2627 = vmul.f32 %v2626, %v2615
        %v2628 = vmul.f32 %v2627, %v2626
        %v2629 = vmul.f32 0.5, %v2628
        %v2630 = vsub.f32 1.5, %v2629
        %v2631 = vmul.f32 %v2626, %v2630
        %vm2632 = vweird.f32 %v2615
        %vm2633 = vweird.f32 %v2626
        %vm2634 = vmor %vm2632, %vm2633
        %v2635 = vsel %vm2634, %v2626, %v2631
        %v2636 = vmul.f32 %v2602, %v2625
        %v2637 = vmul.f32 %v2603, %v2635
        %v2639 = vperm.slane %v2591, 0
        %v2641 = vmul.f32 %v2636, %v2639
        %v2642 = vmul.f32 %v2637, %v2639
        %v2644 = vperm.slane %v2593, 0
        %v2646 = vadd.f32 %v2641, %v2644
        %v2647 = vadd.f32 %v2642, %v2644
        %s2648 = scalar_lea.vmem %s3, 32
        %v2649 = vld [vmem:[%s2648] sm:$0xff]
        %v2650 = vld [vmem:[%s2648 + $0x8] sm:$0xff]
        %s2651 = scalar_lea.vmem %s4, 2
        %v2652 = vld [vmem:[%s2651] sm:$0x1]
        %v2654 = vperm.slane %v2652, 0
        %v2657 = vsel %vm851, %v2646, 0
        %v2660 = vsel %vm851, %v2647, 0
        %2662 = vmatpush.msra.mxu0 0.0
        %2663 = vmatpush.msra.mxu0 0.0
        %2664 = vmatpush.msra.mxu0 0.0
        %2665 = vmatpush.msra.mxu0 0.0
        %2666 = vmatpush.msra.mxu0 0.0
        %2667 = vmatpush.msra.mxu0 0.0
        %2668 = vmatpush.msra.mxu0 0.0
        %2669 = vmatpush.msra.mxu0 0.0
        %2670 = vmatpush.msra.mxu0 0.0
        %2671 = vmatpush.msra.mxu0 0.0
        %2672 = vmatpush.msra.mxu0 0.0
        %2673 = vmatpush.msra.mxu0 0.0
        %2674 = vmatpush.msra.mxu0 0.0
        %2675 = vmatpush.msra.mxu0 0.0
        %2676 = vmatpush.msra.mxu0 %v2650
        %2677 = vmatpush.msra.mxu0 %v2649
        %2678 = vmatmul.f32.gmra.mxu0 %v2657
        %v2679 = vpop.f32.mrf.mxu0
        %v2680 = vadd.f32 %v2654, %v2679
        %2681 = vmatmul.f32.gmra.mxu0 %v2660
        %v2682 = vpop.f32.mrf.mxu0
        %v2683 = vadd.f32 %v2654, %v2682
        %2684 = vdwg.mxu0
        %v2685 = vmul.f32 %v2680, 0.5
        %v2686 = vmul.f32 %v2683, 0.5
        %2688 = vrot.lane.b32.xlu0 %v2680, 112
        %v2689 = vpop.permute.xlu0 %2688
        %v2691 = vsel %vm886, %v2685, 0
        %v2693 = vsel %vm886, %v2689, 0
        %2695 = vmatpush.xpose.msra.mxu0 0.0
        %2696 = vmatpush.xpose.msra.mxu0 0.0
        %2697 = vmatpush.xpose.msra.mxu0 0.0
        %2698 = vmatpush.xpose.msra.mxu0 0.0
        %2699 = vmatpush.xpose.msra.mxu0 0.0
        %2700 = vmatpush.xpose.msra.mxu0 0.0
        %2701 = vmatpush.xpose.msra.mxu0 0.0
        %2702 = vmatpush.xpose.msra.mxu0 0.0
        %2703 = vmatpush.xpose.msra.mxu0 0.0
        %2704 = vmatpush.xpose.msra.mxu0 0.0
        %2705 = vmatpush.xpose.msra.mxu0 0.0
        %2706 = vmatpush.xpose.msra.mxu0 0.0
        %2707 = vmatpush.xpose.msra.mxu0 0.0
        %2708 = vmatpush.xpose.msra.mxu0 0.0
        %2709 = vmatpush.xpose.msra.mxu0 0.0
        %2710 = vmatpush.xpose.msra.mxu0 %v2693
        %2711 = vmatmul.f32.gmra.mxu0 %v2691
        %v2712 = vpop.f32.mrf.mxu0
        %v2713 = vadd.f32 0.0, %v2712
        %2714 = vdwg.mxu0
        %2716 = vrot.lane.b32.xlu0 %v2683, 112
        %v2717 = vpop.permute.xlu0 %2716
        %v2719 = vsel %vm886, %v2686, 0
        %v2721 = vsel %vm886, %v2717, 0
        %2723 = vmatpush.xpose.msra.mxu0 0.0
        %2724 = vmatpush.xpose.msra.mxu0 0.0
        %2725 = vmatpush.xpose.msra.mxu0 0.0
        %2726 = vmatpush.xpose.msra.mxu0 0.0
        %2727 = vmatpush.xpose.msra.mxu0 0.0
        %2728 = vmatpush.xpose.msra.mxu0 0.0
        %2729 = vmatpush.xpose.msra.mxu0 0.0
        %2730 = vmatpush.xpose.msra.mxu0 0.0
        %2731 = vmatpush.xpose.msra.mxu0 0.0
        %2732 = vmatpush.xpose.msra.mxu0 0.0
        %2733 = vmatpush.xpose.msra.mxu0 0.0
        %2734 = vmatpush.xpose.msra.mxu0 0.0
        %2735 = vmatpush.xpose.msra.mxu0 0.0
        %2736 = vmatpush.xpose.msra.mxu0 0.0
        %2737 = vmatpush.xpose.msra.mxu0 0.0
        %2738 = vmatpush.xpose.msra.mxu0 %v2721
        %2739 = vmatmul.f32.gmra.mxu0 %v2719
        %v2740 = vpop.f32.mrf.mxu0
        %v2741 = vadd.f32 0.0, %v2740
        %2742 = vdwg.mxu0
        %v2743 = vsel %vm940, %v2713, -inf
        %2744 = vmax.xlane.f32.xlu0 %v2743
        %v2745 = vpop.xlane.xlu0 %2744
        %v2746 = vsel %vm940, %v2741, -inf
        %2747 = vmax.xlane.f32.xlu0 %v2746
        %v2748 = vpop.xlane.xlu0 %2747
        %v2749 = vsub.f32 %v2713, %v2745
        %v2750 = vsub.f32 %v2741, %v2748
        %v2751 = vmul.f32 %v2749, 1.442695
        %v2752 = vpow.pop %v2751
        %v2753 = vmul.f32 %v2750, 1.442695
        %v2754 = vpow.pop %v2753
        %v2755 = vsel %vm940, %v2752, 0.0
        %2756 = vadd.xlane.f32.xlu0 %v2755
        %v2757 = vpop.xlane.xlu0 %2756
        %v2758 = vsel %vm940, %v2754, 0.0
        %2759 = vadd.xlane.f32.xlu0 %v2758
        %v2760 = vpop.xlane.xlu0 %2759
        %v2761 = vrcp.pop %v2757
        %v2762 = vrcp.pop %v2760
        %2763 = vrot.lane.b32.xlu0 %v2680, 96
        %v2764 = vpop.permute.xlu0 %2763
        %v2767 = vsel %vm940, %v2752, 0
        %2769 = vmatpush.msra.mxu0 0.0
        %2770 = vmatpush.msra.mxu0 0.0
        %2771 = vmatpush.msra.mxu0 0.0
        %2772 = vmatpush.msra.mxu0 0.0
        %2773 = vmatpush.msra.mxu0 0.0
        %2774 = vmatpush.msra.mxu0 0.0
        %2775 = vmatpush.msra.mxu0 0.0
        %2776 = vmatpush.msra.mxu0 0.0
        %2777 = vmatpush.msra.mxu0 0.0
        %2778 = vmatpush.msra.mxu0 0.0
        %2779 = vmatpush.msra.mxu0 0.0
        %2780 = vmatpush.msra.mxu0 0.0
        %2781 = vmatpush.msra.mxu0 0.0
        %2782 = vmatpush.msra.mxu0 0.0
        %2783 = vmatpush.msra.mxu0 0.0
        %2784 = vmatpush.msra.mxu0 %v2764
        %2785 = vmatmul.f32.gmra.mxu0 %v2767
        %v2786 = vpop.f32.mrf.mxu0
        %v2787 = vadd.f32 0.0, %v2786
        %2788 = vdwg.mxu0
        %2789 = vrot.lane.b32.xlu0 %v2683, 96
        %v2790 = vpop.permute.xlu0 %2789
        %v2793 = vsel %vm940, %v2754, 0
        %2795 = vmatpush.msra.mxu0 0.0
        %2796 = vmatpush.msra.mxu0 0.0
        %2797 = vmatpush.msra.mxu0 0.0
        %2798 = vmatpush.msra.mxu0 0.0
        %2799 = vmatpush.msra.mxu0 0.0
        %2800 = vmatpush.msra.mxu0 0.0
        %2801 = vmatpush.msra.mxu0 0.0
        %2802 = vmatpush.msra.mxu0 0.0
        %2803 = vmatpush.msra.mxu0 0.0
        %2804 = vmatpush.msra.mxu0 0.0
        %2805 = vmatpush.msra.mxu0 0.0
        %2806 = vmatpush.msra.mxu0 0.0
        %2807 = vmatpush.msra.mxu0 0.0
        %2808 = vmatpush.msra.mxu0 0.0
        %2809 = vmatpush.msra.mxu0 0.0
        %2810 = vmatpush.msra.mxu0 %v2790
        %2811 = vmatmul.f32.gmra.mxu0 %v2793
        %v2812 = vpop.f32.mrf.mxu0
        %v2813 = vadd.f32 0.0, %v2812
        %2814 = vdwg.mxu0
        %v2815 = vmul.f32 %v2787, %v2761
        %v2816 = vmul.f32 %v2813, %v2762
        %s2817 = scalar_lea.vmem [#allocation8], 32
        %v2818 = vld [vmem:[%s2817] sm:$0xf]
        %2819 = vrot.lane.b32.xlu0 %v2685, 124
        %v2820 = vpop.permute.xlu0 %2819
        %2821 = vrot.lane.b32.xlu0 %v2680, 108
        %v2822 = vpop.permute.xlu0 %2821
        %v2823 = vsel %vm886, %v2820, 0
        %v2825 = vsel %vm886, %v2822, 0
        %2827 = vmatpush.xpose.msra.mxu0 0.0
        %2828 = vmatpush.xpose.msra.mxu0 0.0
        %2829 = vmatpush.xpose.msra.mxu0 0.0
        %2830 = vmatpush.xpose.msra.mxu0 0.0
        %2831 = vmatpush.xpose.msra.mxu0 0.0
        %2832 = vmatpush.xpose.msra.mxu0 0.0
        %2833 = vmatpush.xpose.msra.mxu0 0.0
        %2834 = vmatpush.xpose.msra.mxu0 0.0
        %2835 = vmatpush.xpose.msra.mxu0 0.0
        %2836 = vmatpush.xpose.msra.mxu0 0.0
        %2837 = vmatpush.xpose.msra.mxu0 0.0
        %2838 = vmatpush.xpose.msra.mxu0 0.0
        %2839 = vmatpush.xpose.msra.mxu0 0.0
        %2840 = vmatpush.xpose.msra.mxu0 0.0
        %2841 = vmatpush.xpose.msra.mxu0 0.0
        %2842 = vmatpush.xpose.msra.mxu0 %v2825
        %2843 = vmatmul.f32.gmra.mxu0 %v2823
        %v2844 = vpop.f32.mrf.mxu0
        %v2845 = vadd.f32 0.0, %v2844
        %2846 = vdwg.mxu0
        %2847 = vrot.lane.b32.xlu0 %v2686, 124
        %v2848 = vpop.permute.xlu0 %2847
        %2849 = vrot.lane.b32.xlu0 %v2683, 108
        %v2850 = vpop.permute.xlu0 %2849
        %v2851 = vsel %vm886, %v2848, 0
        %v2853 = vsel %vm886, %v2850, 0
        %2855 = vmatpush.xpose.msra.mxu0 0.0
        %2856 = vmatpush.xpose.msra.mxu0 0.0
        %2857 = vmatpush.xpose.msra.mxu0 0.0
        %2858 = vmatpush.xpose.msra.mxu0 0.0
        %2859 = vmatpush.xpose.msra.mxu0 0.0
        %2860 = vmatpush.xpose.msra.mxu0 0.0
        %2861 = vmatpush.xpose.msra.mxu0 0.0
        %2862 = vmatpush.xpose.msra.mxu0 0.0
        %2863 = vmatpush.xpose.msra.mxu0 0.0
        %2864 = vmatpush.xpose.msra.mxu0 0.0
        %2865 = vmatpush.xpose.msra.mxu0 0.0
        %2866 = vmatpush.xpose.msra.mxu0 0.0
        %2867 = vmatpush.xpose.msra.mxu0 0.0
        %2868 = vmatpush.xpose.msra.mxu0 0.0
        %2869 = vmatpush.xpose.msra.mxu0 0.0
        %2870 = vmatpush.xpose.msra.mxu0 %v2853
        %2871 = vmatmul.f32.gmra.mxu0 %v2851
        %v2872 = vpop.f32.mrf.mxu0
        %v2873 = vadd.f32 0.0, %v2872
        %2874 = vdwg.mxu0
        %v2875 = vsel %vm940, %v2845, -inf
        %2876 = vmax.xlane.f32.xlu0 %v2875
        %v2877 = vpop.xlane.xlu0 %2876
        %v2878 = vsel %vm940, %v2873, -inf
        %2879 = vmax.xlane.f32.xlu0 %v2878
        %v2880 = vpop.xlane.xlu0 %2879
        %v2881 = vsub.f32 %v2845, %v2877
        %v2882 = vsub.f32 %v2873, %v2880
        %v2883 = vmul.f32 %v2881, 1.442695
        %v2884 = vpow.pop %v2883
        %v2885 = vmul.f32 %v2882, 1.442695
        %v2886 = vpow.pop %v2885
        %v2887 = vsel %vm940, %v2884, 0.0
        %2888 = vadd.xlane.f32.xlu0 %v2887
        %v2889 = vpop.xlane.xlu0 %2888
        %v2890 = vsel %vm940, %v2886, 0.0
        %2891 = vadd.xlane.f32.xlu0 %v2890
        %v2892 = vpop.xlane.xlu0 %2891
        %v2893 = vrcp.pop %v2889
        %v2894 = vrcp.pop %v2892
        %2895 = vrot.lane.b32.xlu0 %v2680, 92
        %v2896 = vpop.permute.xlu0 %2895
        %v2899 = vsel %vm940, %v2884, 0
        %2901 = vmatpush.msra.mxu0 0.0
        %2902 = vmatpush.msra.mxu0 0.0
        %2903 = vmatpush.msra.mxu0 0.0
        %2904 = vmatpush.msra.mxu0 0.0
        %2905 = vmatpush.msra.mxu0 0.0
        %2906 = vmatpush.msra.mxu0 0.0
        %2907 = vmatpush.msra.mxu0 0.0
        %2908 = vmatpush.msra.mxu0 0.0
        %2909 = vmatpush.msra.mxu0 0.0
        %2910 = vmatpush.msra.mxu0 0.0
        %2911 = vmatpush.msra.mxu0 0.0
        %2912 = vmatpush.msra.mxu0 0.0
        %2913 = vmatpush.msra.mxu0 0.0
        %2914 = vmatpush.msra.mxu0 0.0
        %2915 = vmatpush.msra.mxu0 0.0
        %2916 = vmatpush.msra.mxu0 %v2896
        %2917 = vmatmul.f32.gmra.mxu0 %v2899
        %v2918 = vpop.f32.mrf.mxu0
        %v2919 = vadd.f32 0.0, %v2918
        %2920 = vdwg.mxu0
        %2921 = vrot.lane.b32.xlu0 %v2683, 92
        %v2922 = vpop.permute.xlu0 %2921
        %v2925 = vsel %vm940, %v2886, 0
        %2927 = vmatpush.msra.mxu0 0.0
        %2928 = vmatpush.msra.mxu0 0.0
        %2929 = vmatpush.msra.mxu0 0.0
        %2930 = vmatpush.msra.mxu0 0.0
        %2931 = vmatpush.msra.mxu0 0.0
        %2932 = vmatpush.msra.mxu0 0.0
        %2933 = vmatpush.msra.mxu0 0.0
        %2934 = vmatpush.msra.mxu0 0.0
        %2935 = vmatpush.msra.mxu0 0.0
        %2936 = vmatpush.msra.mxu0 0.0
        %2937 = vmatpush.msra.mxu0 0.0
        %2938 = vmatpush.msra.mxu0 0.0
        %2939 = vmatpush.msra.mxu0 0.0
        %2940 = vmatpush.msra.mxu0 0.0
        %2941 = vmatpush.msra.mxu0 0.0
        %2942 = vmatpush.msra.mxu0 %v2922
        %2943 = vmatmul.f32.gmra.mxu0 %v2925
        %v2944 = vpop.f32.mrf.mxu0
        %v2945 = vadd.f32 0.0, %v2944
        %2946 = vdwg.mxu0
        %v2947 = vmul.f32 %v2919, %v2893
        %v2948 = vmul.f32 %v2945, %v2894
        %s2949 = scalar_lea.vmem [#allocation8], 36
        %v2950 = vld [vmem:[%s2949] sm:$0xf]
        %v2952 = vsel %vm886, %v2947, 0
        %v2955 = vsel %vm886, %v2948, 0
        %v2958 = vsel %vm1154, %v2950, 0
        %2960 = vmatpush.msra.mxu0 0.0
        %2961 = vmatpush.msra.mxu0 0.0
        %2962 = vmatpush.msra.mxu0 0.0
        %2963 = vmatpush.msra.mxu0 0.0
        %2964 = vmatpush.msra.mxu0 0.0
        %2965 = vmatpush.msra.mxu0 0.0
        %2966 = vmatpush.msra.mxu0 0.0
        %2967 = vmatpush.msra.mxu0 0.0
        %2968 = vmatpush.msra.mxu0 0.0
        %2969 = vmatpush.msra.mxu0 0.0
        %2970 = vmatpush.msra.mxu0 0.0
        %2971 = vmatpush.msra.mxu0 0.0
        %2972 = vmatpush.msra.mxu0 0.0
        %2973 = vmatpush.msra.mxu0 0.0
        %2974 = vmatpush.msra.mxu0 0.0
        %2975 = vmatpush.msra.mxu0 %v2958
        %2976 = vmatmul.f32.gmra.mxu0 %v2952
        %v2977 = vpop.f32.mrf.mxu0
        %v2978 = vadd.f32 0.0, %v2977
        %2979 = vmatmul.f32.gmra.mxu0 %v2955
        %v2980 = vpop.f32.mrf.mxu0
        %v2981 = vadd.f32 0.0, %v2980
        %2982 = vdwg.mxu0
        %v2984 = vsel %vm886, %v2815, 0
        %v2987 = vsel %vm886, %v2816, 0
        %v2990 = vsel %vm1154, %v2818, 0
        %2992 = vmatpush.msra.mxu0 0.0
        %2993 = vmatpush.msra.mxu0 0.0
        %2994 = vmatpush.msra.mxu0 0.0
        %2995 = vmatpush.msra.mxu0 0.0
        %2996 = vmatpush.msra.mxu0 0.0
        %2997 = vmatpush.msra.mxu0 0.0
        %2998 = vmatpush.msra.mxu0 0.0
        %2999 = vmatpush.msra.mxu0 0.0
        %3000 = vmatpush.msra.mxu0 0.0
        %3001 = vmatpush.msra.mxu0 0.0
        %3002 = vmatpush.msra.mxu0 0.0
        %3003 = vmatpush.msra.mxu0 0.0
        %3004 = vmatpush.msra.mxu0 0.0
        %3005 = vmatpush.msra.mxu0 0.0
        %3006 = vmatpush.msra.mxu0 0.0
        %3007 = vmatpush.msra.mxu0 %v2990
        %3008 = vmatmul.f32.gmra.mxu0 %v2984
        %v3009 = vpop.f32.mrf.mxu0
        %v3010 = vadd.f32 %v2978, %v3009
        %3011 = vmatmul.f32.gmra.mxu0 %v2987
        %v3012 = vpop.f32.mrf.mxu0
        %v3013 = vadd.f32 %v2981, %v3012
        %3014 = vdwg.mxu0
        %3015 = vrot.lane.b32.xlu0 %v2685, 120
        %v3016 = vpop.permute.xlu0 %3015
        %3017 = vrot.lane.b32.xlu0 %v2680, 104
        %v3018 = vpop.permute.xlu0 %3017
        %v3019 = vsel %vm886, %v3016, 0
        %v3021 = vsel %vm886, %v3018, 0
        %3023 = vmatpush.xpose.msra.mxu0 0.0
        %3024 = vmatpush.xpose.msra.mxu0 0.0
        %3025 = vmatpush.xpose.msra.mxu0 0.0
        %3026 = vmatpush.xpose.msra.mxu0 0.0
        %3027 = vmatpush.xpose.msra.mxu0 0.0
        %3028 = vmatpush.xpose.msra.mxu0 0.0
        %3029 = vmatpush.xpose.msra.mxu0 0.0
        %3030 = vmatpush.xpose.msra.mxu0 0.0
        %3031 = vmatpush.xpose.msra.mxu0 0.0
        %3032 = vmatpush.xpose.msra.mxu0 0.0
        %3033 = vmatpush.xpose.msra.mxu0 0.0
        %3034 = vmatpush.xpose.msra.mxu0 0.0
        %3035 = vmatpush.xpose.msra.mxu0 0.0
        %3036 = vmatpush.xpose.msra.mxu0 0.0
        %3037 = vmatpush.xpose.msra.mxu0 0.0
        %3038 = vmatpush.xpose.msra.mxu0 %v3021
        %3039 = vmatmul.f32.gmra.mxu0 %v3019
        %v3040 = vpop.f32.mrf.mxu0
        %v3041 = vadd.f32 0.0, %v3040
        %3042 = vdwg.mxu0
        %3043 = vrot.lane.b32.xlu0 %v2686, 120
        %v3044 = vpop.permute.xlu0 %3043
        %3045 = vrot.lane.b32.xlu0 %v2683, 104
        %v3046 = vpop.permute.xlu0 %3045
        %v3047 = vsel %vm886, %v3044, 0
        %v3049 = vsel %vm886, %v3046, 0
        %3051 = vmatpush.xpose.msra.mxu0 0.0
        %3052 = vmatpush.xpose.msra.mxu0 0.0
        %3053 = vmatpush.xpose.msra.mxu0 0.0
        %3054 = vmatpush.xpose.msra.mxu0 0.0
        %3055 = vmatpush.xpose.msra.mxu0 0.0
        %3056 = vmatpush.xpose.msra.mxu0 0.0
        %3057 = vmatpush.xpose.msra.mxu0 0.0
        %3058 = vmatpush.xpose.msra.mxu0 0.0
        %3059 = vmatpush.xpose.msra.mxu0 0.0
        %3060 = vmatpush.xpose.msra.mxu0 0.0
        %3061 = vmatpush.xpose.msra.mxu0 0.0
        %3062 = vmatpush.xpose.msra.mxu0 0.0
        %3063 = vmatpush.xpose.msra.mxu0 0.0
        %3064 = vmatpush.xpose.msra.mxu0 0.0
        %3065 = vmatpush.xpose.msra.mxu0 0.0
        %3066 = vmatpush.xpose.msra.mxu0 %v3049
        %3067 = vmatmul.f32.gmra.mxu0 %v3047
        %v3068 = vpop.f32.mrf.mxu0
        %v3069 = vadd.f32 0.0, %v3068
        %3070 = vdwg.mxu0
        %v3071 = vsel %vm940, %v3041, -inf
        %3072 = vmax.xlane.f32.xlu0 %v3071
        %v3073 = vpop.xlane.xlu0 %3072
        %v3074 = vsel %vm940, %v3069, -inf
        %3075 = vmax.xlane.f32.xlu0 %v3074
        %v3076 = vpop.xlane.xlu0 %3075
        %v3077 = vsub.f32 %v3041, %v3073
        %v3078 = vsub.f32 %v3069, %v3076
        %v3079 = vmul.f32 %v3077, 1.442695
        %v3080 = vpow.pop %v3079
        %v3081 = vmul.f32 %v3078, 1.442695
        %v3082 = vpow.pop %v3081
        %v3083 = vsel %vm940, %v3080, 0.0
        %3084 = vadd.xlane.f32.xlu0 %v3083
        %v3085 = vpop.xlane.xlu0 %3084
        %v3086 = vsel %vm940, %v3082, 0.0
        %3087 = vadd.xlane.f32.xlu0 %v3086
        %v3088 = vpop.xlane.xlu0 %3087
        %v3089 = vrcp.pop %v3085
        %v3090 = vrcp.pop %v3088
        %3091 = vrot.lane.b32.xlu0 %v2680, 88
        %v3092 = vpop.permute.xlu0 %3091
        %v3095 = vsel %vm940, %v3080, 0
        %3097 = vmatpush.msra.mxu0 0.0
        %3098 = vmatpush.msra.mxu0 0.0
        %3099 = vmatpush.msra.mxu0 0.0
        %3100 = vmatpush.msra.mxu0 0.0
        %3101 = vmatpush.msra.mxu0 0.0
        %3102 = vmatpush.msra.mxu0 0.0
        %3103 = vmatpush.msra.mxu0 0.0
        %3104 = vmatpush.msra.mxu0 0.0
        %3105 = vmatpush.msra.mxu0 0.0
        %3106 = vmatpush.msra.mxu0 0.0
        %3107 = vmatpush.msra.mxu0 0.0
        %3108 = vmatpush.msra.mxu0 0.0
        %3109 = vmatpush.msra.mxu0 0.0
        %3110 = vmatpush.msra.mxu0 0.0
        %3111 = vmatpush.msra.mxu0 0.0
        %3112 = vmatpush.msra.mxu0 %v3092
        %3113 = vmatmul.f32.gmra.mxu0 %v3095
        %v3114 = vpop.f32.mrf.mxu0
        %v3115 = vadd.f32 0.0, %v3114
        %3116 = vdwg.mxu0
        %3117 = vrot.lane.b32.xlu0 %v2683, 88
        %v3118 = vpop.permute.xlu0 %3117
        %v3121 = vsel %vm940, %v3082, 0
        %3123 = vmatpush.msra.mxu0 0.0
        %3124 = vmatpush.msra.mxu0 0.0
        %3125 = vmatpush.msra.mxu0 0.0
        %3126 = vmatpush.msra.mxu0 0.0
        %3127 = vmatpush.msra.mxu0 0.0
        %3128 = vmatpush.msra.mxu0 0.0
        %3129 = vmatpush.msra.mxu0 0.0
        %3130 = vmatpush.msra.mxu0 0.0
        %3131 = vmatpush.msra.mxu0 0.0
        %3132 = vmatpush.msra.mxu0 0.0
        %3133 = vmatpush.msra.mxu0 0.0
        %3134 = vmatpush.msra.mxu0 0.0
        %3135 = vmatpush.msra.mxu0 0.0
        %3136 = vmatpush.msra.mxu0 0.0
        %3137 = vmatpush.msra.mxu0 0.0
        %3138 = vmatpush.msra.mxu0 %v3118
        %3139 = vmatmul.f32.gmra.mxu0 %v3121
        %v3140 = vpop.f32.mrf.mxu0
        %v3141 = vadd.f32 0.0, %v3140
        %3142 = vdwg.mxu0
        %v3143 = vmul.f32 %v3115, %v3089
        %v3144 = vmul.f32 %v3141, %v3090
        %s3145 = scalar_lea.vmem [#allocation8], 40
        %v3146 = vld [vmem:[%s3145] sm:$0xf]
        %v3148 = vsel %vm886, %v3143, 0
        %v3151 = vsel %vm886, %v3144, 0
        %v3154 = vsel %vm1154, %v3146, 0
        %3156 = vmatpush.msra.mxu0 0.0
        %3157 = vmatpush.msra.mxu0 0.0
        %3158 = vmatpush.msra.mxu0 0.0
        %3159 = vmatpush.msra.mxu0 0.0
        %3160 = vmatpush.msra.mxu0 0.0
        %3161 = vmatpush.msra.mxu0 0.0
        %3162 = vmatpush.msra.mxu0 0.0
        %3163 = vmatpush.msra.mxu0 0.0
        %3164 = vmatpush.msra.mxu0 0.0
        %3165 = vmatpush.msra.mxu0 0.0
        %3166 = vmatpush.msra.mxu0 0.0
        %3167 = vmatpush.msra.mxu0 0.0
        %3168 = vmatpush.msra.mxu0 0.0
        %3169 = vmatpush.msra.mxu0 0.0
        %3170 = vmatpush.msra.mxu0 0.0
        %3171 = vmatpush.msra.mxu0 %v3154
        %3172 = vmatmul.f32.gmra.mxu0 %v3148
        %v3173 = vpop.f32.mrf.mxu0
        %v3174 = vadd.f32 0.0, %v3173
        %3175 = vmatmul.f32.gmra.mxu0 %v3151
        %v3176 = vpop.f32.mrf.mxu0
        %v3177 = vadd.f32 0.0, %v3176
        %3178 = vdwg.mxu0
        %v3179 = vadd.f32 %v3010, %v3174
        %v3180 = vadd.f32 %v3013, %v3177
        %3181 = vrot.lane.b32.xlu0 %v2685, 116
        %v3182 = vpop.permute.xlu0 %3181
        %3183 = vrot.lane.b32.xlu0 %v2680, 100
        %v3184 = vpop.permute.xlu0 %3183
        %v3185 = vsel %vm886, %v3182, 0
        %v3187 = vsel %vm886, %v3184, 0
        %3189 = vmatpush.xpose.msra.mxu0 0.0
        %3190 = vmatpush.xpose.msra.mxu0 0.0
        %3191 = vmatpush.xpose.msra.mxu0 0.0
        %3192 = vmatpush.xpose.msra.mxu0 0.0
        %3193 = vmatpush.xpose.msra.mxu0 0.0
        %3194 = vmatpush.xpose.msra.mxu0 0.0
        %3195 = vmatpush.xpose.msra.mxu0 0.0
        %3196 = vmatpush.xpose.msra.mxu0 0.0
        %3197 = vmatpush.xpose.msra.mxu0 0.0
        %3198 = vmatpush.xpose.msra.mxu0 0.0
        %3199 = vmatpush.xpose.msra.mxu0 0.0
        %3200 = vmatpush.xpose.msra.mxu0 0.0
        %3201 = vmatpush.xpose.msra.mxu0 0.0
        %3202 = vmatpush.xpose.msra.mxu0 0.0
        %3203 = vmatpush.xpose.msra.mxu0 0.0
        %3204 = vmatpush.xpose.msra.mxu0 %v3187
        %3205 = vmatmul.f32.gmra.mxu0 %v3185
        %v3206 = vpop.f32.mrf.mxu0
        %v3207 = vadd.f32 0.0, %v3206
        %3208 = vdwg.mxu0
        %3209 = vrot.lane.b32.xlu0 %v2686, 116
        %v3210 = vpop.permute.xlu0 %3209
        %3211 = vrot.lane.b32.xlu0 %v2683, 100
        %v3212 = vpop.permute.xlu0 %3211
        %v3213 = vsel %vm886, %v3210, 0
        %v3215 = vsel %vm886, %v3212, 0
        %3217 = vmatpush.xpose.msra.mxu0 0.0
        %3218 = vmatpush.xpose.msra.mxu0 0.0
        %3219 = vmatpush.xpose.msra.mxu0 0.0
        %3220 = vmatpush.xpose.msra.mxu0 0.0
        %3221 = vmatpush.xpose.msra.mxu0 0.0
        %3222 = vmatpush.xpose.msra.mxu0 0.0
        %3223 = vmatpush.xpose.msra.mxu0 0.0
        %3224 = vmatpush.xpose.msra.mxu0 0.0
        %3225 = vmatpush.xpose.msra.mxu0 0.0
        %3226 = vmatpush.xpose.msra.mxu0 0.0
        %3227 = vmatpush.xpose.msra.mxu0 0.0
        %3228 = vmatpush.xpose.msra.mxu0 0.0
        %3229 = vmatpush.xpose.msra.mxu0 0.0
        %3230 = vmatpush.xpose.msra.mxu0 0.0
        %3231 = vmatpush.xpose.msra.mxu0 0.0
        %3232 = vmatpush.xpose.msra.mxu0 %v3215
        %3233 = vmatmul.f32.gmra.mxu0 %v3213
        %v3234 = vpop.f32.mrf.mxu0
        %v3235 = vadd.f32 0.0, %v3234
        %3236 = vdwg.mxu0
        %v3237 = vsel %vm940, %v3207, -inf
        %3238 = vmax.xlane.f32.xlu0 %v3237
        %v3239 = vpop.xlane.xlu0 %3238
        %v3240 = vsel %vm940, %v3235, -inf
        %3241 = vmax.xlane.f32.xlu0 %v3240
        %v3242 = vpop.xlane.xlu0 %3241
        %v3243 = vsub.f32 %v3207, %v3239
        %v3244 = vsub.f32 %v3235, %v3242
        %v3245 = vmul.f32 %v3243, 1.442695
        %v3246 = vpow.pop %v3245
        %v3247 = vmul.f32 %v3244, 1.442695
        %v3248 = vpow.pop %v3247
        %v3249 = vsel %vm940, %v3246, 0.0
        %3250 = vadd.xlane.f32.xlu0 %v3249
        %v3251 = vpop.xlane.xlu0 %3250
        %v3252 = vsel %vm940, %v3248, 0.0
        %3253 = vadd.xlane.f32.xlu0 %v3252
        %v3254 = vpop.xlane.xlu0 %3253
        %v3255 = vrcp.pop %v3251
        %v3256 = vrcp.pop %v3254
        %3257 = vrot.lane.b32.xlu0 %v2680, 84
        %v3258 = vpop.permute.xlu0 %3257
        %v3261 = vsel %vm940, %v3246, 0
        %3263 = vmatpush.msra.mxu0 0.0
        %3264 = vmatpush.msra.mxu0 0.0
        %3265 = vmatpush.msra.mxu0 0.0
        %3266 = vmatpush.msra.mxu0 0.0
        %3267 = vmatpush.msra.mxu0 0.0
        %3268 = vmatpush.msra.mxu0 0.0
        %3269 = vmatpush.msra.mxu0 0.0
        %3270 = vmatpush.msra.mxu0 0.0
        %3271 = vmatpush.msra.mxu0 0.0
        %3272 = vmatpush.msra.mxu0 0.0
        %3273 = vmatpush.msra.mxu0 0.0
        %3274 = vmatpush.msra.mxu0 0.0
        %3275 = vmatpush.msra.mxu0 0.0
        %3276 = vmatpush.msra.mxu0 0.0
        %3277 = vmatpush.msra.mxu0 0.0
        %3278 = vmatpush.msra.mxu0 %v3258
        %3279 = vmatmul.f32.gmra.mxu0 %v3261
        %v3280 = vpop.f32.mrf.mxu0
        %v3281 = vadd.f32 0.0, %v3280
        %3282 = vdwg.mxu0
        %3283 = vrot.lane.b32.xlu0 %v2683, 84
        %v3284 = vpop.permute.xlu0 %3283
        %v3287 = vsel %vm940, %v3248, 0
        %3289 = vmatpush.msra.mxu0 0.0
        %3290 = vmatpush.msra.mxu0 0.0
        %3291 = vmatpush.msra.mxu0 0.0
        %3292 = vmatpush.msra.mxu0 0.0
        %3293 = vmatpush.msra.mxu0 0.0
        %3294 = vmatpush.msra.mxu0 0.0
        %3295 = vmatpush.msra.mxu0 0.0
        %3296 = vmatpush.msra.mxu0 0.0
        %3297 = vmatpush.msra.mxu0 0.0
        %3298 = vmatpush.msra.mxu0 0.0
        %3299 = vmatpush.msra.mxu0 0.0
        %3300 = vmatpush.msra.mxu0 0.0
        %3301 = vmatpush.msra.mxu0 0.0
        %3302 = vmatpush.msra.mxu0 0.0
        %3303 = vmatpush.msra.mxu0 0.0
        %3304 = vmatpush.msra.mxu0 %v3284
        %3305 = vmatmul.f32.gmra.mxu0 %v3287
        %v3306 = vpop.f32.mrf.mxu0
        %v3307 = vadd.f32 0.0, %v3306
        %3308 = vdwg.mxu0
        %v3309 = vmul.f32 %v3281, %v3255
        %v3310 = vmul.f32 %v3307, %v3256
        %s3311 = scalar_lea.vmem [#allocation8], 44
        %v3312 = vld [vmem:[%s3311] sm:$0xf]
        %v3314 = vsel %vm886, %v3309, 0
        %v3317 = vsel %vm886, %v3310, 0
        %v3320 = vsel %vm1154, %v3312, 0
        %3322 = vmatpush.msra.mxu0 0.0
        %3323 = vmatpush.msra.mxu0 0.0
        %3324 = vmatpush.msra.mxu0 0.0
        %3325 = vmatpush.msra.mxu0 0.0
        %3326 = vmatpush.msra.mxu0 0.0
        %3327 = vmatpush.msra.mxu0 0.0
        %3328 = vmatpush.msra.mxu0 0.0
        %3329 = vmatpush.msra.mxu0 0.0
        %3330 = vmatpush.msra.mxu0 0.0
        %3331 = vmatpush.msra.mxu0 0.0
        %3332 = vmatpush.msra.mxu0 0.0
        %3333 = vmatpush.msra.mxu0 0.0
        %3334 = vmatpush.msra.mxu0 0.0
        %3335 = vmatpush.msra.mxu0 0.0
        %3336 = vmatpush.msra.mxu0 0.0
        %3337 = vmatpush.msra.mxu0 %v3320
        %3338 = vmatmul.f32.gmra.mxu0 %v3314
        %v3339 = vpop.f32.mrf.mxu0
        %v3340 = vadd.f32 0.0, %v3339
        %3341 = vmatmul.f32.gmra.mxu0 %v3317
        %v3342 = vpop.f32.mrf.mxu0
        %v3343 = vadd.f32 0.0, %v3342
        %3344 = vdwg.mxu0
        %v3345 = vadd.f32 %v3179, %v3340
        %v3346 = vadd.f32 %v3180, %v3343
        %s3347 = scalar_lea.vmem %s6, 2
        %v3348 = vld [vmem:[%s3347] sm:$0x1]
        %v3350 = vperm.slane %v3348, 0
        %v3352 = vadd.f32 %v3345, %v3350
        %v3353 = vadd.f32 %v3346, %v3350
        %v3354 = vadd.f32 %v2646, %v3352
        %v3355 = vadd.f32 %v2647, %v3353
        %s3356 = scalar_lea.vmem [#allocation9], 2
        %v3357 = vld [vmem:[%s3356] sm:$0x1]
        %s3358 = scalar_lea.vmem %s8, 2
        %v3359 = vld [vmem:[%s3358] sm:$0x1]
        %v3360 = vsel %vm851, %v3354, 0.0
        %3361 = vadd.xlane.f32.xlu0 %v3360
        %v3362 = vpop.xlane.xlu0 %3361
        %v3363 = vsel %vm851, %v3355, 0.0
        %3364 = vadd.xlane.f32.xlu0 %v3363
        %v3365 = vpop.xlane.xlu0 %3364
        %v3366 = vmul.f32 %v3362, %v1567
        %v3367 = vmul.f32 %v3365, %v1567
        %v3368 = vsub.f32 %v3354, %v3366
        %v3369 = vsub.f32 %v3355, %v3367
        %v3370 = vmul.f32 %v3368, %v3368
        %v3371 = vmul.f32 %v3369, %v3369
        %v3372 = vsel %vm851, %v3370, 0.0
        %3373 = vadd.xlane.f32.xlu0 %v3372
        %v3374 = vpop.xlane.xlu0 %3373
        %v3375 = vsel %vm851, %v3371, 0.0
        %3376 = vadd.xlane.f32.xlu0 %v3375
        %v3377 = vpop.xlane.xlu0 %3376
        %v3378 = vmul.f32 %v3374, %v1567
        %v3379 = vmul.f32 %v3377, %v1567
        %v3380 = vadd.f32 %v3378, 1e-05
        %v3381 = vadd.f32 %v3379, 1e-05
        %v3382 = vrsqrt.pop %v3380
        %v3383 = vmul.f32 %v3382, %v3380
        %v3384 = vmul.f32 %v3383, %v3382
        %v3385 = vmul.f32 0.5, %v3384
        %v3386 = vsub.f32 1.5, %v3385
        %v3387 = vmul.f32 %v3382, %v3386
        %vm3388 = vweird.f32 %v3380
        %vm3389 = vweird.f32 %v3382
        %vm3390 = vmor %vm3388, %vm3389
        %v3391 = vsel %vm3390, %v3382, %v3387
        %v3392 = vrsqrt.pop %v3381
        %v3393 = vmul.f32 %v3392, %v3381
        %v3394 = vmul.f32 %v3393, %v3392
        %v3395 = vmul.f32 0.5, %v3394
        %v3396 = vsub.f32 1.5, %v3395
        %v3397 = vmul.f32 %v3392, %v3396
        %vm3398 = vweird.f32 %v3381
        %vm3399 = vweird.f32 %v3392
        %vm3400 = vmor %vm3398, %vm3399
        %v3401 = vsel %vm3400, %v3392, %v3397
        %v3402 = vmul.f32 %v3368, %v3391
        %v3403 = vmul.f32 %v3369, %v3401
        %v3405 = vperm.slane %v3357, 0
        %v3407 = vmul.f32 %v3402, %v3405
        %v3408 = vmul.f32 %v3403, %v3405
        %v3410 = vperm.slane %v3359, 0
        %v3412 = vadd.f32 %v3407, %v3410
        %v3413 = vadd.f32 %v3408, %v3410
        %s3414 = scalar_lea.vmem [#allocation11], 32
        %v3415 = vld [vmem:[%s3414] sm:$0xff]
        %v3416 = vld [vmem:[%s3414 + $0x8] sm:$0xff]
        %s3417 = scalar_lea.vmem [#allocation12], 2
        %v3418 = vld [vmem:[%s3417] sm:$0x1]
        %v3420 = vperm.slane %v3418, 0
        %v3423 = vsel %vm851, %v3412, 0
        %v3426 = vsel %vm851, %v3413, 0
        %3428 = vmatpush.msra.mxu0 0.0
        %3429 = vmatpush.msra.mxu0 0.0
        %3430 = vmatpush.msra.mxu0 0.0
        %3431 = vmatpush.msra.mxu0 0.0
        %3432 = vmatpush.msra.mxu0 0.0
        %3433 = vmatpush.msra.mxu0 0.0
        %3434 = vmatpush.msra.mxu0 0.0
        %3435 = vmatpush.msra.mxu0 0.0
        %3436 = vmatpush.msra.mxu0 0.0
        %3437 = vmatpush.msra.mxu0 0.0
        %3438 = vmatpush.msra.mxu0 0.0
        %3439 = vmatpush.msra.mxu0 0.0
        %3440 = vmatpush.msra.mxu0 0.0
        %3441 = vmatpush.msra.mxu0 0.0
        %3442 = vmatpush.msra.mxu0 %v3416
        %3443 = vmatpush.msra.mxu0 %v3415
        %3444 = vmatmul.f32.gmra.mxu0 %v3423
        %v3445 = vpop.f32.mrf.mxu0
        %v3446 = vadd.f32 %v3420, %v3445
        %3447 = vmatmul.f32.gmra.mxu0 %v3426
        %v3448 = vpop.f32.mrf.mxu0
        %v3449 = vadd.f32 %v3420, %v3448
        %3450 = vdwg.mxu0
        %v3451 = vmax.f32 %v3446, 0.0
        %v3452 = vmax.f32 %v3449, 0.0
        %s3453 = scalar_lea.vmem [#allocation14], 32
        %v3454 = vld [vmem:[%s3453] sm:$0xff]
        %v3455 = vld [vmem:[%s3453 + $0x8] sm:$0xff]
        %s3456 = scalar_lea.vmem %s12, 2
        %v3457 = vld [vmem:[%s3456] sm:$0x1]
        %v3459 = vperm.slane %v3457, 0
        %v3462 = vsel %vm851, %v3451, 0
        %v3465 = vsel %vm851, %v3452, 0
        %3467 = vmatpush.msra.mxu0 0.0
        %3468 = vmatpush.msra.mxu0 0.0
        %3469 = vmatpush.msra.mxu0 0.0
        %3470 = vmatpush.msra.mxu0 0.0
        %3471 = vmatpush.msra.mxu0 0.0
        %3472 = vmatpush.msra.mxu0 0.0
        %3473 = vmatpush.msra.mxu0 0.0
        %3474 = vmatpush.msra.mxu0 0.0
        %3475 = vmatpush.msra.mxu0 0.0
        %3476 = vmatpush.msra.mxu0 0.0
        %3477 = vmatpush.msra.mxu0 0.0
        %3478 = vmatpush.msra.mxu0 0.0
        %3479 = vmatpush.msra.mxu0 0.0
        %3480 = vmatpush.msra.mxu0 0.0
        %3481 = vmatpush.msra.mxu0 %v3455
        %3482 = vmatpush.msra.mxu0 %v3454
        %3483 = vmatmul.f32.gmra.mxu0 %v3462
        %v3484 = vpop.f32.mrf.mxu0
        %v3485 = vadd.f32 %v3459, %v3484
        %3486 = vmatmul.f32.gmra.mxu0 %v3465
        %v3487 = vpop.f32.mrf.mxu0
        %v3488 = vadd.f32 %v3459, %v3487
        %3489 = vdwg.mxu0
        %v3490 = vadd.f32 %v3412, %v3485
        %v3491 = vadd.f32 %v3413, %v3488
        %s3492 = scalar_lea.vmem [#allocation15], 2
        %v3493 = vld [vmem:[%s3492] sm:$0x1]
        %s3494 = scalar_lea.vmem %s14, 2
        %v3495 = vld [vmem:[%s3494] sm:$0x1]
        %v3496 = vsel %vm851, %v3490, 0.0
        %3497 = vadd.xlane.f32.xlu0 %v3496
        %v3498 = vpop.xlane.xlu0 %3497
        %v3499 = vsel %vm851, %v3491, 0.0
        %3500 = vadd.xlane.f32.xlu0 %v3499
        %v3501 = vpop.xlane.xlu0 %3500
        %v3502 = vmul.f32 %v3498, %v1567
        %v3503 = vmul.f32 %v3501, %v1567
        %v3504 = vsub.f32 %v3490, %v3502
        %v3505 = vsub.f32 %v3491, %v3503
        %v3506 = vmul.f32 %v3504, %v3504
        %v3507 = vmul.f32 %v3505, %v3505
        %v3508 = vsel %vm851, %v3506, 0.0
        %3509 = vadd.xlane.f32.xlu0 %v3508
        %v3510 = vpop.xlane.xlu0 %3509
        %v3511 = vsel %vm851, %v3507, 0.0
        %3512 = vadd.xlane.f32.xlu0 %v3511
        %v3513 = vpop.xlane.xlu0 %3512
        %v3514 = vmul.f32 %v3510, %v1567
        %v3515 = vmul.f32 %v3513, %v1567
        %v3516 = vadd.f32 %v3514, 1e-05
        %v3517 = vadd.f32 %v3515, 1e-05
        %v3518 = vrsqrt.pop %v3516
        %v3519 = vmul.f32 %v3518, %v3516
        %v3520 = vmul.f32 %v3519, %v3518
        %v3521 = vmul.f32 0.5, %v3520
        %v3522 = vsub.f32 1.5, %v3521
        %v3523 = vmul.f32 %v3518, %v3522
        %vm3524 = vweird.f32 %v3516
        %vm3525 = vweird.f32 %v3518
        %vm3526 = vmor %vm3524, %vm3525
        %v3527 = vsel %vm3526, %v3518, %v3523
        %v3528 = vrsqrt.pop %v3517
        %v3529 = vmul.f32 %v3528, %v3517
        %v3530 = vmul.f32 %v3529, %v3528
        %v3531 = vmul.f32 0.5, %v3530
        %v3532 = vsub.f32 1.5, %v3531
        %v3533 = vmul.f32 %v3528, %v3532
        %vm3534 = vweird.f32 %v3517
        %vm3535 = vweird.f32 %v3528
        %vm3536 = vmor %vm3534, %vm3535
        %v3537 = vsel %vm3536, %v3528, %v3533
        %v3538 = vmul.f32 %v3504, %v3527
        %v3539 = vmul.f32 %v3505, %v3537
        %v3541 = vperm.slane %v3493, 0
        %v3543 = vmul.f32 %v3538, %v3541
        %v3544 = vmul.f32 %v3539, %v3541
        %v3546 = vperm.slane %v3495, 0
        %v3548 = vadd.f32 %v3543, %v3546
        %v3549 = vadd.f32 %v3544, %v3546
        %v3550 = vld [vmem:[#allocation17] sm:$0xff]
        %v3551 = vld [vmem:[#allocation17 + $0x8] sm:$0xff]
        %v3552 = vld [vmem:[%s16] sm:$0x1]
        %v3554 = vperm.slane %v3552, 0
        %v3557 = vsel %vm851, %v3548, 0
        %v3560 = vsel %vm851, %v3549, 0
        %3562 = vmatpush.msra.mxu0 0.0
        %3563 = vmatpush.msra.mxu0 0.0
        %3564 = vmatpush.msra.mxu0 0.0
        %3565 = vmatpush.msra.mxu0 0.0
        %3566 = vmatpush.msra.mxu0 0.0
        %3567 = vmatpush.msra.mxu0 0.0
        %3568 = vmatpush.msra.mxu0 0.0
        %3569 = vmatpush.msra.mxu0 0.0
        %3570 = vmatpush.msra.mxu0 0.0
        %3571 = vmatpush.msra.mxu0 0.0
        %3572 = vmatpush.msra.mxu0 0.0
        %3573 = vmatpush.msra.mxu0 0.0
        %3574 = vmatpush.msra.mxu0 0.0
        %3575 = vmatpush.msra.mxu0 0.0
        %3576 = vmatpush.msra.mxu0 %v3551
        %3577 = vmatpush.msra.mxu0 %v3550
        %3578 = vmatmul.f32.gmra.mxu0 %v3557
        %v3579 = vpop.f32.mrf.mxu0
        %v3580 = vadd.f32 %v3554, %v3579
        %3581 = vmatmul.f32.gmra.mxu0 %v3560
        %v3582 = vpop.f32.mrf.mxu0
        %v3583 = vadd.f32 %v3554, %v3582
        %3584 = vdwg.mxu0
        %v3585 = vmax.f32 %v3580, 0.0
        %v3586 = vmax.f32 %v3583, 0.0
        %v3587 = vld [vmem:[%s17] sm:$0x1]
        %v3589 = vperm.slane %v3587, 0
        %v3591 = vmul.f32 %v3585, %v3589
        %v3592 = vmul.f32 %v3586, %v3589
        %v3593 = vsel %vm851, %v3591, 0.0
        %3594 = vadd.xlane.f32.xlu0 %v3593
        %v3595 = vpop.xlane.xlu0 %3594
        %v3596 = vsel %vm851, %v3592, 0.0
        %3597 = vadd.xlane.f32.xlu0 %v3596
        %v3598 = vpop.xlane.xlu0 %3597
        %v3599 = vld [vmem:[#allocation2] sm:$0x1]
        %v3601 = vperm.slane %v3599, 0
        %v3603 = vadd.f32 %v3595, %v3601
        %v3604 = vadd.f32 %v3598, %v3601
        %vm3605 = vcmask 7168
        %v3606 = vsel %vm3605, %v3603, -inf
        %v3607 = vrot.slane %v3606, 4
        %v3608 = vmax.f32 %v3606, %v3607
        %v3609 = vrot.slane %v3608, 2
        %v3610 = vmax.f32 %v3608, %v3609
        %v3611 = vrot.slane %v3610, 1
        %v3612 = vmax.f32 %v3610, %v3611
        %v3613 = vsel %vm3605, %v3604, -inf
        %v3614 = vrot.slane %v3613, 4
        %v3615 = vmax.f32 %v3613, %v3614
        %v3616 = vrot.slane %v3615, 2
        %v3617 = vmax.f32 %v3615, %v3616
        %v3618 = vrot.slane %v3617, 1
        %v3619 = vmax.f32 %v3617, %v3618
        %v3620 = vsub.f32 %v3603, %v3612
        %v3621 = vsub.f32 %v3604, %v3619
        %v3622 = vmul.f32 %v3620, 1.442695
        %v3623 = vpow.pop %v3622
        %v3624 = vmul.f32 %v3621, 1.442695
        %v3625 = vpow.pop %v3624
        %v3626 = vsel %vm3605, %v3623, 0.0
        %v3627 = vrot.slane %v3626, 4
        %v3628 = vadd.f32 %v3626, %v3627
        %v3629 = vrot.slane %v3628, 2
        %v3630 = vadd.f32 %v3628, %v3629
        %v3631 = vrot.slane %v3630, 1
        %v3632 = vadd.f32 %v3630, %v3631
        %v3633 = vsel %vm3605, %v3625, 0.0
        %v3634 = vrot.slane %v3633, 4
        %v3635 = vadd.f32 %v3633, %v3634
        %v3636 = vrot.slane %v3635, 2
        %v3637 = vadd.f32 %v3635, %v3636
        %v3638 = vrot.slane %v3637, 1
        %v3639 = vadd.f32 %v3637, %v3638
        %v3640 = vrcp.pop %v3632
        %v3641 = vrcp.pop %v3639
        %v3642 = vmul.f32 %v3623, %v3640
        %v3643 = vmul.f32 %v3625, %v3641
        %3645 = vset.pattern.permute.xlu0 0
        %3646 = vperm.xlu0 %3645, %v3642
        %v3647 = vpop.permute.xlu0 %3646
        %3650 = vset.pattern.permute.xlu0 0
        %3651 = vperm.xlu0 %3650, %v3643
        %v3652 = vpop.permute.xlu0 %3651
        %v3654 = vmul.f32 %v3548, %v3647
        %v3655 = vmul.f32 %v3549, %v3652
        %v3656 = vsel %vm851, %v3654, 0.0
        %v3657 = vrot.slane %v3656, 4
        %v3658 = vadd.f32 %v3656, %v3657
        %v3659 = vrot.slane %v3658, 2
        %v3660 = vadd.f32 %v3658, %v3659
        %v3661 = vrot.slane %v3660, 1
        %v3662 = vadd.f32 %v3660, %v3661
        %v3663 = vsel %vm851, %v3655, 0.0
        %v3664 = vrot.slane %v3663, 4
        %v3665 = vadd.f32 %v3663, %v3664
        %v3666 = vrot.slane %v3665, 2
        %v3667 = vadd.f32 %v3665, %v3666
        %v3668 = vrot.slane %v3667, 1
        %v3669 = vadd.f32 %v3667, %v3668
        %v3670 = vld [vmem:[%s19] sm:$0xff]
        %v3671 = vld [vmem:[%s19 + $0x8] sm:$0xff]
        %v3672 = vld [vmem:[%s20] sm:$0x1]
        %v3674 = vperm.slane %v3672, 0
        %vm3678 = vcmask 1041409
        %v3679 = vsel %vm3678, %v3669, %v3662
        %v3680 = vsel %vm851, %v3679, 0
        %3682 = vmatpush.msra.mxu0 0.0
        %3683 = vmatpush.msra.mxu0 0.0
        %3684 = vmatpush.msra.mxu0 0.0
        %3685 = vmatpush.msra.mxu0 0.0
        %3686 = vmatpush.msra.mxu0 0.0
        %3687 = vmatpush.msra.mxu0 0.0
        %3688 = vmatpush.msra.mxu0 0.0
        %3689 = vmatpush.msra.mxu0 0.0
        %3690 = vmatpush.msra.mxu0 0.0
        %3691 = vmatpush.msra.mxu0 0.0
        %3692 = vmatpush.msra.mxu0 0.0
        %3693 = vmatpush.msra.mxu0 0.0
        %3694 = vmatpush.msra.mxu0 0.0
        %3695 = vmatpush.msra.mxu0 0.0
        %3696 = vmatpush.msra.mxu0 %v3671
        %3697 = vmatpush.msra.mxu0 %v3670
        %3698 = vmatmul.f32.gmra.mxu0 %v3680
        %v3699 = vpop.f32.mrf.mxu0
        %v3700 = vadd.f32 %v3674, %v3699
        %3701 = vdwg.mxu0
        %vm3702 = vcmask 17408
        %3703 = vst.msk [vmem:[%s799] sm:$0x3] %vm3702, %v3700
        %s3704 = sand.u32 %s496, 1
        %s3705 = scalar_lea.sflag [#allocation5], %s3704
        %s3706 = sand.u32 %s496, 1
        %s3707 = smul.addr %s3706, 2
        %s3708 = scalar_lea.vmem [#allocation18], %s3707
        // Predicated region
        $region141: #{tpu_custom_call.1} parent=103 // pred_check
          %p3709 = pneg %p506
        $region142: #{tpu_custom_call.1} parent=103 // pred_check_branch
          %3711 = sbr.rel (%p3709) target = $region144
        $region143: #{tpu_custom_call.1} parent=103 // pred_region
          %3713 = vsyncadd %s3705, 0
          %s3714 = smul.addr %s42, 2
          %s3715 = scalar_lea.hbm %s21, %s3714
          %s3717 = sshll.u32 %s3708, 4
          %s3718 = int_to_ptr.vmem [resolvable:$true] %s3717
          %s3719 = sshll.u32 %s3715, 4
          %s3720 = int_to_ptr.hbm [resolvable:$true] %s3719
          %3722 = dma.vmem_to_hbm [thread:$0]  %s3718, 32, %s3720, %s3705
        $region144: #{tpu_custom_call.1} parent=103 // pred_fallthru
          _
      $region104: #{tpu_custom_call.1} parent=5 // pred_fallthru
        _
      %p3723 = scmp.le.s32.totalorder 2, %s37
      // Predicated region
      $region145: #{tpu_custom_call.1} parent=5 // pred_check
        %p3724 = pneg %p3723
      $region146: #{tpu_custom_call.1} parent=5 // pred_check_branch
        %3726 = sbr.rel (%p3724) target = $region148
      $region147: #{tpu_custom_call.1} parent=5 // pred_region
        %s3727 = ssub.s32 %s37, 2
        // Predicated region
        $region149: #{tpu_custom_call.1} parent=147 // pred_check
          %p3728 = pneg %p512
        $region150: #{tpu_custom_call.1} parent=147 // pred_check_branch
          %3730 = sbr.rel (%p3728) target = $region152
        $region151: #{tpu_custom_call.1} parent=147 // pred_region
          %s3731 = sand.u32 %s497, 1
          %s3732 = scalar_lea.sflag [#allocation5], %s3731
          %s3733 = sand.u32 %s497, 1
          %s3734 = smul.addr %s3733, 2
          %s3735 = scalar_lea.vmem [#allocation18], %s3734
          %3737 = dma.done %s3732, 32
        $region152: #{tpu_custom_call.1} parent=147 // pred_fallthru
          _
      $region148: #{tpu_custom_call.1} parent=5 // pred_fallthru
        _
    $region6: #{tpu_custom_call.1} parent=1 // loop_footer
      %s41 = sadd.s32 1, %s37
    $region7: #{tpu_custom_call.1} parent=1 // loop_footer_branch
      %36 = sbr.rel target = $region3
    $region8: #{tpu_custom_call.1} parent=1 // loop_exit
      _
    %3738 = vsyncpa [#allocation4], 1
    %s3739 = scalar_lea.sflag [#allocation4], 1
    %3740 = vsyncpa %s3739, 1
    %3741 = vsyncpa [#allocation7], 1
    %3742 = vsyncpa [#allocation10], 1
    %3743 = vsyncpa [#allocation13], 1
    %3744 = vsyncpa [#allocation16], 1
    %3745 = vsyncpa [#allocation5], 1
    %s3746 = scalar_lea.sflag [#allocation5], 1
    %3747 = vsyncpa %s3746, 1

</llo_original>
